<compile_context>
chip_gen: v7x
topology: tpu7x:2x2x1
jax: 0.10.0
libtpu: 0.0.40
codegen_flags: <defaults>
</compile_context>

<pallas_src>
import math
import functools

import jax
import jax.numpy as jnp
from jax import lax
from jax.experimental import pallas as pl
from jax.experimental.pallas import tpu as pltpu


# ---------------------------------------------------------------------------
# Exact (erf-based) GELU using only ops with guaranteed Mosaic lowerings.
# erf via Abramowitz-Stegun 7.1.26, |abs error| < 1.5e-7.
# ---------------------------------------------------------------------------
def _gelu_exact(u):
    z = u * (1.0 / math.sqrt(2.0))
    a = jnp.abs(z)
    t = 1.0 / (1.0 + 0.3275911 * a)
    poly = t * (0.254829592 + t * (-0.284496736 + t * (1.421413741
             + t * (-1.453152027 + t * 1.061405429))))
    erf_abs = 1.0 - poly * jnp.exp(-a * a)
    erf = jnp.where(z < 0.0, -erf_abs, erf_abs)
    return 0.5 * u * (1.0 + erf)


# ---------------------------------------------------------------------------
# Pallas kernel: one grid step == TB batch elements flattened to M = TB*S rows.
# ---------------------------------------------------------------------------
def _block_kernel(x_ref, wqkv_ref, wo_ref, w1_ref, w2_ref, slab_ref, rope_ref,
                  o_ref, pv_ref, *, S, TB, Dr, H, Dl, Dm):
    HDl = H * Dl
    M = TB * S

    x = x_ref[...]                                   # (M, Dr) f32
    slab = slab_ref[...]                             # (8, W)  f32 packed vectors
    g1, be1 = slab[0:1, :Dr], slab[1:2, :Dr]
    g2, be2 = slab[2:3, :Dr], slab[3:4, :Dr]
    fb2 = slab[4:5, :Dr]
    fb1 = slab[5:6, :Dm]

    # ---- block-diagonal causal additive mask, generated in-kernel ----------
    # batch-of-row computed as floor((row + 0.5)/S) in f32 (no vector int div).
    row_i = lax.broadcasted_iota(jnp.int32, (M, M), 0)
    col_i = lax.broadcasted_iota(jnp.int32, (M, M), 1)
    inv_s = 1.0 / float(S)
    row_b = jnp.floor((row_i.astype(jnp.float32) + 0.5) * inv_s)
    col_b = jnp.floor((col_i.astype(jnp.float32) + 0.5) * inv_s)
    keep = (row_b == col_b) & (col_i <= row_i)
    mask_bias = jnp.where(keep, 0.0, -1e30)          # (M, M) f32

    # ---- RoPE tables: (S, HDl) tiled over the TB batches in-kernel ---------
    cos_s = rope_ref[0]                              # (S, HDl) f32
    sin_s = rope_ref[1]
    if TB > 1:
        cos_t = jnp.concatenate([cos_s] * TB, axis=0)  # (M, HDl)
        sin_t = jnp.concatenate([sin_s] * TB, axis=0)
    else:
        cos_t, sin_t = cos_s, sin_s

    def layernorm(v, g, b):
        mu = jnp.mean(v, axis=-1, keepdims=True)
        var = jnp.mean((v - mu) ** 2, axis=-1, keepdims=True)
        return (v - mu) * lax.rsqrt(var + 1e-5) * g + b

    # ---------------- attention branch ----------------
    h = layernorm(x, g1, be1)                                          # (M, Dr)
    # Fused projection [scale*Wq | scale*Wq@R | Wk | Wk@R | Wv]: RoPE's
    # rotate-half permutation and the 1/sqrt(Dl) scale ride the MXU for free.
    qkv = jnp.dot(h.astype(jnp.bfloat16), wqkv_ref[...],
                  preferred_element_type=jnp.float32)                  # (M, 5*HDl)
    q, q_rot = qkv[:, 0 * HDl:1 * HDl], qkv[:, 1 * HDl:2 * HDl]
    k, k_rot = qkv[:, 2 * HDl:3 * HDl], qkv[:, 3 * HDl:4 * HDl]
    v = qkv[:, 4 * HDl:5 * HDl]

    qr = (q * cos_t + q_rot * sin_t).astype(jnp.bfloat16)              # (M, HDl)
    # One transpose (f32, then cast) instead of H per-head lane-slice transposes.
    krT = jnp.transpose(k * cos_t + k_rot * sin_t).astype(jnp.bfloat16)  # (HDl, M)
    vb = v.astype(jnp.bfloat16)

    # Per-head softmax(QK^T)V; normalization deferred to the (M, Dl) pv.
    # Each head's result is flushed to the VMEM scratch (bounds liveness of
    # the (M, M) temporaries even though the loop is statically unrolled).
    for hh in range(H):
        sl = slice(hh * Dl, (hh + 1) * Dl)
        s = jnp.dot(qr[:, sl], krT[sl, :],
                    preferred_element_type=jnp.float32)                # (M, M)
        s = s + mask_bias
        p = jnp.exp(s - jnp.max(s, axis=-1, keepdims=True))            # <= 1
        inv_denom = pl.reciprocal(jnp.sum(p, axis=-1, keepdims=True), approx=True)
        pv = jnp.dot(p.astype(jnp.bfloat16), vb[:, sl],
                     preferred_element_type=jnp.float32)               # (M, Dl)
        pv_ref[:, sl] = (pv * inv_denom).astype(jnp.bfloat16)

    # Single fat W_o matmul (K = HDl) instead of H thin ones.
    attn = jnp.dot(pv_ref[...], wo_ref[...],
                   preferred_element_type=jnp.float32)                 # (M, Dr)
    x = x + attn

    # ---------------- MLP branch ----------------
    h2 = layernorm(x, g2, be2)
    u = jnp.dot(h2.astype(jnp.bfloat16), w1_ref[...],
                preferred_element_type=jnp.float32) + fb1              # (M, Dm)
    u = _gelu_exact(u)                                                 # exact GELU
    y = jnp.dot(u.astype(jnp.bfloat16), w2_ref[...],
                preferred_element_type=jnp.float32) + fb2              # (M, Dr)

    o_ref[...] = x + y


# ---------------------------------------------------------------------------
# Chip-aware defaults + block-size selection (with batch padding).
# ---------------------------------------------------------------------------
def _device_defaults():
    target_rows, min_blocks = 256, 1
    try:
        kind = jax.devices()[0].device_kind.lower()
    except Exception:
        return target_rows, min_blocks
    if ("v5" in kind) or ("v4" in kind):
        target_rows = 128          # 128-row MXU: M=128 already fills it
    if "v7" in kind:
        min_blocks = 2             # 2 TensorCores: keep >= 2 parallel grid steps
    return target_rows, min_blocks


def _pick_tb(B, S, target_rows, min_blocks):
    tb = max(1, target_rows // max(S, 1))
    tb = min(tb, B)
    if min_blocks > 1 and B >= min_blocks:
        tb = min(tb, -(-B // min_blocks))      # cap so n_blocks >= min_blocks
    # block rows must be a multiple of 8 when there is more than one block
    while tb > 1 and (tb * S) % 8 != 0:
        tb -= 1
    n_blocks = -(-B // tb)
    if n_blocks > 1 and (tb * S) % 8 != 0:
        tb, n_blocks = B, 1                    # single block == full array
    return tb, n_blocks


# ---------------------------------------------------------------------------
# Wrapper
# ---------------------------------------------------------------------------
def reduced_scratch_space_block(x, params, *, n_heads, d_latent, target_rows=None):
    B, S, Dr = x.shape
    H, Dl = n_heads, d_latent
    HDl = H * Dl
    Dm = 4 * Dl
    half = Dl // 2
    scale = 1.0 / math.sqrt(Dl)

    dflt_rows, min_blocks = _device_defaults()
    if target_rows is None:
        target_rows = dflt_rows
    TB, n_blocks = _pick_tb(B, S, target_rows, min_blocks)
    M = TB * S
    B_pad = TB * n_blocks

    # ---- RoPE rotate-half permutation (with sign) folded into the weights ----
    idx = jnp.arange(half)
    Rh = jnp.zeros((Dl, Dl), jnp.float32)
    Rh = Rh.at[half + idx, idx].set(-1.0)      # out[:half] = -t2
    Rh = Rh.at[idx, half + idx].set(1.0)       # out[half:] = +t1
    R = jnp.kron(jnp.eye(H, dtype=jnp.float32), Rh)              # (HDl, HDl)

    wq, wk, wv = params["wq"], params["wk"], params["wv"]
    wqkv = jnp.concatenate(
        [wq * scale, (wq @ R) * scale, wk, wk @ R, wv], axis=1
    ).astype(jnp.bfloat16)                                        # (Dr, 5*HDl)
    wo = params["wo"].astype(jnp.bfloat16)
    w1 = params["w1"].astype(jnp.bfloat16)
    w2 = params["w2"].astype(jnp.bfloat16)

    # ---- cos/sin tables (per-position, tiled over heads only) ----
    inv_freq = 1.0 / (10000.0 ** (jnp.arange(half, dtype=jnp.float32) * 2.0 / Dl))
    ang = jnp.arange(S, dtype=jnp.float32)[:, None] * inv_freq[None, :]
    cos = jnp.concatenate([jnp.cos(ang), jnp.cos(ang)], axis=-1)  # (S, Dl)
    sin = jnp.concatenate([jnp.sin(ang), jnp.sin(ang)], axis=-1)
    rope_tables = jnp.stack(
        [jnp.tile(cos, (1, H)), jnp.tile(sin, (1, H))], axis=0
    ).astype(jnp.float32)                                         # (2, S, HDl)

    # ---- pack the 6 tiny vectors into a single (8, W) slab ----
    W = max(Dr, Dm)

    def pad_row(v):
        v = v.reshape(1, -1).astype(jnp.float32)
        return jnp.pad(v, ((0, 0), (0, W - v.shape[1])))

    slab = jnp.concatenate([
        pad_row(params["g1"]), pad_row(params["be1"]),
        pad_row(params["g2"]), pad_row(params["be2"]),
        pad_row(params["fb2"]), pad_row(params["fb1"]),
        jnp.zeros((2, W), jnp.float32)], axis=0)                  # (8, W)

    x2 = x.reshape(B * S, Dr).astype(jnp.float32)
    if B_pad > B:
        x2 = jnp.pad(x2, ((0, (B_pad - B) * S), (0, 0)))          # pad whole batches

    kernel = functools.partial(_block_kernel, S=S, TB=TB, Dr=Dr, H=H, Dl=Dl, Dm=Dm)

    def run(single_buffer_consts):
        const_kw = ({"pipeline_mode": pl.Buffered(1)} if single_buffer_consts else {})
        full2 = lambda b: (0, 0)
        full3 = lambda b: (0, 0, 0)
        grid_spec = pltpu.PrefetchScalarGridSpec(
            num_scalar_prefetch=0,
            grid=(n_blocks,),
            in_specs=[
                pl.BlockSpec((M, Dr), lambda b: (b, 0)),              # x rows
                pl.BlockSpec((Dr, 5 * HDl), full2, **const_kw),       # fused qkv proj
                pl.BlockSpec((HDl, Dr), full2, **const_kw),           # W_o
                pl.BlockSpec((Dr, Dm), full2, **const_kw),            # fc_1
                pl.BlockSpec((Dm, Dr), full2, **const_kw),            # fc_2
                pl.BlockSpec((8, W), full2, **const_kw),              # LN/bias slab
                pl.BlockSpec((2, S, HDl), full3, **const_kw),         # rope cos/sin
            ],
            out_specs=pl.BlockSpec((M, Dr), lambda b: (b, 0)),
            scratch_shapes=[pltpu.VMEM((M, HDl), jnp.bfloat16)],      # per-head pv
        )
        return pl.pallas_call(
            kernel,
            out_shape=jax.ShapeDtypeStruct((B_pad * S, Dr), jnp.float32),
            grid_spec=grid_spec,
            compiler_params=pltpu.CompilerParams(
                dimension_semantics=("parallel",)),
        )(x2, wqkv, wo, w1, w2, slab, rope_tables)

    try:
        out = run(True)
    except Exception:
        # TODO(synk): pl.Buffered(1) single-buffering rejected on this jax
        # version -> fall back to default (double) buffering of constants.
        out = run(False)

    return out[: B * S].reshape(B, S, Dr)


# ---------------------------------------------------------------------------
# Pure-JAX f32 reference (module semantics) for a correctness check.
# ---------------------------------------------------------------------------
def _reference(x, params, *, n_heads, d_latent):
    B, S, Dr = x.shape
    H, Dl = n_heads, d_latent
    half = Dl // 2
    inv_freq = 1.0 / (10000.0 ** (jnp.arange(half, dtype=jnp.float32) * 2.0 / Dl))
    ang = jnp.arange(S, dtype=jnp.float32)[:, None] * inv_freq[None, :]
    cos = jnp.concatenate([jnp.cos(ang), jnp.cos(ang)], axis=-1)
    sin = jnp.concatenate([jnp.sin(ang), jnp.sin(ang)], axis=-1)

    def ln(v, g, b):
        mu = jnp.mean(v, axis=-1, keepdims=True)
        var = jnp.mean((v - mu) ** 2, axis=-1, keepdims=True)
        return (v - mu) / jnp.sqrt(var + 1e-5) * g + b

    def rope(t):  # (S, H, Dl)
        t1, t2 = t[..., :half], t[..., half:]
        rot = jnp.concatenate([-t2, t1], axis=-1)
        return t * cos[:, None, :] + rot * sin[:, None, :]

    def one(xb):
        h = ln(xb, params["g1"][0], params["be1"][0])
        q = (h @ params["wq"]).reshape(S, H, Dl)
        k = (h @ params["wk"]).reshape(S, H, Dl)
        v = (h @ params["wv"]).reshape(S, H, Dl)
        q, k = rope(q), rope(k)
        s = jnp.einsum("shd,thd->hst", q, k) / math.sqrt(Dl)
        mask = jnp.triu(jnp.ones((S, S), bool), k=1)
        s = jnp.where(mask[None], -1e30, s)
        p = jax.nn.softmax(s, axis=-1)
        a = jnp.einsum("hst,thd->shd", p, v).reshape(S, H * Dl)
        xb = xb + a @ params["wo"]
        h2 = ln(xb, params["g2"][0], params["be2"][0])
        u = h2 @ params["w1"] + params["fb1"][0]
        u = 0.5 * u * (1.0 + lax.erf(u / math.sqrt(2.0)))
        return xb + u @ params["w2"] + params["fb2"][0]

    return jax.vmap(one)(x)


# ---------------------------------------------------------------------------
if __name__ == "__main__":
    # config: d_reduced=32, d_latent=16 (per-head dim), n_heads=4
    B, S = 2, 8
    D_REDUCED, D_LATENT, N_HEADS = 32, 16, 4
    HDl, Dm = N_HEADS * D_LATENT, 4 * D_LATENT

    key = jax.random.PRNGKey(0)
    ks = jax.random.split(key, 12)

    params = {
        # Linear weights stored pre-transposed: y = x @ W  with W = (in, out)
        "wq": 0.05 * jax.random.normal(ks[0], (D_REDUCED, HDl), jnp.float32),
        "wk": 0.05 * jax.random.normal(ks[1], (D_REDUCED, HDl), jnp.float32),
        "wv": 0.05 * jax.random.normal(ks[2], (D_REDUCED, HDl), jnp.float32),
        "wo": 0.05 * jax.random.normal(ks[3], (HDl, D_REDUCED), jnp.float32),
        "g1": 1.0 + 0.1 * jax.random.normal(ks[4], (1, D_REDUCED), jnp.float32),
        "be1": 0.1 * jax.random.normal(ks[5], (1, D_REDUCED), jnp.float32),
        "g2": 1.0 + 0.1 * jax.random.normal(ks[6], (1, D_REDUCED), jnp.float32),
        "be2": 0.1 * jax.random.normal(ks[7], (1, D_REDUCED), jnp.float32),
        "w1": 0.05 * jax.random.normal(ks[8], (D_REDUCED, Dm), jnp.float32),
        "fb1": 0.1 * jax.random.normal(ks[9], (1, Dm), jnp.float32),
        "w2": 0.05 * jax.random.normal(ks[10], (Dm, D_REDUCED), jnp.float32),
        "fb2": 0.1 * jax.random.normal(ks[11], (1, D_REDUCED), jnp.float32),
    }

    x = jax.random.normal(jax.random.PRNGKey(42), (B, S, D_REDUCED), jnp.float32)

    out = reduced_scratch_space_block(x, params, n_heads=N_HEADS, d_latent=D_LATENT)
    out = jax.block_until_ready(out)

    ref = _reference(x, params, n_heads=N_HEADS, d_latent=D_LATENT)
    assert out.shape == (B, S, D_REDUCED)
    # bf16 MXU operands + approx reciprocal in the kernel vs. f32 reference.
    assert jnp.allclose(out, ref, rtol=2e-2, atol=2e-2), "mismatch vs JAX reference"

    print("KERNEL_OK")
</pallas_src>

<mosaic_0001>
module attributes {stable_mosaic.version = 11 : i64} {
  func.func @_block_kernel(%arg0: i32, %arg1: memref<16x32xf32, #tpu.memory_space<vmem>>, %arg2: memref<32x320xbf16, #tpu.memory_space<vmem>>, %arg3: memref<64x32xbf16, #tpu.memory_space<vmem>>, %arg4: memref<32x64xbf16, #tpu.memory_space<vmem>>, %arg5: memref<64x32xbf16, #tpu.memory_space<vmem>>, %arg6: memref<8x64xf32, #tpu.memory_space<vmem>>, %arg7: memref<2x8x64xf32, #tpu.memory_space<vmem>>, %arg8: memref<16x32xf32, #tpu.memory_space<vmem>>, %arg9: memref<16x64xbf16, #tpu.memory_space<vmem>>) attributes {dimension_semantics = [#tpu.dimension_semantics<parallel>], iteration_bounds = array<i64: 1>, scalar_prefetch = 0 : i64, scratch_operands = 1 : i64, tpu.core_type = #tpu.core_type<tc>, window_params = [{transform_indices = @transform_0, window_bounds = array<i64: 16, 32>}, {pipeline_mode = #tpu.pipeline_mode<synchronous>, transform_indices = @transform_1, window_bounds = array<i64: 32, 320>}, {pipeline_mode = #tpu.pipeline_mode<synchronous>, transform_indices = @transform_2, window_bounds = array<i64: 64, 32>}, {pipeline_mode = #tpu.pipeline_mode<synchronous>, transform_indices = @transform_3, window_bounds = array<i64: 32, 64>}, {pipeline_mode = #tpu.pipeline_mode<synchronous>, transform_indices = @transform_4, window_bounds = array<i64: 64, 32>}, {pipeline_mode = #tpu.pipeline_mode<synchronous>, transform_indices = @transform_5, window_bounds = array<i64: 8, 64>}, {pipeline_mode = #tpu.pipeline_mode<synchronous>, transform_indices = @transform_6, window_bounds = array<i64: 2, 8, 64>}, {transform_indices = @transform_7, window_bounds = array<i64: 16, 32>}]} {
    %c0 = arith.constant 0 : index
    %c0_0 = arith.constant 0 : index
    %0 = vector.load %arg1[%c0, %c0_0] : memref<16x32xf32, #tpu.memory_space<vmem>>, vector<16x32xf32>
    %c0_1 = arith.constant 0 : index
    %c0_2 = arith.constant 0 : index
    %1 = vector.load %arg6[%c0_1, %c0_2] : memref<8x64xf32, #tpu.memory_space<vmem>>, vector<8x64xf32>
    %2 = vector.extract_strided_slice %1 {offsets = [0, 0], sizes = [1, 32], strides = [1, 1]} : vector<8x64xf32> to vector<1x32xf32>
    %3 = vector.extract_strided_slice %1 {offsets = [1, 0], sizes = [1, 32], strides = [1, 1]} : vector<8x64xf32> to vector<1x32xf32>
    %4 = vector.extract_strided_slice %1 {offsets = [2, 0], sizes = [1, 32], strides = [1, 1]} : vector<8x64xf32> to vector<1x32xf32>
    %5 = vector.extract_strided_slice %1 {offsets = [3, 0], sizes = [1, 32], strides = [1, 1]} : vector<8x64xf32> to vector<1x32xf32>
    %6 = vector.extract_strided_slice %1 {offsets = [4, 0], sizes = [1, 32], strides = [1, 1]} : vector<8x64xf32> to vector<1x32xf32>
    %7 = vector.extract_strided_slice %1 {offsets = [5, 0], sizes = [1, 64], strides = [1, 1]} : vector<8x64xf32> to vector<1x64xf32>
    %8 = tpu.iota {dimensions = array<i32: 0>} : vector<16x16xi32>
    %9 = tpu.iota {dimensions = array<i32: 1>} : vector<16x16xi32>
    %10 = arith.sitofp %8 : vector<16x16xi32> to vector<16x16xf32>
    %cst = arith.constant 5.000000e-01 : f32
    %11 = vector.broadcast %cst : f32 to vector<16x16xf32>
    %12 = arith.addf %10, %11 : vector<16x16xf32>
    %cst_3 = arith.constant 1.250000e-01 : f32
    %13 = vector.broadcast %cst_3 : f32 to vector<16x16xf32>
    %14 = arith.mulf %12, %13 : vector<16x16xf32>
    %15 = math.floor %14 : vector<16x16xf32>
    %16 = arith.sitofp %9 : vector<16x16xi32> to vector<16x16xf32>
    %cst_4 = arith.constant 5.000000e-01 : f32
    %17 = vector.broadcast %cst_4 : f32 to vector<16x16xf32>
    %18 = arith.addf %16, %17 : vector<16x16xf32>
    %cst_5 = arith.constant 1.250000e-01 : f32
    %19 = vector.broadcast %cst_5 : f32 to vector<16x16xf32>
    %20 = arith.mulf %18, %19 : vector<16x16xf32>
    %21 = math.floor %20 : vector<16x16xf32>
    %22 = arith.cmpf oeq, %15, %21 : vector<16x16xf32>
    %23 = arith.cmpi sle, %9, %8 : vector<16x16xi32>
    %24 = arith.andi %22, %23 : vector<16x16xi1>
    %cst_6 = arith.constant 0.000000e+00 : f32
    %cst_7 = arith.constant -1.000000e+30 : f32
    %25 = vector.broadcast %cst_6 : f32 to vector<16x16xf32>
    %26 = vector.broadcast %cst_7 : f32 to vector<16x16xf32>
    %27 = arith.select %24, %25, %26 : vector<16x16xi1>, vector<16x16xf32>
    %c0_8 = arith.constant 0 : index
    %c0_9 = arith.constant 0 : index
    %c0_10 = arith.constant 0 : index
    %28 = vector.load %arg7[%c0_8, %c0_9, %c0_10] : memref<2x8x64xf32, #tpu.memory_space<vmem>>, vector<1x8x64xf32>
    %29 = vector.shape_cast %28 : vector<1x8x64xf32> to vector<8x64xf32>
    %c1 = arith.constant 1 : index
    %c0_11 = arith.constant 0 : index
    %c0_12 = arith.constant 0 : index
    %30 = vector.load %arg7[%c1, %c0_11, %c0_12] : memref<2x8x64xf32, #tpu.memory_space<vmem>>, vector<1x8x64xf32>
    %31 = vector.shape_cast %30 : vector<1x8x64xf32> to vector<8x64xf32>
    %32 = tpu.concatenate %29, %29 in 0 : vector<8x64xf32>, vector<8x64xf32> -> vector<16x64xf32>
    %33 = tpu.concatenate %31, %31 in 0 : vector<8x64xf32>, vector<8x64xf32> -> vector<16x64xf32>
    %cst_13 = arith.constant dense<0.000000e+00> : vector<16xf32>
    %34 = vector.multi_reduction <add>, %0, %cst_13 [1] : vector<16x32xf32> to vector<16xf32>
    %35 = vector.shape_cast %34 : vector<16xf32> to vector<16x1xf32>
    %cst_14 = arith.constant 3.200000e+01 : f32
    %36 = vector.broadcast %cst_14 : f32 to vector<16x1xf32>
    %37 = arith.divf %35, %36 : vector<16x1xf32>
    %38 = vector.broadcast %37 : vector<16x1xf32> to vector<16x32xf32>
    %39 = arith.subf %0, %38 : vector<16x32xf32>
    %40 = arith.mulf %39, %39 : vector<16x32xf32>
    %cst_15 = arith.constant dense<0.000000e+00> : vector<16xf32>
    %41 = vector.multi_reduction <add>, %40, %cst_15 [1] : vector<16x32xf32> to vector<16xf32>
    %42 = vector.shape_cast %41 : vector<16xf32> to vector<16x1xf32>
    %cst_16 = arith.constant 3.200000e+01 : f32
    %43 = vector.broadcast %cst_16 : f32 to vector<16x1xf32>
    %44 = arith.divf %42, %43 : vector<16x1xf32>
    %45 = vector.broadcast %37 : vector<16x1xf32> to vector<16x32xf32>
    %46 = arith.subf %0, %45 : vector<16x32xf32>
    %cst_17 = arith.constant 9.99999974E-6 : f32
    %47 = vector.broadcast %cst_17 : f32 to vector<16x1xf32>
    %48 = arith.addf %44, %47 : vector<16x1xf32>
    %49 = math.rsqrt %48 : vector<16x1xf32>
    %50 = vector.broadcast %49 : vector<16x1xf32> to vector<16x32xf32>
    %51 = arith.mulf %46, %50 : vector<16x32xf32>
    %52 = vector.broadcast %2 : vector<1x32xf32> to vector<16x32xf32>
    %53 = arith.mulf %51, %52 : vector<16x32xf32>
    %54 = vector.broadcast %3 : vector<1x32xf32> to vector<16x32xf32>
    %55 = arith.addf %53, %54 : vector<16x32xf32>
    %56 = arith.truncf %55 : vector<16x32xf32> to vector<16x32xbf16>
    %c0_18 = arith.constant 0 : index
    %c0_19 = arith.constant 0 : index
    %57 = vector.load %arg2[%c0_18, %c0_19] : memref<32x320xbf16, #tpu.memory_space<vmem>>, vector<32x320xbf16>
    %cst_20 = arith.constant dense<0.000000e+00> : vector<16x320xf32>
    %58 = tpu.matmul %56, %57, %cst_20 {dimension_numbers = #tpu.dot_dimension_numbers<[1], [0], [0], [1], [0, 0, 1, 1], [], []>} : vector<16x32xbf16>, vector<32x320xbf16>, vector<16x320xf32> -> vector<16x320xf32>
    %59 = vector.extract_strided_slice %58 {offsets = [0, 0], sizes = [16, 64], strides = [1, 1]} : vector<16x320xf32> to vector<16x64xf32>
    %60 = vector.extract_strided_slice %58 {offsets = [0, 64], sizes = [16, 64], strides = [1, 1]} : vector<16x320xf32> to vector<16x64xf32>
    %61 = vector.extract_strided_slice %58 {offsets = [0, 128], sizes = [16, 64], strides = [1, 1]} : vector<16x320xf32> to vector<16x64xf32>
    %62 = vector.extract_strided_slice %58 {offsets = [0, 192], sizes = [16, 64], strides = [1, 1]} : vector<16x320xf32> to vector<16x64xf32>
    %63 = vector.extract_strided_slice %58 {offsets = [0, 256], sizes = [16, 64], strides = [1, 1]} : vector<16x320xf32> to vector<16x64xf32>
    %64 = arith.mulf %59, %32 : vector<16x64xf32>
    %65 = arith.mulf %60, %33 : vector<16x64xf32>
    %66 = arith.addf %64, %65 : vector<16x64xf32>
    %67 = arith.truncf %66 : vector<16x64xf32> to vector<16x64xbf16>
    %68 = arith.mulf %61, %32 : vector<16x64xf32>
    %69 = arith.mulf %62, %33 : vector<16x64xf32>
    %70 = arith.addf %68, %69 : vector<16x64xf32>
    %71 = tpu.transpose %70, [1, 0] : vector<16x64xf32> -> vector<64x16xf32>
    %72 = arith.truncf %71 : vector<64x16xf32> to vector<64x16xbf16>
    %73 = arith.truncf %63 : vector<16x64xf32> to vector<16x64xbf16>
    %74 = vector.extract_strided_slice %67 {offsets = [0, 0], sizes = [16, 16], strides = [1, 1]} : vector<16x64xbf16> to vector<16x16xbf16>
    %75 = vector.extract_strided_slice %72 {offsets = [0, 0], sizes = [16, 16], strides = [1, 1]} : vector<64x16xbf16> to vector<16x16xbf16>
    %cst_21 = arith.constant dense<0.000000e+00> : vector<16x16xf32>
    %76 = tpu.matmul %74, %75, %cst_21 {dimension_numbers = #tpu.dot_dimension_numbers<[1], [0], [0], [1], [0, 0, 1, 1], [], []>} : vector<16x16xbf16>, vector<16x16xbf16>, vector<16x16xf32> -> vector<16x16xf32>
    %77 = arith.addf %76, %27 : vector<16x16xf32>
    %cst_22 = arith.constant dense<0xFF800000> : vector<16xf32>
    %78 = vector.multi_reduction <maximumf>, %77, %cst_22 [1] : vector<16x16xf32> to vector<16xf32>
    %79 = vector.shape_cast %78 : vector<16xf32> to vector<16x1xf32>
    %80 = vector.broadcast %79 : vector<16x1xf32> to vector<16x16xf32>
    %81 = arith.subf %77, %80 : vector<16x16xf32>
    %82 = math.exp %81 : vector<16x16xf32>
    %cst_23 = arith.constant dense<0.000000e+00> : vector<16xf32>
    %83 = vector.multi_reduction <add>, %82, %cst_23 [1] : vector<16x16xf32> to vector<16xf32>
    %84 = vector.shape_cast %83 : vector<16xf32> to vector<16x1xf32>
    %85 = tpu.reciprocal %84 {approx = true} : vector<16x1xf32> -> vector<16x1xf32>
    %86 = arith.truncf %82 : vector<16x16xf32> to vector<16x16xbf16>
    %87 = vector.extract_strided_slice %73 {offsets = [0, 0], sizes = [16, 16], strides = [1, 1]} : vector<16x64xbf16> to vector<16x16xbf16>
    %cst_24 = arith.constant dense<0.000000e+00> : vector<16x16xf32>
    %88 = tpu.matmul %86, %87, %cst_24 {dimension_numbers = #tpu.dot_dimension_numbers<[1], [0], [0], [1], [0, 0, 1, 1], [], []>} : vector<16x16xbf16>, vector<16x16xbf16>, vector<16x16xf32> -> vector<16x16xf32>
    %89 = vector.broadcast %85 : vector<16x1xf32> to vector<16x16xf32>
    %90 = arith.mulf %88, %89 : vector<16x16xf32>
    %91 = arith.truncf %90 : vector<16x16xf32> to vector<16x16xbf16>
    %c0_25 = arith.constant 0 : index
    %c0_26 = arith.constant 0 : index
    %92 = vector.load %arg9[%c0_25, %c0_26] : memref<16x64xbf16, #tpu.memory_space<vmem>>, vector<16x16xbf16>
    tpu.vector_store %arg9[%c0_25, %c0_26], %91 {strides = array<i32>} : memref<16x64xbf16, #tpu.memory_space<vmem>>, vector<16x16xbf16>,
    %93 = vector.extract_strided_slice %67 {offsets = [0, 16], sizes = [16, 16], strides = [1, 1]} : vector<16x64xbf16> to vector<16x16xbf16>
    %94 = vector.extract_strided_slice %72 {offsets = [16, 0], sizes = [16, 16], strides = [1, 1]} : vector<64x16xbf16> to vector<16x16xbf16>
    %cst_27 = arith.constant dense<0.000000e+00> : vector<16x16xf32>
    %95 = tpu.matmul %93, %94, %cst_27 {dimension_numbers = #tpu.dot_dimension_numbers<[1], [0], [0], [1], [0, 0, 1, 1], [], []>} : vector<16x16xbf16>, vector<16x16xbf16>, vector<16x16xf32> -> vector<16x16xf32>
    %96 = arith.addf %95, %27 : vector<16x16xf32>
    %cst_28 = arith.constant dense<0xFF800000> : vector<16xf32>
    %97 = vector.multi_reduction <maximumf>, %96, %cst_28 [1] : vector<16x16xf32> to vector<16xf32>
    %98 = vector.shape_cast %97 : vector<16xf32> to vector<16x1xf32>
    %99 = vector.broadcast %98 : vector<16x1xf32> to vector<16x16xf32>
    %100 = arith.subf %96, %99 : vector<16x16xf32>
    %101 = math.exp %100 : vector<16x16xf32>
    %cst_29 = arith.constant dense<0.000000e+00> : vector<16xf32>
    %102 = vector.multi_reduction <add>, %101, %cst_29 [1] : vector<16x16xf32> to vector<16xf32>
    %103 = vector.shape_cast %102 : vector<16xf32> to vector<16x1xf32>
    %104 = tpu.reciprocal %103 {approx = true} : vector<16x1xf32> -> vector<16x1xf32>
    %105 = arith.truncf %101 : vector<16x16xf32> to vector<16x16xbf16>
    %106 = vector.extract_strided_slice %73 {offsets = [0, 16], sizes = [16, 16], strides = [1, 1]} : vector<16x64xbf16> to vector<16x16xbf16>
    %cst_30 = arith.constant dense<0.000000e+00> : vector<16x16xf32>
    %107 = tpu.matmul %105, %106, %cst_30 {dimension_numbers = #tpu.dot_dimension_numbers<[1], [0], [0], [1], [0, 0, 1, 1], [], []>} : vector<16x16xbf16>, vector<16x16xbf16>, vector<16x16xf32> -> vector<16x16xf32>
    %108 = vector.broadcast %104 : vector<16x1xf32> to vector<16x16xf32>
    %109 = arith.mulf %107, %108 : vector<16x16xf32>
    %110 = arith.truncf %109 : vector<16x16xf32> to vector<16x16xbf16>
    %c0_31 = arith.constant 0 : index
    %c16 = arith.constant 16 : index
    %111 = vector.load %arg9[%c0_31, %c16] : memref<16x64xbf16, #tpu.memory_space<vmem>>, vector<16x16xbf16>
    tpu.vector_store %arg9[%c0_31, %c16], %110 {strides = array<i32>} : memref<16x64xbf16, #tpu.memory_space<vmem>>, vector<16x16xbf16>,
    %112 = vector.extract_strided_slice %67 {offsets = [0, 32], sizes = [16, 16], strides = [1, 1]} : vector<16x64xbf16> to vector<16x16xbf16>
    %113 = vector.extract_strided_slice %72 {offsets = [32, 0], sizes = [16, 16], strides = [1, 1]} : vector<64x16xbf16> to vector<16x16xbf16>
    %cst_32 = arith.constant dense<0.000000e+00> : vector<16x16xf32>
    %114 = tpu.matmul %112, %113, %cst_32 {dimension_numbers = #tpu.dot_dimension_numbers<[1], [0], [0], [1], [0, 0, 1, 1], [], []>} : vector<16x16xbf16>, vector<16x16xbf16>, vector<16x16xf32> -> vector<16x16xf32>
    %115 = arith.addf %114, %27 : vector<16x16xf32>
    %cst_33 = arith.constant dense<0xFF800000> : vector<16xf32>
    %116 = vector.multi_reduction <maximumf>, %115, %cst_33 [1] : vector<16x16xf32> to vector<16xf32>
    %117 = vector.shape_cast %116 : vector<16xf32> to vector<16x1xf32>
    %118 = vector.broadcast %117 : vector<16x1xf32> to vector<16x16xf32>
    %119 = arith.subf %115, %118 : vector<16x16xf32>
    %120 = math.exp %119 : vector<16x16xf32>
    %cst_34 = arith.constant dense<0.000000e+00> : vector<16xf32>
    %121 = vector.multi_reduction <add>, %120, %cst_34 [1] : vector<16x16xf32> to vector<16xf32>
    %122 = vector.shape_cast %121 : vector<16xf32> to vector<16x1xf32>
    %123 = tpu.reciprocal %122 {approx = true} : vector<16x1xf32> -> vector<16x1xf32>
    %124 = arith.truncf %120 : vector<16x16xf32> to vector<16x16xbf16>
    %125 = vector.extract_strided_slice %73 {offsets = [0, 32], sizes = [16, 16], strides = [1, 1]} : vector<16x64xbf16> to vector<16x16xbf16>
    %cst_35 = arith.constant dense<0.000000e+00> : vector<16x16xf32>
    %126 = tpu.matmul %124, %125, %cst_35 {dimension_numbers = #tpu.dot_dimension_numbers<[1], [0], [0], [1], [0, 0, 1, 1], [], []>} : vector<16x16xbf16>, vector<16x16xbf16>, vector<16x16xf32> -> vector<16x16xf32>
    %127 = vector.broadcast %123 : vector<16x1xf32> to vector<16x16xf32>
    %128 = arith.mulf %126, %127 : vector<16x16xf32>
    %129 = arith.truncf %128 : vector<16x16xf32> to vector<16x16xbf16>
    %c0_36 = arith.constant 0 : index
    %c32 = arith.constant 32 : index
    %130 = vector.load %arg9[%c0_36, %c32] : memref<16x64xbf16, #tpu.memory_space<vmem>>, vector<16x16xbf16>
    tpu.vector_store %arg9[%c0_36, %c32], %129 {strides = array<i32>} : memref<16x64xbf16, #tpu.memory_space<vmem>>, vector<16x16xbf16>,
    %131 = vector.extract_strided_slice %67 {offsets = [0, 48], sizes = [16, 16], strides = [1, 1]} : vector<16x64xbf16> to vector<16x16xbf16>
    %132 = vector.extract_strided_slice %72 {offsets = [48, 0], sizes = [16, 16], strides = [1, 1]} : vector<64x16xbf16> to vector<16x16xbf16>
    %cst_37 = arith.constant dense<0.000000e+00> : vector<16x16xf32>
    %133 = tpu.matmul %131, %132, %cst_37 {dimension_numbers = #tpu.dot_dimension_numbers<[1], [0], [0], [1], [0, 0, 1, 1], [], []>} : vector<16x16xbf16>, vector<16x16xbf16>, vector<16x16xf32> -> vector<16x16xf32>
    %134 = arith.addf %133, %27 : vector<16x16xf32>
    %cst_38 = arith.constant dense<0xFF800000> : vector<16xf32>
    %135 = vector.multi_reduction <maximumf>, %134, %cst_38 [1] : vector<16x16xf32> to vector<16xf32>
    %136 = vector.shape_cast %135 : vector<16xf32> to vector<16x1xf32>
    %137 = vector.broadcast %136 : vector<16x1xf32> to vector<16x16xf32>
    %138 = arith.subf %134, %137 : vector<16x16xf32>
    %139 = math.exp %138 : vector<16x16xf32>
    %cst_39 = arith.constant dense<0.000000e+00> : vector<16xf32>
    %140 = vector.multi_reduction <add>, %139, %cst_39 [1] : vector<16x16xf32> to vector<16xf32>
    %141 = vector.shape_cast %140 : vector<16xf32> to vector<16x1xf32>
    %142 = tpu.reciprocal %141 {approx = true} : vector<16x1xf32> -> vector<16x1xf32>
    %143 = arith.truncf %139 : vector<16x16xf32> to vector<16x16xbf16>
    %144 = vector.extract_strided_slice %73 {offsets = [0, 48], sizes = [16, 16], strides = [1, 1]} : vector<16x64xbf16> to vector<16x16xbf16>
    %cst_40 = arith.constant dense<0.000000e+00> : vector<16x16xf32>
    %145 = tpu.matmul %143, %144, %cst_40 {dimension_numbers = #tpu.dot_dimension_numbers<[1], [0], [0], [1], [0, 0, 1, 1], [], []>} : vector<16x16xbf16>, vector<16x16xbf16>, vector<16x16xf32> -> vector<16x16xf32>
    %146 = vector.broadcast %142 : vector<16x1xf32> to vector<16x16xf32>
    %147 = arith.mulf %145, %146 : vector<16x16xf32>
    %148 = arith.truncf %147 : vector<16x16xf32> to vector<16x16xbf16>
    %c0_41 = arith.constant 0 : index
    %c48 = arith.constant 48 : index
    %149 = vector.load %arg9[%c0_41, %c48] : memref<16x64xbf16, #tpu.memory_space<vmem>>, vector<16x16xbf16>
    tpu.vector_store %arg9[%c0_41, %c48], %148 {strides = array<i32>} : memref<16x64xbf16, #tpu.memory_space<vmem>>, vector<16x16xbf16>,
    %c0_42 = arith.constant 0 : index
    %c0_43 = arith.constant 0 : index
    %150 = vector.load %arg9[%c0_42, %c0_43] : memref<16x64xbf16, #tpu.memory_space<vmem>>, vector<16x64xbf16>
    %c0_44 = arith.constant 0 : index
    %c0_45 = arith.constant 0 : index
    %151 = vector.load %arg3[%c0_44, %c0_45] : memref<64x32xbf16, #tpu.memory_space<vmem>>, vector<64x32xbf16>
    %cst_46 = arith.constant dense<0.000000e+00> : vector<16x32xf32>
    %152 = tpu.matmul %150, %151, %cst_46 {dimension_numbers = #tpu.dot_dimension_numbers<[1], [0], [0], [1], [0, 0, 1, 1], [], []>} : vector<16x64xbf16>, vector<64x32xbf16>, vector<16x32xf32> -> vector<16x32xf32>
    %153 = arith.addf %0, %152 : vector<16x32xf32>
    %cst_47 = arith.constant dense<0.000000e+00> : vector<16xf32>
    %154 = vector.multi_reduction <add>, %153, %cst_47 [1] : vector<16x32xf32> to vector<16xf32>
    %155 = vector.shape_cast %154 : vector<16xf32> to vector<16x1xf32>
    %cst_48 = arith.constant 3.200000e+01 : f32
    %156 = vector.broadcast %cst_48 : f32 to vector<16x1xf32>
    %157 = arith.divf %155, %156 : vector<16x1xf32>
    %158 = vector.broadcast %157 : vector<16x1xf32> to vector<16x32xf32>
    %159 = arith.subf %153, %158 : vector<16x32xf32>
    %160 = arith.mulf %159, %159 : vector<16x32xf32>
    %cst_49 = arith.constant dense<0.000000e+00> : vector<16xf32>
    %161 = vector.multi_reduction <add>, %160, %cst_49 [1] : vector<16x32xf32> to vector<16xf32>
    %162 = vector.shape_cast %161 : vector<16xf32> to vector<16x1xf32>
    %cst_50 = arith.constant 3.200000e+01 : f32
    %163 = vector.broadcast %cst_50 : f32 to vector<16x1xf32>
    %164 = arith.divf %162, %163 : vector<16x1xf32>
    %165 = vector.broadcast %157 : vector<16x1xf32> to vector<16x32xf32>
    %166 = arith.subf %153, %165 : vector<16x32xf32>
    %cst_51 = arith.constant 9.99999974E-6 : f32
    %167 = vector.broadcast %cst_51 : f32 to vector<16x1xf32>
    %168 = arith.addf %164, %167 : vector<16x1xf32>
    %169 = math.rsqrt %168 : vector<16x1xf32>
    %170 = vector.broadcast %169 : vector<16x1xf32> to vector<16x32xf32>
    %171 = arith.mulf %166, %170 : vector<16x32xf32>
    %172 = vector.broadcast %4 : vector<1x32xf32> to vector<16x32xf32>
    %173 = arith.mulf %171, %172 : vector<16x32xf32>
    %174 = vector.broadcast %5 : vector<1x32xf32> to vector<16x32xf32>
    %175 = arith.addf %173, %174 : vector<16x32xf32>
    %176 = arith.truncf %175 : vector<16x32xf32> to vector<16x32xbf16>
    %c0_52 = arith.constant 0 : index
    %c0_53 = arith.constant 0 : index
    %177 = vector.load %arg4[%c0_52, %c0_53] : memref<32x64xbf16, #tpu.memory_space<vmem>>, vector<32x64xbf16>
    %cst_54 = arith.constant dense<0.000000e+00> : vector<16x64xf32>
    %178 = tpu.matmul %176, %177, %cst_54 {dimension_numbers = #tpu.dot_dimension_numbers<[1], [0], [0], [1], [0, 0, 1, 1], [], []>} : vector<16x32xbf16>, vector<32x64xbf16>, vector<16x64xf32> -> vector<16x64xf32>
    %179 = vector.broadcast %7 : vector<1x64xf32> to vector<16x64xf32>
    %180 = arith.addf %178, %179 : vector<16x64xf32>
    %cst_55 = arith.constant 0.707106769 : f32
    %181 = vector.broadcast %cst_55 : f32 to vector<16x64xf32>
    %182 = arith.mulf %180, %181 : vector<16x64xf32>
    %183 = math.absf %182 : vector<16x64xf32>
    %cst_56 = arith.constant 0.327591091 : f32
    %184 = vector.broadcast %cst_56 : f32 to vector<16x64xf32>
    %185 = arith.mulf %184, %183 : vector<16x64xf32>
    %cst_57 = arith.constant 1.000000e+00 : f32
    %186 = vector.broadcast %cst_57 : f32 to vector<16x64xf32>
    %187 = arith.addf %186, %185 : vector<16x64xf32>
    %cst_58 = arith.constant 1.000000e+00 : f32
    %188 = vector.broadcast %cst_58 : f32 to vector<16x64xf32>
    %189 = arith.divf %188, %187 : vector<16x64xf32>
    %cst_59 = arith.constant 1.06140542 : f32
    %190 = vector.broadcast %cst_59 : f32 to vector<16x64xf32>
    %191 = arith.mulf %189, %190 : vector<16x64xf32>
    %cst_60 = arith.constant -1.45315206 : f32
    %192 = vector.broadcast %cst_60 : f32 to vector<16x64xf32>
    %193 = arith.addf %192, %191 : vector<16x64xf32>
    %194 = arith.mulf %189, %193 : vector<16x64xf32>
    %cst_61 = arith.constant 1.42141378 : f32
    %195 = vector.broadcast %cst_61 : f32 to vector<16x64xf32>
    %196 = arith.addf %195, %194 : vector<16x64xf32>
    %197 = arith.mulf %189, %196 : vector<16x64xf32>
    %cst_62 = arith.constant -0.284496725 : f32
    %198 = vector.broadcast %cst_62 : f32 to vector<16x64xf32>
    %199 = arith.addf %198, %197 : vector<16x64xf32>
    %200 = arith.mulf %189, %199 : vector<16x64xf32>
    %cst_63 = arith.constant 0.254829586 : f32
    %201 = vector.broadcast %cst_63 : f32 to vector<16x64xf32>
    %202 = arith.addf %201, %200 : vector<16x64xf32>
    %203 = arith.mulf %189, %202 : vector<16x64xf32>
    %cst_64 = arith.constant 0.000000e+00 : f32
    %204 = vector.broadcast %cst_64 : f32 to vector<16x64xf32>
    %205 = arith.subf %204, %183 : vector<16x64xf32>
    %206 = arith.mulf %205, %183 : vector<16x64xf32>
    %207 = math.exp %206 : vector<16x64xf32>
    %208 = arith.mulf %203, %207 : vector<16x64xf32>
    %cst_65 = arith.constant 1.000000e+00 : f32
    %209 = vector.broadcast %cst_65 : f32 to vector<16x64xf32>
    %210 = arith.subf %209, %208 : vector<16x64xf32>
    %cst_66 = arith.constant 0.000000e+00 : f32
    %211 = vector.broadcast %cst_66 : f32 to vector<16x64xf32>
    %212 = arith.cmpf olt, %182, %211 : vector<16x64xf32>
    %cst_67 = arith.constant 0.000000e+00 : f32
    %213 = vector.broadcast %cst_67 : f32 to vector<16x64xf32>
    %214 = arith.subf %213, %210 : vector<16x64xf32>
    %215 = arith.select %212, %214, %210 : vector<16x64xi1>, vector<16x64xf32>
    %cst_68 = arith.constant 5.000000e-01 : f32
    %216 = vector.broadcast %cst_68 : f32 to vector<16x64xf32>
    %217 = arith.mulf %216, %180 : vector<16x64xf32>
    %cst_69 = arith.constant 1.000000e+00 : f32
    %218 = vector.broadcast %cst_69 : f32 to vector<16x64xf32>
    %219 = arith.addf %218, %215 : vector<16x64xf32>
    %220 = arith.mulf %217, %219 : vector<16x64xf32>
    %221 = arith.truncf %220 : vector<16x64xf32> to vector<16x64xbf16>
    %c0_70 = arith.constant 0 : index
    %c0_71 = arith.constant 0 : index
    %222 = vector.load %arg5[%c0_70, %c0_71] : memref<64x32xbf16, #tpu.memory_space<vmem>>, vector<64x32xbf16>
    %cst_72 = arith.constant dense<0.000000e+00> : vector<16x32xf32>
    %223 = tpu.matmul %221, %222, %cst_72 {dimension_numbers = #tpu.dot_dimension_numbers<[1], [0], [0], [1], [0, 0, 1, 1], [], []>} : vector<16x64xbf16>, vector<64x32xbf16>, vector<16x32xf32> -> vector<16x32xf32>
    %224 = vector.broadcast %6 : vector<1x32xf32> to vector<16x32xf32>
    %225 = arith.addf %223, %224 : vector<16x32xf32>
    %226 = arith.addf %153, %225 : vector<16x32xf32>
    %c0_73 = arith.constant 0 : index
    %c0_74 = arith.constant 0 : index
    %227 = vector.load %arg8[%c0_73, %c0_74] : memref<16x32xf32, #tpu.memory_space<vmem>>, vector<16x32xf32>
    tpu.vector_store %arg8[%c0_73, %c0_74], %226 {strides = array<i32>} : memref<16x32xf32, #tpu.memory_space<vmem>>, vector<16x32xf32>,
    return
  }
  func.func @transform_0(%arg0: i32) -> (i32, i32) {
    %c0_i32 = arith.constant 0 : i32
    %c0_i32_0 = arith.constant 0 : i32
    return %arg0, %c0_i32 : i32, i32
  }
  func.func @transform_1(%arg0: i32) -> (i32, i32) {
    %c0_i32 = arith.constant 0 : i32
    %c0_i32_0 = arith.constant 0 : i32
    %c0_i32_1 = arith.constant 0 : i32
    return %c0_i32, %c0_i32_0 : i32, i32
  }
  func.func @transform_2(%arg0: i32) -> (i32, i32) {
    %c0_i32 = arith.constant 0 : i32
    %c0_i32_0 = arith.constant 0 : i32
    %c0_i32_1 = arith.constant 0 : i32
    return %c0_i32, %c0_i32_0 : i32, i32
  }
  func.func @transform_3(%arg0: i32) -> (i32, i32) {
    %c0_i32 = arith.constant 0 : i32
    %c0_i32_0 = arith.constant 0 : i32
    %c0_i32_1 = arith.constant 0 : i32
    return %c0_i32, %c0_i32_0 : i32, i32
  }
  func.func @transform_4(%arg0: i32) -> (i32, i32) {
    %c0_i32 = arith.constant 0 : i32
    %c0_i32_0 = arith.constant 0 : i32
    %c0_i32_1 = arith.constant 0 : i32
    return %c0_i32, %c0_i32_0 : i32, i32
  }
  func.func @transform_5(%arg0: i32) -> (i32, i32) {
    %c0_i32 = arith.constant 0 : i32
    %c0_i32_0 = arith.constant 0 : i32
    %c0_i32_1 = arith.constant 0 : i32
    return %c0_i32, %c0_i32_0 : i32, i32
  }
  func.func @transform_6(%arg0: i32) -> (i32, i32, i32) {
    %c0_i32 = arith.constant 0 : i32
    %c0_i32_0 = arith.constant 0 : i32
    %c0_i32_1 = arith.constant 0 : i32
    %c0_i32_2 = arith.constant 0 : i32
    return %c0_i32, %c0_i32_0, %c0_i32_1 : i32, i32, i32
  }
  func.func @transform_7(%arg0: i32) -> (i32, i32) {
    %c0_i32 = arith.constant 0 : i32
    %c0_i32_0 = arith.constant 0 : i32
    return %arg0, %c0_i32 : i32, i32
  }
}

module attributes {stable_mosaic.version = 11 : i64} {
  func.func @_block_kernel(%arg0: i32, %arg1: memref<16x32xf32, #tpu.memory_space<vmem>>, %arg2: memref<32x320xbf16, #tpu.memory_space<vmem>>, %arg3: memref<64x32xbf16, #tpu.memory_space<vmem>>, %arg4: memref<32x64xbf16, #tpu.memory_space<vmem>>, %arg5: memref<64x32xbf16, #tpu.memory_space<vmem>>, %arg6: memref<8x64xf32, #tpu.memory_space<vmem>>, %arg7: memref<2x8x64xf32, #tpu.memory_space<vmem>>, %arg8: memref<16x32xf32, #tpu.memory_space<vmem>>, %arg9: memref<16x64xbf16, #tpu.memory_space<vmem>>) attributes {dimension_semantics = [#tpu.dimension_semantics<parallel>], iteration_bounds = array<i64: 1>, scalar_prefetch = 0 : i64, scratch_operands = 1 : i64, tpu.core_type = #tpu.core_type<tc>, window_params = [{transform_indices = @transform_0, window_bounds = array<i64: 16, 32>}, {pipeline_mode = #tpu.pipeline_mode<synchronous>, transform_indices = @transform_1, window_bounds = array<i64: 32, 320>}, {pipeline_mode = #tpu.pipeline_mode<synchronous>, transform_indices = @transform_2, window_bounds = array<i64: 64, 32>}, {pipeline_mode = #tpu.pipeline_mode<synchronous>, transform_indices = @transform_3, window_bounds = array<i64: 32, 64>}, {pipeline_mode = #tpu.pipeline_mode<synchronous>, transform_indices = @transform_4, window_bounds = array<i64: 64, 32>}, {pipeline_mode = #tpu.pipeline_mode<synchronous>, transform_indices = @transform_5, window_bounds = array<i64: 8, 64>}, {pipeline_mode = #tpu.pipeline_mode<synchronous>, transform_indices = @transform_6, window_bounds = array<i64: 2, 8, 64>}, {transform_indices = @transform_7, window_bounds = array<i64: 16, 32>}]} {
    %c0 = arith.constant 0 : index
    %c0_0 = arith.constant 0 : index
    %0 = vector.load %arg1[%c0, %c0_0] : memref<16x32xf32, #tpu.memory_space<vmem>>, vector<16x32xf32>
    %c0_1 = arith.constant 0 : index
    %c0_2 = arith.constant 0 : index
    %1 = vector.load %arg6[%c0_1, %c0_2] : memref<8x64xf32, #tpu.memory_space<vmem>>, vector<8x64xf32>
    %2 = vector.extract_strided_slice %1 {offsets = [0, 0], sizes = [1, 32], strides = [1, 1]} : vector<8x64xf32> to vector<1x32xf32>
    %3 = vector.extract_strided_slice %1 {offsets = [1, 0], sizes = [1, 32], strides = [1, 1]} : vector<8x64xf32> to vector<1x32xf32>
    %4 = vector.extract_strided_slice %1 {offsets = [2, 0], sizes = [1, 32], strides = [1, 1]} : vector<8x64xf32> to vector<1x32xf32>
    %5 = vector.extract_strided_slice %1 {offsets = [3, 0], sizes = [1, 32], strides = [1, 1]} : vector<8x64xf32> to vector<1x32xf32>
    %6 = vector.extract_strided_slice %1 {offsets = [4, 0], sizes = [1, 32], strides = [1, 1]} : vector<8x64xf32> to vector<1x32xf32>
    %7 = vector.extract_strided_slice %1 {offsets = [5, 0], sizes = [1, 64], strides = [1, 1]} : vector<8x64xf32> to vector<1x64xf32>
    %8 = tpu.iota {dimensions = array<i32: 0>} : vector<16x16xi32>
    %9 = tpu.iota {dimensions = array<i32: 1>} : vector<16x16xi32>
    %10 = arith.sitofp %8 : vector<16x16xi32> to vector<16x16xf32>
    %cst = arith.constant 5.000000e-01 : f32
    %11 = vector.broadcast %cst : f32 to vector<16x16xf32>
    %12 = arith.addf %10, %11 : vector<16x16xf32>
    %cst_3 = arith.constant 1.250000e-01 : f32
    %13 = vector.broadcast %cst_3 : f32 to vector<16x16xf32>
    %14 = arith.mulf %12, %13 : vector<16x16xf32>
    %15 = math.floor %14 : vector<16x16xf32>
    %16 = arith.sitofp %9 : vector<16x16xi32> to vector<16x16xf32>
    %cst_4 = arith.constant 5.000000e-01 : f32
    %17 = vector.broadcast %cst_4 : f32 to vector<16x16xf32>
    %18 = arith.addf %16, %17 : vector<16x16xf32>
    %cst_5 = arith.constant 1.250000e-01 : f32
    %19 = vector.broadcast %cst_5 : f32 to vector<16x16xf32>
    %20 = arith.mulf %18, %19 : vector<16x16xf32>
    %21 = math.floor %20 : vector<16x16xf32>
    %22 = arith.cmpf oeq, %15, %21 : vector<16x16xf32>
    %23 = arith.cmpi sle, %9, %8 : vector<16x16xi32>
    %24 = arith.andi %22, %23 : vector<16x16xi1>
    %cst_6 = arith.constant 0.000000e+00 : f32
    %cst_7 = arith.constant -1.000000e+30 : f32
    %25 = vector.broadcast %cst_6 : f32 to vector<16x16xf32>
    %26 = vector.broadcast %cst_7 : f32 to vector<16x16xf32>
    %27 = arith.select %24, %25, %26 : vector<16x16xi1>, vector<16x16xf32>
    %c0_8 = arith.constant 0 : index
    %c0_9 = arith.constant 0 : index
    %c0_10 = arith.constant 0 : index
    %28 = vector.load %arg7[%c0_8, %c0_9, %c0_10] : memref<2x8x64xf32, #tpu.memory_space<vmem>>, vector<1x8x64xf32>
    %29 = vector.shape_cast %28 : vector<1x8x64xf32> to vector<8x64xf32>
    %c1 = arith.constant 1 : index
    %c0_11 = arith.constant 0 : index
    %c0_12 = arith.constant 0 : index
    %30 = vector.load %arg7[%c1, %c0_11, %c0_12] : memref<2x8x64xf32, #tpu.memory_space<vmem>>, vector<1x8x64xf32>
    %31 = vector.shape_cast %30 : vector<1x8x64xf32> to vector<8x64xf32>
    %32 = tpu.concatenate %29, %29 in 0 : vector<8x64xf32>, vector<8x64xf32> -> vector<16x64xf32>
    %33 = tpu.concatenate %31, %31 in 0 : vector<8x64xf32>, vector<8x64xf32> -> vector<16x64xf32>
    %cst_13 = arith.constant dense<0.000000e+00> : vector<16xf32>
    %34 = vector.multi_reduction <add>, %0, %cst_13 [1] : vector<16x32xf32> to vector<16xf32>
    %35 = vector.shape_cast %34 : vector<16xf32> to vector<16x1xf32>
    %cst_14 = arith.constant 3.200000e+01 : f32
    %36 = vector.broadcast %cst_14 : f32 to vector<16x1xf32>
    %37 = arith.divf %35, %36 : vector<16x1xf32>
    %38 = vector.broadcast %37 : vector<16x1xf32> to vector<16x32xf32>
    %39 = arith.subf %0, %38 : vector<16x32xf32>
    %40 = arith.mulf %39, %39 : vector<16x32xf32>
    %cst_15 = arith.constant dense<0.000000e+00> : vector<16xf32>
    %41 = vector.multi_reduction <add>, %40, %cst_15 [1] : vector<16x32xf32> to vector<16xf32>
    %42 = vector.shape_cast %41 : vector<16xf32> to vector<16x1xf32>
    %cst_16 = arith.constant 3.200000e+01 : f32
    %43 = vector.broadcast %cst_16 : f32 to vector<16x1xf32>
    %44 = arith.divf %42, %43 : vector<16x1xf32>
    %45 = vector.broadcast %37 : vector<16x1xf32> to vector<16x32xf32>
    %46 = arith.subf %0, %45 : vector<16x32xf32>
    %cst_17 = arith.constant 9.99999974E-6 : f32
    %47 = vector.broadcast %cst_17 : f32 to vector<16x1xf32>
    %48 = arith.addf %44, %47 : vector<16x1xf32>
    %49 = math.rsqrt %48 : vector<16x1xf32>
    %50 = vector.broadcast %49 : vector<16x1xf32> to vector<16x32xf32>
    %51 = arith.mulf %46, %50 : vector<16x32xf32>
    %52 = vector.broadcast %2 : vector<1x32xf32> to vector<16x32xf32>
    %53 = arith.mulf %51, %52 : vector<16x32xf32>
    %54 = vector.broadcast %3 : vector<1x32xf32> to vector<16x32xf32>
    %55 = arith.addf %53, %54 : vector<16x32xf32>
    %56 = arith.truncf %55 : vector<16x32xf32> to vector<16x32xbf16>
    %c0_18 = arith.constant 0 : index
    %c0_19 = arith.constant 0 : index
    %57 = vector.load %arg2[%c0_18, %c0_19] : memref<32x320xbf16, #tpu.memory_space<vmem>>, vector<32x320xbf16>
    %cst_20 = arith.constant dense<0.000000e+00> : vector<16x320xf32>
    %58 = tpu.matmul %56, %57, %cst_20 {dimension_numbers = #tpu.dot_dimension_numbers<[1], [0], [0], [1], [0, 0, 1, 1], [], []>} : vector<16x32xbf16>, vector<32x320xbf16>, vector<16x320xf32> -> vector<16x320xf32>
    %59 = vector.extract_strided_slice %58 {offsets = [0, 0], sizes = [16, 64], strides = [1, 1]} : vector<16x320xf32> to vector<16x64xf32>
    %60 = vector.extract_strided_slice %58 {offsets = [0, 64], sizes = [16, 64], strides = [1, 1]} : vector<16x320xf32> to vector<16x64xf32>
    %61 = vector.extract_strided_slice %58 {offsets = [0, 128], sizes = [16, 64], strides = [1, 1]} : vector<16x320xf32> to vector<16x64xf32>
    %62 = vector.extract_strided_slice %58 {offsets = [0, 192], sizes = [16, 64], strides = [1, 1]} : vector<16x320xf32> to vector<16x64xf32>
    %63 = vector.extract_strided_slice %58 {offsets = [0, 256], sizes = [16, 64], strides = [1, 1]} : vector<16x320xf32> to vector<16x64xf32>
    %64 = arith.mulf %59, %32 : vector<16x64xf32>
    %65 = arith.mulf %60, %33 : vector<16x64xf32>
    %66 = arith.addf %64, %65 : vector<16x64xf32>
    %67 = arith.truncf %66 : vector<16x64xf32> to vector<16x64xbf16>
    %68 = arith.mulf %61, %32 : vector<16x64xf32>
    %69 = arith.mulf %62, %33 : vector<16x64xf32>
    %70 = arith.addf %68, %69 : vector<16x64xf32>
    %71 = tpu.transpose %70, [1, 0] : vector<16x64xf32> -> vector<64x16xf32>
    %72 = arith.truncf %71 : vector<64x16xf32> to vector<64x16xbf16>
    %73 = arith.truncf %63 : vector<16x64xf32> to vector<16x64xbf16>
    %74 = vector.extract_strided_slice %67 {offsets = [0, 0], sizes = [16, 16], strides = [1, 1]} : vector<16x64xbf16> to vector<16x16xbf16>
    %75 = vector.extract_strided_slice %72 {offsets = [0, 0], sizes = [16, 16], strides = [1, 1]} : vector<64x16xbf16> to vector<16x16xbf16>
    %cst_21 = arith.constant dense<0.000000e+00> : vector<16x16xf32>
    %76 = tpu.matmul %74, %75, %cst_21 {dimension_numbers = #tpu.dot_dimension_numbers<[1], [0], [0], [1], [0, 0, 1, 1], [], []>} : vector<16x16xbf16>, vector<16x16xbf16>, vector<16x16xf32> -> vector<16x16xf32>
    %77 = arith.addf %76, %27 : vector<16x16xf32>
    %cst_22 = arith.constant dense<0xFF800000> : vector<16xf32>
    %78 = vector.multi_reduction <maximumf>, %77, %cst_22 [1] : vector<16x16xf32> to vector<16xf32>
    %79 = vector.shape_cast %78 : vector<16xf32> to vector<16x1xf32>
    %80 = vector.broadcast %79 : vector<16x1xf32> to vector<16x16xf32>
    %81 = arith.subf %77, %80 : vector<16x16xf32>
    %82 = math.exp %81 : vector<16x16xf32>
    %cst_23 = arith.constant dense<0.000000e+00> : vector<16xf32>
    %83 = vector.multi_reduction <add>, %82, %cst_23 [1] : vector<16x16xf32> to vector<16xf32>
    %84 = vector.shape_cast %83 : vector<16xf32> to vector<16x1xf32>
    %85 = tpu.reciprocal %84 {approx = true} : vector<16x1xf32> -> vector<16x1xf32>
    %86 = arith.truncf %82 : vector<16x16xf32> to vector<16x16xbf16>
    %87 = vector.extract_strided_slice %73 {offsets = [0, 0], sizes = [16, 16], strides = [1, 1]} : vector<16x64xbf16> to vector<16x16xbf16>
    %cst_24 = arith.constant dense<0.000000e+00> : vector<16x16xf32>
    %88 = tpu.matmul %86, %87, %cst_24 {dimension_numbers = #tpu.dot_dimension_numbers<[1], [0], [0], [1], [0, 0, 1, 1], [], []>} : vector<16x16xbf16>, vector<16x16xbf16>, vector<16x16xf32> -> vector<16x16xf32>
    %89 = vector.broadcast %85 : vector<16x1xf32> to vector<16x16xf32>
    %90 = arith.mulf %88, %89 : vector<16x16xf32>
    %91 = arith.truncf %90 : vector<16x16xf32> to vector<16x16xbf16>
    %c0_25 = arith.constant 0 : index
    %c0_26 = arith.constant 0 : index
    %92 = vector.load %arg9[%c0_25, %c0_26] : memref<16x64xbf16, #tpu.memory_space<vmem>>, vector<16x16xbf16>
    tpu.vector_store %arg9[%c0_25, %c0_26], %91 {strides = array<i32>} : memref<16x64xbf16, #tpu.memory_space<vmem>>, vector<16x16xbf16>,
    %93 = vector.extract_strided_slice %67 {offsets = [0, 16], sizes = [16, 16], strides = [1, 1]} : vector<16x64xbf16> to vector<16x16xbf16>
    %94 = vector.extract_strided_slice %72 {offsets = [16, 0], sizes = [16, 16], strides = [1, 1]} : vector<64x16xbf16> to vector<16x16xbf16>
    %cst_27 = arith.constant dense<0.000000e+00> : vector<16x16xf32>
    %95 = tpu.matmul %93, %94, %cst_27 {dimension_numbers = #tpu.dot_dimension_numbers<[1], [0], [0], [1], [0, 0, 1, 1], [], []>} : vector<16x16xbf16>, vector<16x16xbf16>, vector<16x16xf32> -> vector<16x16xf32>
    %96 = arith.addf %95, %27 : vector<16x16xf32>
    %cst_28 = arith.constant dense<0xFF800000> : vector<16xf32>
    %97 = vector.multi_reduction <maximumf>, %96, %cst_28 [1] : vector<16x16xf32> to vector<16xf32>
    %98 = vector.shape_cast %97 : vector<16xf32> to vector<16x1xf32>
    %99 = vector.broadcast %98 : vector<16x1xf32> to vector<16x16xf32>
    %100 = arith.subf %96, %99 : vector<16x16xf32>
    %101 = math.exp %100 : vector<16x16xf32>
    %cst_29 = arith.constant dense<0.000000e+00> : vector<16xf32>
    %102 = vector.multi_reduction <add>, %101, %cst_29 [1] : vector<16x16xf32> to vector<16xf32>
    %103 = vector.shape_cast %102 : vector<16xf32> to vector<16x1xf32>
    %104 = tpu.reciprocal %103 {approx = true} : vector<16x1xf32> -> vector<16x1xf32>
    %105 = arith.truncf %101 : vector<16x16xf32> to vector<16x16xbf16>
    %106 = vector.extract_strided_slice %73 {offsets = [0, 16], sizes = [16, 16], strides = [1, 1]} : vector<16x64xbf16> to vector<16x16xbf16>
    %cst_30 = arith.constant dense<0.000000e+00> : vector<16x16xf32>
    %107 = tpu.matmul %105, %106, %cst_30 {dimension_numbers = #tpu.dot_dimension_numbers<[1], [0], [0], [1], [0, 0, 1, 1], [], []>} : vector<16x16xbf16>, vector<16x16xbf16>, vector<16x16xf32> -> vector<16x16xf32>
    %108 = vector.broadcast %104 : vector<16x1xf32> to vector<16x16xf32>
    %109 = arith.mulf %107, %108 : vector<16x16xf32>
    %110 = arith.truncf %109 : vector<16x16xf32> to vector<16x16xbf16>
    %c0_31 = arith.constant 0 : index
    %c16 = arith.constant 16 : index
    %111 = vector.load %arg9[%c0_31, %c16] : memref<16x64xbf16, #tpu.memory_space<vmem>>, vector<16x16xbf16>
    tpu.vector_store %arg9[%c0_31, %c16], %110 {strides = array<i32>} : memref<16x64xbf16, #tpu.memory_space<vmem>>, vector<16x16xbf16>,
    %112 = vector.extract_strided_slice %67 {offsets = [0, 32], sizes = [16, 16], strides = [1, 1]} : vector<16x64xbf16> to vector<16x16xbf16>
    %113 = vector.extract_strided_slice %72 {offsets = [32, 0], sizes = [16, 16], strides = [1, 1]} : vector<64x16xbf16> to vector<16x16xbf16>
    %cst_32 = arith.constant dense<0.000000e+00> : vector<16x16xf32>
    %114 = tpu.matmul %112, %113, %cst_32 {dimension_numbers = #tpu.dot_dimension_numbers<[1], [0], [0], [1], [0, 0, 1, 1], [], []>} : vector<16x16xbf16>, vector<16x16xbf16>, vector<16x16xf32> -> vector<16x16xf32>
    %115 = arith.addf %114, %27 : vector<16x16xf32>
    %cst_33 = arith.constant dense<0xFF800000> : vector<16xf32>
    %116 = vector.multi_reduction <maximumf>, %115, %cst_33 [1] : vector<16x16xf32> to vector<16xf32>
    %117 = vector.shape_cast %116 : vector<16xf32> to vector<16x1xf32>
    %118 = vector.broadcast %117 : vector<16x1xf32> to vector<16x16xf32>
    %119 = arith.subf %115, %118 : vector<16x16xf32>
    %120 = math.exp %119 : vector<16x16xf32>
    %cst_34 = arith.constant dense<0.000000e+00> : vector<16xf32>
    %121 = vector.multi_reduction <add>, %120, %cst_34 [1] : vector<16x16xf32> to vector<16xf32>
    %122 = vector.shape_cast %121 : vector<16xf32> to vector<16x1xf32>
    %123 = tpu.reciprocal %122 {approx = true} : vector<16x1xf32> -> vector<16x1xf32>
    %124 = arith.truncf %120 : vector<16x16xf32> to vector<16x16xbf16>
    %125 = vector.extract_strided_slice %73 {offsets = [0, 32], sizes = [16, 16], strides = [1, 1]} : vector<16x64xbf16> to vector<16x16xbf16>
    %cst_35 = arith.constant dense<0.000000e+00> : vector<16x16xf32>
    %126 = tpu.matmul %124, %125, %cst_35 {dimension_numbers = #tpu.dot_dimension_numbers<[1], [0], [0], [1], [0, 0, 1, 1], [], []>} : vector<16x16xbf16>, vector<16x16xbf16>, vector<16x16xf32> -> vector<16x16xf32>
    %127 = vector.broadcast %123 : vector<16x1xf32> to vector<16x16xf32>
    %128 = arith.mulf %126, %127 : vector<16x16xf32>
    %129 = arith.truncf %128 : vector<16x16xf32> to vector<16x16xbf16>
    %c0_36 = arith.constant 0 : index
    %c32 = arith.constant 32 : index
    %130 = vector.load %arg9[%c0_36, %c32] : memref<16x64xbf16, #tpu.memory_space<vmem>>, vector<16x16xbf16>
    tpu.vector_store %arg9[%c0_36, %c32], %129 {strides = array<i32>} : memref<16x64xbf16, #tpu.memory_space<vmem>>, vector<16x16xbf16>,
    %131 = vector.extract_strided_slice %67 {offsets = [0, 48], sizes = [16, 16], strides = [1, 1]} : vector<16x64xbf16> to vector<16x16xbf16>
    %132 = vector.extract_strided_slice %72 {offsets = [48, 0], sizes = [16, 16], strides = [1, 1]} : vector<64x16xbf16> to vector<16x16xbf16>
    %cst_37 = arith.constant dense<0.000000e+00> : vector<16x16xf32>
    %133 = tpu.matmul %131, %132, %cst_37 {dimension_numbers = #tpu.dot_dimension_numbers<[1], [0], [0], [1], [0, 0, 1, 1], [], []>} : vector<16x16xbf16>, vector<16x16xbf16>, vector<16x16xf32> -> vector<16x16xf32>
    %134 = arith.addf %133, %27 : vector<16x16xf32>
    %cst_38 = arith.constant dense<0xFF800000> : vector<16xf32>
    %135 = vector.multi_reduction <maximumf>, %134, %cst_38 [1] : vector<16x16xf32> to vector<16xf32>
    %136 = vector.shape_cast %135 : vector<16xf32> to vector<16x1xf32>
    %137 = vector.broadcast %136 : vector<16x1xf32> to vector<16x16xf32>
    %138 = arith.subf %134, %137 : vector<16x16xf32>
    %139 = math.exp %138 : vector<16x16xf32>
    %cst_39 = arith.constant dense<0.000000e+00> : vector<16xf32>
    %140 = vector.multi_reduction <add>, %139, %cst_39 [1] : vector<16x16xf32> to vector<16xf32>
    %141 = vector.shape_cast %140 : vector<16xf32> to vector<16x1xf32>
    %142 = tpu.reciprocal %141 {approx = true} : vector<16x1xf32> -> vector<16x1xf32>
    %143 = arith.truncf %139 : vector<16x16xf32> to vector<16x16xbf16>
    %144 = vector.extract_strided_slice %73 {offsets = [0, 48], sizes = [16, 16], strides = [1, 1]} : vector<16x64xbf16> to vector<16x16xbf16>
    %cst_40 = arith.constant dense<0.000000e+00> : vector<16x16xf32>
    %145 = tpu.matmul %143, %144, %cst_40 {dimension_numbers = #tpu.dot_dimension_numbers<[1], [0], [0], [1], [0, 0, 1, 1], [], []>} : vector<16x16xbf16>, vector<16x16xbf16>, vector<16x16xf32> -> vector<16x16xf32>
    %146 = vector.broadcast %142 : vector<16x1xf32> to vector<16x16xf32>
    %147 = arith.mulf %145, %146 : vector<16x16xf32>
    %148 = arith.truncf %147 : vector<16x16xf32> to vector<16x16xbf16>
    %c0_41 = arith.constant 0 : index
    %c48 = arith.constant 48 : index
    %149 = vector.load %arg9[%c0_41, %c48] : memref<16x64xbf16, #tpu.memory_space<vmem>>, vector<16x16xbf16>
    tpu.vector_store %arg9[%c0_41, %c48], %148 {strides = array<i32>} : memref<16x64xbf16, #tpu.memory_space<vmem>>, vector<16x16xbf16>,
    %c0_42 = arith.constant 0 : index
    %c0_43 = arith.constant 0 : index
    %150 = vector.load %arg9[%c0_42, %c0_43] : memref<16x64xbf16, #tpu.memory_space<vmem>>, vector<16x64xbf16>
    %c0_44 = arith.constant 0 : index
    %c0_45 = arith.constant 0 : index
    %151 = vector.load %arg3[%c0_44, %c0_45] : memref<64x32xbf16, #tpu.memory_space<vmem>>, vector<64x32xbf16>
    %cst_46 = arith.constant dense<0.000000e+00> : vector<16x32xf32>
    %152 = tpu.matmul %150, %151, %cst_46 {dimension_numbers = #tpu.dot_dimension_numbers<[1], [0], [0], [1], [0, 0, 1, 1], [], []>} : vector<16x64xbf16>, vector<64x32xbf16>, vector<16x32xf32> -> vector<16x32xf32>
    %153 = arith.addf %0, %152 : vector<16x32xf32>
    %cst_47 = arith.constant dense<0.000000e+00> : vector<16xf32>
    %154 = vector.multi_reduction <add>, %153, %cst_47 [1] : vector<16x32xf32> to vector<16xf32>
    %155 = vector.shape_cast %154 : vector<16xf32> to vector<16x1xf32>
    %cst_48 = arith.constant 3.200000e+01 : f32
    %156 = vector.broadcast %cst_48 : f32 to vector<16x1xf32>
    %157 = arith.divf %155, %156 : vector<16x1xf32>
    %158 = vector.broadcast %157 : vector<16x1xf32> to vector<16x32xf32>
    %159 = arith.subf %153, %158 : vector<16x32xf32>
    %160 = arith.mulf %159, %159 : vector<16x32xf32>
    %cst_49 = arith.constant dense<0.000000e+00> : vector<16xf32>
    %161 = vector.multi_reduction <add>, %160, %cst_49 [1] : vector<16x32xf32> to vector<16xf32>
    %162 = vector.shape_cast %161 : vector<16xf32> to vector<16x1xf32>
    %cst_50 = arith.constant 3.200000e+01 : f32
    %163 = vector.broadcast %cst_50 : f32 to vector<16x1xf32>
    %164 = arith.divf %162, %163 : vector<16x1xf32>
    %165 = vector.broadcast %157 : vector<16x1xf32> to vector<16x32xf32>
    %166 = arith.subf %153, %165 : vector<16x32xf32>
    %cst_51 = arith.constant 9.99999974E-6 : f32
    %167 = vector.broadcast %cst_51 : f32 to vector<16x1xf32>
    %168 = arith.addf %164, %167 : vector<16x1xf32>
    %169 = math.rsqrt %168 : vector<16x1xf32>
    %170 = vector.broadcast %169 : vector<16x1xf32> to vector<16x32xf32>
    %171 = arith.mulf %166, %170 : vector<16x32xf32>
    %172 = vector.broadcast %4 : vector<1x32xf32> to vector<16x32xf32>
    %173 = arith.mulf %171, %172 : vector<16x32xf32>
    %174 = vector.broadcast %5 : vector<1x32xf32> to vector<16x32xf32>
    %175 = arith.addf %173, %174 : vector<16x32xf32>
    %176 = arith.truncf %175 : vector<16x32xf32> to vector<16x32xbf16>
    %c0_52 = arith.constant 0 : index
    %c0_53 = arith.constant 0 : index
    %177 = vector.load %arg4[%c0_52, %c0_53] : memref<32x64xbf16, #tpu.memory_space<vmem>>, vector<32x64xbf16>
    %cst_54 = arith.constant dense<0.000000e+00> : vector<16x64xf32>
    %178 = tpu.matmul %176, %177, %cst_54 {dimension_numbers = #tpu.dot_dimension_numbers<[1], [0], [0], [1], [0, 0, 1, 1], [], []>} : vector<16x32xbf16>, vector<32x64xbf16>, vector<16x64xf32> -> vector<16x64xf32>
    %179 = vector.broadcast %7 : vector<1x64xf32> to vector<16x64xf32>
    %180 = arith.addf %178, %179 : vector<16x64xf32>
    %cst_55 = arith.constant 0.707106769 : f32
    %181 = vector.broadcast %cst_55 : f32 to vector<16x64xf32>
    %182 = arith.mulf %180, %181 : vector<16x64xf32>
    %183 = math.absf %182 : vector<16x64xf32>
    %cst_56 = arith.constant 0.327591091 : f32
    %184 = vector.broadcast %cst_56 : f32 to vector<16x64xf32>
    %185 = arith.mulf %184, %183 : vector<16x64xf32>
    %cst_57 = arith.constant 1.000000e+00 : f32
    %186 = vector.broadcast %cst_57 : f32 to vector<16x64xf32>
    %187 = arith.addf %186, %185 : vector<16x64xf32>
    %cst_58 = arith.constant 1.000000e+00 : f32
    %188 = vector.broadcast %cst_58 : f32 to vector<16x64xf32>
    %189 = arith.divf %188, %187 : vector<16x64xf32>
    %cst_59 = arith.constant 1.06140542 : f32
    %190 = vector.broadcast %cst_59 : f32 to vector<16x64xf32>
    %191 = arith.mulf %189, %190 : vector<16x64xf32>
    %cst_60 = arith.constant -1.45315206 : f32
    %192 = vector.broadcast %cst_60 : f32 to vector<16x64xf32>
    %193 = arith.addf %192, %191 : vector<16x64xf32>
    %194 = arith.mulf %189, %193 : vector<16x64xf32>
    %cst_61 = arith.constant 1.42141378 : f32
    %195 = vector.broadcast %cst_61 : f32 to vector<16x64xf32>
    %196 = arith.addf %195, %194 : vector<16x64xf32>
    %197 = arith.mulf %189, %196 : vector<16x64xf32>
    %cst_62 = arith.constant -0.284496725 : f32
    %198 = vector.broadcast %cst_62 : f32 to vector<16x64xf32>
    %199 = arith.addf %198, %197 : vector<16x64xf32>
    %200 = arith.mulf %189, %199 : vector<16x64xf32>
    %cst_63 = arith.constant 0.254829586 : f32
    %201 = vector.broadcast %cst_63 : f32 to vector<16x64xf32>
    %202 = arith.addf %201, %200 : vector<16x64xf32>
    %203 = arith.mulf %189, %202 : vector<16x64xf32>
    %cst_64 = arith.constant 0.000000e+00 : f32
    %204 = vector.broadcast %cst_64 : f32 to vector<16x64xf32>
    %205 = arith.subf %204, %183 : vector<16x64xf32>
    %206 = arith.mulf %205, %183 : vector<16x64xf32>
    %207 = math.exp %206 : vector<16x64xf32>
    %208 = arith.mulf %203, %207 : vector<16x64xf32>
    %cst_65 = arith.constant 1.000000e+00 : f32
    %209 = vector.broadcast %cst_65 : f32 to vector<16x64xf32>
    %210 = arith.subf %209, %208 : vector<16x64xf32>
    %cst_66 = arith.constant 0.000000e+00 : f32
    %211 = vector.broadcast %cst_66 : f32 to vector<16x64xf32>
    %212 = arith.cmpf olt, %182, %211 : vector<16x64xf32>
    %cst_67 = arith.constant 0.000000e+00 : f32
    %213 = vector.broadcast %cst_67 : f32 to vector<16x64xf32>
    %214 = arith.subf %213, %210 : vector<16x64xf32>
    %215 = arith.select %212, %214, %210 : vector<16x64xi1>, vector<16x64xf32>
    %cst_68 = arith.constant 5.000000e-01 : f32
    %216 = vector.broadcast %cst_68 : f32 to vector<16x64xf32>
    %217 = arith.mulf %216, %180 : vector<16x64xf32>
    %cst_69 = arith.constant 1.000000e+00 : f32
    %218 = vector.broadcast %cst_69 : f32 to vector<16x64xf32>
    %219 = arith.addf %218, %215 : vector<16x64xf32>
    %220 = arith.mulf %217, %219 : vector<16x64xf32>
    %221 = arith.truncf %220 : vector<16x64xf32> to vector<16x64xbf16>
    %c0_70 = arith.constant 0 : index
    %c0_71 = arith.constant 0 : index
    %222 = vector.load %arg5[%c0_70, %c0_71] : memref<64x32xbf16, #tpu.memory_space<vmem>>, vector<64x32xbf16>
    %cst_72 = arith.constant dense<0.000000e+00> : vector<16x32xf32>
    %223 = tpu.matmul %221, %222, %cst_72 {dimension_numbers = #tpu.dot_dimension_numbers<[1], [0], [0], [1], [0, 0, 1, 1], [], []>} : vector<16x64xbf16>, vector<64x32xbf16>, vector<16x32xf32> -> vector<16x32xf32>
    %224 = vector.broadcast %6 : vector<1x32xf32> to vector<16x32xf32>
    %225 = arith.addf %223, %224 : vector<16x32xf32>
    %226 = arith.addf %153, %225 : vector<16x32xf32>
    %c0_73 = arith.constant 0 : index
    %c0_74 = arith.constant 0 : index
    %227 = vector.load %arg8[%c0_73, %c0_74] : memref<16x32xf32, #tpu.memory_space<vmem>>, vector<16x32xf32>
    tpu.vector_store %arg8[%c0_73, %c0_74], %226 {strides = array<i32>} : memref<16x32xf32, #tpu.memory_space<vmem>>, vector<16x32xf32>,
    return
  }
  func.func @transform_0(%arg0: i32) -> (i32, i32) {
    %c0_i32 = arith.constant 0 : i32
    %c0_i32_0 = arith.constant 0 : i32
    return %arg0, %c0_i32 : i32, i32
  }
  func.func @transform_1(%arg0: i32) -> (i32, i32) {
    %c0_i32 = arith.constant 0 : i32
    %c0_i32_0 = arith.constant 0 : i32
    %c0_i32_1 = arith.constant 0 : i32
    return %c0_i32, %c0_i32_0 : i32, i32
  }
  func.func @transform_2(%arg0: i32) -> (i32, i32) {
    %c0_i32 = arith.constant 0 : i32
    %c0_i32_0 = arith.constant 0 : i32
    %c0_i32_1 = arith.constant 0 : i32
    return %c0_i32, %c0_i32_0 : i32, i32
  }
  func.func @transform_3(%arg0: i32) -> (i32, i32) {
    %c0_i32 = arith.constant 0 : i32
    %c0_i32_0 = arith.constant 0 : i32
    %c0_i32_1 = arith.constant 0 : i32
    return %c0_i32, %c0_i32_0 : i32, i32
  }
  func.func @transform_4(%arg0: i32) -> (i32, i32) {
    %c0_i32 = arith.constant 0 : i32
    %c0_i32_0 = arith.constant 0 : i32
    %c0_i32_1 = arith.constant 0 : i32
    return %c0_i32, %c0_i32_0 : i32, i32
  }
  func.func @transform_5(%arg0: i32) -> (i32, i32) {
    %c0_i32 = arith.constant 0 : i32
    %c0_i32_0 = arith.constant 0 : i32
    %c0_i32_1 = arith.constant 0 : i32
    return %c0_i32, %c0_i32_0 : i32, i32
  }
  func.func @transform_6(%arg0: i32) -> (i32, i32, i32) {
    %c0_i32 = arith.constant 0 : i32
    %c0_i32_0 = arith.constant 0 : i32
    %c0_i32_1 = arith.constant 0 : i32
    %c0_i32_2 = arith.constant 0 : i32
    return %c0_i32, %c0_i32_0, %c0_i32_1 : i32, i32, i32
  }
  func.func @transform_7(%arg0: i32) -> (i32, i32) {
    %c0_i32 = arith.constant 0 : i32
    %c0_i32_0 = arith.constant 0 : i32
    return %arg0, %c0_i32 : i32, i32
  }
}

</mosaic_0001>

<llo_original>
// kernel: tpu_custom_call.1
$region0: #{tpu_custom_call.1}
  #allocation0 [shape = 'u32[]', space=smem, size = 0x4, offset = 0x4, fixed_abs, tag = 'smem constant byte address 0x4 - core index']
  #allocation1 [shape = 'u32[144,128]{1,0:T(1,128)}', space=vmem, size = 0x12000, scoped, tag = 'internal scratch']
  #allocation2 [shape = 'bf16[16,64]{1,0:T(16,128)(2,1)}', space=vmem, size = 0x1000, scoped, tag = 'scratch operand']
  %s0 = inlined_call_operand.vmem [shape: f32[16,32], index: 0, kind: input, shape index: {}]
  %s1 = inlined_call_operand.vmem [shape: bf16[32,320], index: 1, kind: input, shape index: {}]
  %s2 = inlined_call_operand.vmem [shape: bf16[64,32], index: 2, kind: input, shape index: {}]
  %s3 = inlined_call_operand.vmem [shape: bf16[32,64], index: 3, kind: input, shape index: {}]
  %s4 = inlined_call_operand.vmem [shape: bf16[64,32], index: 4, kind: input, shape index: {}]
  %s5 = inlined_call_operand.hbm [shape: f32[8,64], index: 5, kind: input, shape index: {}]
  %s6 = inlined_call_operand.vmem [shape: f32[2,8,64], index: 6, kind: input, shape index: {}]
  %s7 = inlined_call_operand.hbm [shape: f32[16,32], index: 7, kind: output, shape index: {}]
  %s8 = sld [smem:[#allocation0]]
  $region42: #{tpu_custom_call.1} parent=0
    _
  %s10 = ssub.s32 1, %s8
  %s11 = scalar_select 0, %s10, %s8
  $region1: #{tpu_custom_call.1} parent=0
    #allocation3 [shape = 'u8[4096]{0}', space=vmem, size = 0x1000, scoped, tag = 'input window, operand 5, single buffered']
    #allocation4 [shape = 's32[1]{0}', space=sflag, size = 0x4, scoped, tag = 'scoped memory for tpu_custom_call.1']
    #allocation5 [shape = 's32[1]{0}', space=sflag, size = 0x4, scoped, tag = 'scoped memory for tpu_custom_call.1']
    #allocation6 [shape = 'u8[8192]{0}', space=vmem, size = 0x2000, scoped, tag = 'output window, operand 0, single buffered']
    %12 = vsyncpa [#allocation4], 0
    %13 = vsyncpa [#allocation5], 0
    // Predicated region
    $region2: #{tpu_custom_call.1} parent=1 // pred_check
      _
    $region3: #{tpu_custom_call.1} parent=1 // pred_check_branch
      %15 = sbr.rel (0) target = $region5
    $region4: #{tpu_custom_call.1} parent=1 // pred_region
      _
    $region5: #{tpu_custom_call.1} parent=1 // pred_fallthru
      _
    // Predicated region
    $region6: #{tpu_custom_call.1} parent=1 // pred_check
      _
    $region7: #{tpu_custom_call.1} parent=1 // pred_check_branch
      %17 = sbr.rel (0) target = $region9
    $region8: #{tpu_custom_call.1} parent=1 // pred_region
      _
    $region9: #{tpu_custom_call.1} parent=1 // pred_fallthru
      _
    // Predicated region
    $region10: #{tpu_custom_call.1} parent=1 // pred_check
      _
    $region11: #{tpu_custom_call.1} parent=1 // pred_check_branch
      %19 = sbr.rel (0) target = $region13
    $region12: #{tpu_custom_call.1} parent=1 // pred_region
      _
    $region13: #{tpu_custom_call.1} parent=1 // pred_fallthru
      _
    // Predicated region
    $region14: #{tpu_custom_call.1} parent=1 // pred_check
      _
    $region15: #{tpu_custom_call.1} parent=1 // pred_check_branch
      %21 = sbr.rel (0) target = $region17
    $region16: #{tpu_custom_call.1} parent=1 // pred_region
      _
    $region17: #{tpu_custom_call.1} parent=1 // pred_fallthru
      _
    // Predicated region
    $region18: #{tpu_custom_call.1} parent=1 // pred_check
      _
    $region19: #{tpu_custom_call.1} parent=1 // pred_check_branch
      %23 = sbr.rel (0) target = $region21
    $region20: #{tpu_custom_call.1} parent=1 // pred_region
      _
    $region21: #{tpu_custom_call.1} parent=1 // pred_fallthru
      _
    // Predicated region
    $region22: #{tpu_custom_call.1} parent=1 // pred_check
      _
    $region23: #{tpu_custom_call.1} parent=1 // pred_check_branch
      %25 = sbr.rel (0) target = $region25
    $region24: #{tpu_custom_call.1} parent=1 // pred_region
      %s27 = ssub.s32 128, 128
      %28 = vsyncadd [#allocation4], %s27
      %s30 = sshll.u32 [#allocation3], 4
      %s31 = int_to_ptr.vmem [resolvable:$true] %s30
      %33 = dma.hbm_to_vmem [thread:$0]  %s5, 128, %s31, [#allocation4]
    $region25: #{tpu_custom_call.1} parent=1 // pred_fallthru
      _
    // Predicated region
    $region26: #{tpu_custom_call.1} parent=1 // pred_check
      _
    $region27: #{tpu_custom_call.1} parent=1 // pred_check_branch
      %35 = sbr.rel (0) target = $region29
    $region28: #{tpu_custom_call.1} parent=1 // pred_region
      _
    $region29: #{tpu_custom_call.1} parent=1 // pred_fallthru
      _
    // Predicated region
    $region30: #{tpu_custom_call.1} parent=1 // pred_check
      _
    $region31: #{tpu_custom_call.1} parent=1 // pred_check_branch
      %37 = sbr.rel (0) target = $region33
    $region32: #{tpu_custom_call.1} parent=1 // pred_region
      %38 = dma.done [#allocation4], 128
    $region33: #{tpu_custom_call.1} parent=1 // pred_fallthru
      _
    %v40 = vld [vmem:[%s0] sm:$0xff]
    %v41 = vld [vmem:[%s0 + $0x8] sm:$0xff]
    %v42 = vld [vmem:[#allocation3] sm:$0xff]
    %v43 = vlaneseq
    %v44 = vshrl.u32 %v43, 7
    %v45 = vadd.s32 %v44, 8
    %v46 = vlaneseq
    %v47 = vand.u32 %v46, 127
    %v48 = vcvt.s32.f32 %v44
    %v49 = vcvt.s32.f32 %v45
    %v50 = vadd.f32 %v48, 0.5
    %v51 = vadd.f32 %v49, 0.5
    %v52 = vmul.f32 %v50, 0.125
    %v53 = vmul.f32 %v51, 0.125
    %v54 = vfloor.f32 %v52
    %v55 = vfloor.f32 %v53
    %v56 = vcvt.s32.f32 %v47
    %v57 = vadd.f32 %v56, 0.5
    %v58 = vmul.f32 %v57, 0.125
    %v59 = vfloor.f32 %v58
    %vm60 = vcmp.eq.f32.partialorder %v54, %v59
    %vm61 = vcmp.eq.f32.partialorder %v55, %v59
    %vm62 = vcmp.le.s32.totalorder %v47, %v44
    %vm63 = vcmp.le.s32.totalorder %v47, %v45
    %vm64 = vmand %vm60, %vm62
    %vm65 = vmand %vm61, %vm63
    %v66 = vsel %vm64, 0.0, -1e+30
    %v67 = vsel %vm65, 0.0, -1e+30
    %v68 = vld [vmem:[%s6] sm:$0xff]
    %s69 = scalar_lea.vmem %s6, 8
    %v70 = vld [vmem:[%s69] sm:$0xff]
    %vm71 = vcmask 261120
    %v72 = vsel %vm71, %v40, 0.0
    %73 = vadd.xlane.f32.xlu0 %v72
    %v74 = vpop.xlane.xlu0 %73
    %v75 = vsel %vm71, %v41, 0.0
    %76 = vadd.xlane.f32.xlu0 %v75
    %v77 = vpop.xlane.xlu0 %76
    %v78 = vrcp.pop 32.0
    %v79 = vmul.f32 %v74, %v78
    %v80 = vmul.f32 %v77, %v78
    %v81 = vsub.f32 %v40, %v79
    %v82 = vsub.f32 %v41, %v80
    %v83 = vmul.f32 %v81, %v81
    %v84 = vmul.f32 %v82, %v82
    %v85 = vsel %vm71, %v83, 0.0
    %86 = vadd.xlane.f32.xlu0 %v85
    %v87 = vpop.xlane.xlu0 %86
    %v88 = vsel %vm71, %v84, 0.0
    %89 = vadd.xlane.f32.xlu0 %v88
    %v90 = vpop.xlane.xlu0 %89
    %v91 = vmul.f32 %v87, %v78
    %v92 = vmul.f32 %v90, %v78
    %v93 = vadd.f32 %v91, 1e-05
    %v94 = vadd.f32 %v92, 1e-05
    %v95 = vrsqrt.pop %v93
    %v96 = vrsqrt.pop %v94
    %v97 = vmul.f32 %v81, %v95
    %v98 = vmul.f32 %v82, %v96
    %v99 = vlaneseq
    %v100 = vshrl.u32 %v99, 7
    %v101 = vsub.s32 0, %v100
    %v102 = vrot.slane %v42, %v101
    %v103 = vmul.f32 %v97, %v102
    %v104 = vmul.f32 %v98, %v102
    %v105 = vlaneseq
    %v106 = vshrl.u32 %v105, 7
    %v107 = vsub.s32 1, %v106
    %v108 = vrot.slane %v42, %v107
    %v109 = vadd.f32 %v103, %v108
    %v110 = vadd.f32 %v104, %v108
    %v111 = vpack.c.bf16 %v110, %v109
    %v112 = vld [vmem:[%s1] sm:$0xff]
    %v113 = vld [vmem:[%s1 + $0x8] sm:$0xf]
    %v114 = vld [vmem:[%s1 + $0xc] sm:$0xff]
    %v115 = vld [vmem:[%s1 + $0x14] sm:$0xf]
    %v116 = vld [vmem:[%s1 + $0x18] sm:$0xff]
    %v117 = vld [vmem:[%s1 + $0x20] sm:$0xf]
    %v118 = vld [vmem:[%s1 + $0x24] sm:$0xff]
    %v119 = vld [vmem:[%s1 + $0x2c] sm:$0xf]
    %v128 = vunpack.c.l.b16 %v112
    %v129 = vunpack.c.h.b16 %v112
    %v130 = vunpack.c.l.b16 %v113
    %v131 = vunpack.c.l.b16 %v114
    %v132 = vunpack.c.h.b16 %v114
    %v133 = vunpack.c.l.b16 %v115
    %v134 = vunpack.c.l.b16 %v116
    %v135 = vunpack.c.h.b16 %v116
    %v136 = vunpack.c.l.b16 %v117
    %v137 = vunpack.c.l.b16 %v118
    %v138 = vunpack.c.h.b16 %v118
    %v139 = vunpack.c.l.b16 %v119
    %v140 = vpack.c.b16 %v131, %v128
    %v141 = vpack.c.b16 %v132, %v129
    %v142 = vpack.c.b16 %v133, %v130
    %v143 = vpack.c.b16 %v137, %v134
    %v144 = vpack.c.b16 %v138, %v135
    %v145 = vpack.c.b16 %v139, %v136
    %v153 = vsel %vm71, %v111, 0
    %155 = vmatprep.subr.bf16.mxu0 %v141
    %156 = vmatpush1.bf16.msra.mxu0 %v140
    %157 = vmatprep.subr.bf16.mxu0 %v144
    %158 = vmatpush1.bf16.msra.mxu0 %v143
    %159 = vmatprep.subr.bf16.mxu0 0
    %160 = vmatpush1.bf16.msra.mxu0 0
    %161 = vmatprep.subr.bf16.mxu0 0
    %162 = vmatpush1.bf16.msra.mxu0 0
    %163 = vmatprep.subr.bf16.mxu0 0
    %164 = vmatpush1.bf16.msra.mxu0 0
    %165 = vmatprep.subr.bf16.mxu0 0
    %166 = vmatpush1.bf16.msra.mxu0 0
    %167 = vmatprep.subr.bf16.mxu0 0
    %168 = vmatpush1.bf16.msra.mxu0 0
    %169 = vmatprep.subr.bf16.mxu0 0
    %170 = vmatpush1.bf16.msra.mxu0 0
    %171 = vmatprep.subr.bf16.mxu0 0
    %172 = vmatpush1.bf16.msra.mxu0 0
    %173 = vmatprep.subr.bf16.mxu0 0
    %174 = vmatpush1.bf16.msra.mxu0 0
    %175 = vmatprep.subr.bf16.mxu0 0
    %176 = vmatpush1.bf16.msra.mxu0 0
    %177 = vmatprep.subr.bf16.mxu0 0
    %178 = vmatpush1.bf16.msra.mxu0 0
    %179 = vmatprep.subr.bf16.mxu0 0
    %180 = vmatpush1.bf16.msra.mxu0 0
    %181 = vmatprep.subr.bf16.mxu0 0
    %182 = vmatpush1.bf16.msra.mxu0 0
    %183 = vmatprep.subr.bf16.mxu0 0
    %184 = vmatpush1.bf16.msra.mxu0 0
    %185 = vmatprep.subr.bf16.mxu0 0
    %186 = vmatpush1.bf16.msra.mxu0 0
    %187 = vmatprep.mubr.bf16.mxu0 0
    %188 = vmatmul.mubr.bf16.gmra.mrb[0].mxu0 %v153
    %v189 = vpop.f32.mrb[0].mxu0
    %v190 = vadd.f32 0.0, %v189
    %v191 = vpop.f32.mrb[0].mxu0
    %v192 = vadd.f32 0.0, %v191
    %v193 = vpop.f32.mrb[0].mxu0
    %v194 = vadd.f32 0.0, %v193
    %v195 = vpop.f32.mrb[0].mxu0
    %v196 = vadd.f32 0.0, %v195
    %197 = vdwg.mxu0
    %198 = vmatprep.subr.bf16.mxu0 0
    %199 = vmatpush1.bf16.msra.mxu0 %v142
    %200 = vmatprep.subr.bf16.mxu0 0
    %201 = vmatpush1.bf16.msra.mxu0 %v145
    %202 = vmatprep.subr.bf16.mxu0 0
    %203 = vmatpush1.bf16.msra.mxu0 0
    %204 = vmatprep.subr.bf16.mxu0 0
    %205 = vmatpush1.bf16.msra.mxu0 0
    %206 = vmatprep.subr.bf16.mxu0 0
    %207 = vmatpush1.bf16.msra.mxu0 0
    %208 = vmatprep.subr.bf16.mxu0 0
    %209 = vmatpush1.bf16.msra.mxu0 0
    %210 = vmatprep.subr.bf16.mxu0 0
    %211 = vmatpush1.bf16.msra.mxu0 0
    %212 = vmatprep.subr.bf16.mxu0 0
    %213 = vmatpush1.bf16.msra.mxu0 0
    %214 = vmatprep.subr.bf16.mxu0 0
    %215 = vmatpush1.bf16.msra.mxu0 0
    %216 = vmatprep.subr.bf16.mxu0 0
    %217 = vmatpush1.bf16.msra.mxu0 0
    %218 = vmatprep.subr.bf16.mxu0 0
    %219 = vmatpush1.bf16.msra.mxu0 0
    %220 = vmatprep.subr.bf16.mxu0 0
    %221 = vmatpush1.bf16.msra.mxu0 0
    %222 = vmatprep.subr.bf16.mxu0 0
    %223 = vmatpush1.bf16.msra.mxu0 0
    %224 = vmatprep.subr.bf16.mxu0 0
    %225 = vmatpush1.bf16.msra.mxu0 0
    %226 = vmatprep.subr.bf16.mxu0 0
    %227 = vmatpush1.bf16.msra.mxu0 0
    %228 = vmatprep.subr.bf16.mxu0 0
    %229 = vmatpush1.bf16.msra.mxu0 0
    %230 = vmatprep.mubr.bf16.mxu0 0
    %231 = vmatmul.mubr.bf16.gmra.mrb[0].mxu0 %v153
    %v232 = vpop.f32.mrb[0].mxu0
    %v233 = vadd.f32 0.0, %v232
    %v234 = vpop.f32.mrb[0].mxu0
    %v235 = vpop.f32.mrb[0].mxu0
    %v236 = vadd.f32 0.0, %v235
    %v237 = vpop.f32.mrb[0].mxu0
    %238 = vdwg.mxu0
    %v239 = vmul.f32 %v190, %v68
    %v240 = vmul.f32 %v194, %v68
    %242 = vrot.lane.b32.xlu0 %v70, 64
    %v243 = vpop.permute.xlu0 %242
    %v245 = vmul.f32 %v190, %v243
    %v246 = vmul.f32 %v194, %v243
    %249 = vrot.lane.b32.xlu0 %v245, 64
    %v250 = vpop.permute.xlu0 %249
    %251 = vrot.lane.b32.xlu0 %v246, 64
    %v252 = vpop.permute.xlu0 %251
    %v255 = vadd.f32 %v239, %v250
    %v256 = vadd.f32 %v240, %v252
    %v257 = vpack.c.bf16 %v256, %v255
    %v258 = vmul.f32 %v192, %v68
    %v259 = vmul.f32 %v196, %v68
    %v260 = vmul.f32 %v192, %v243
    %v261 = vmul.f32 %v196, %v243
    %264 = vrot.lane.b32.xlu0 %v260, 64
    %v265 = vpop.permute.xlu0 %264
    %266 = vrot.lane.b32.xlu0 %v261, 64
    %v267 = vpop.permute.xlu0 %266
    %v270 = vadd.f32 %v258, %v265
    %v271 = vadd.f32 %v259, %v267
    %272 = vxpose.xlu0.b32.start [1/16] %v270, 128
    %273 = vxpose.xlu0.b32.cont [2/16] %v271, 128
    %274 = vxpose.xlu0.b32.cont [3/16] 0.0, 128
    %275 = vxpose.xlu0.b32.cont [4/16] 0.0, 128
    %276 = vxpose.xlu0.b32.cont [5/16] 0.0, 128
    %277 = vxpose.xlu0.b32.cont [6/16] 0.0, 128
    %278 = vxpose.xlu0.b32.cont [7/16] 0.0, 128
    %279 = vxpose.xlu0.b32.cont [8/16] 0.0, 128
    %280 = vxpose.xlu0.b32.cont [9/16] 0.0, 128
    %281 = vxpose.xlu0.b32.cont [10/16] 0.0, 128
    %282 = vxpose.xlu0.b32.cont [11/16] 0.0, 128
    %283 = vxpose.xlu0.b32.cont [12/16] 0.0, 128
    %284 = vxpose.xlu0.b32.cont [13/16] 0.0, 128
    %285 = vxpose.xlu0.b32.cont [14/16] 0.0, 128
    %286 = vxpose.xlu0.b32.cont [15/16] 0.0, 128
    %287 = vxpose.xlu0.b32.end [16/16] 0.0, 128
    %v288 = vpop.trf.xlu0
    %v289 = vpop.trf.xlu0
    %v290 = vpop.trf.xlu0
    %v291 = vpop.trf.xlu0
    %v292 = vpop.trf.xlu0
    %v293 = vpop.trf.xlu0
    %v294 = vpop.trf.xlu0
    %v295 = vpop.trf.xlu0
    %v296 = vpop.trf.xlu0
    %v297 = vpop.trf.xlu0
    %v298 = vpop.trf.xlu0
    %v299 = vpop.trf.xlu0
    %v300 = vpop.trf.xlu0
    %v301 = vpop.trf.xlu0
    %v302 = vpop.trf.xlu0
    %v303 = vpop.trf.xlu0
    %v304 = vpack.c.bf16 %v289, %v288
    %v305 = vpack.c.bf16 %v291, %v290
    %v306 = vpack.c.bf16 %v293, %v292
    %v307 = vpack.c.bf16 %v295, %v294
    %v308 = vpack.c.bf16 %v236, %v233
    %vm309 = vcmask 130048
    %v311 = vsel %vm309, %v257, 0
    %313 = vmatprep.subr.bf16.mxu0 0
    %314 = vmatpush1.bf16.msra.mxu0 %v304
    %315 = vmatprep.subr.bf16.mxu0 0
    %316 = vmatpush1.bf16.msra.mxu0 0
    %317 = vmatprep.subr.bf16.mxu0 0
    %318 = vmatpush1.bf16.msra.mxu0 0
    %319 = vmatprep.subr.bf16.mxu0 0
    %320 = vmatpush1.bf16.msra.mxu0 0
    %321 = vmatprep.subr.bf16.mxu0 0
    %322 = vmatpush1.bf16.msra.mxu0 0
    %323 = vmatprep.subr.bf16.mxu0 0
    %324 = vmatpush1.bf16.msra.mxu0 0
    %325 = vmatprep.subr.bf16.mxu0 0
    %326 = vmatpush1.bf16.msra.mxu0 0
    %327 = vmatprep.subr.bf16.mxu0 0
    %328 = vmatpush1.bf16.msra.mxu0 0
    %329 = vmatprep.subr.bf16.mxu0 0
    %330 = vmatpush1.bf16.msra.mxu0 0
    %331 = vmatprep.subr.bf16.mxu0 0
    %332 = vmatpush1.bf16.msra.mxu0 0
    %333 = vmatprep.subr.bf16.mxu0 0
    %334 = vmatpush1.bf16.msra.mxu0 0
    %335 = vmatprep.subr.bf16.mxu0 0
    %336 = vmatpush1.bf16.msra.mxu0 0
    %337 = vmatprep.subr.bf16.mxu0 0
    %338 = vmatpush1.bf16.msra.mxu0 0
    %339 = vmatprep.subr.bf16.mxu0 0
    %340 = vmatpush1.bf16.msra.mxu0 0
    %341 = vmatprep.subr.bf16.mxu0 0
    %342 = vmatpush1.bf16.msra.mxu0 0
    %343 = vmatprep.subr.bf16.mxu0 0
    %344 = vmatpush1.bf16.msra.mxu0 0
    %345 = vmatprep.mubr.bf16.mxu0 0
    %346 = vmatmul.mubr.bf16.gmra.mrb[0].mxu0 %v311
    %v347 = vpop.f32.mrb[0].mxu0
    %v348 = vadd.f32 %v66, %v347
    %v349 = vpop.f32.mrb[0].mxu0
    %v350 = vpop.f32.mrb[0].mxu0
    %v351 = vadd.f32 %v67, %v350
    %v352 = vpop.f32.mrb[0].mxu0
    %353 = vdwg.mxu0
    %v354 = vsel %vm309, %v348, -inf
    %355 = vmax.xlane.f32.xlu0 %v354
    %v356 = vpop.xlane.xlu0 %355
    %v357 = vsel %vm309, %v351, -inf
    %358 = vmax.xlane.f32.xlu0 %v357
    %v359 = vpop.xlane.xlu0 %358
    %v360 = vsub.f32 %v348, %v356
    %v361 = vsub.f32 %v351, %v359
    %v362 = vmul.f32 %v360, 1.442695
    %v363 = vpow.pop %v362
    %v364 = vmul.f32 %v361, 1.442695
    %v365 = vpow.pop %v364
    %v366 = vsel %vm309, %v363, 0.0
    %367 = vadd.xlane.f32.xlu0 %v366
    %v368 = vpop.xlane.xlu0 %367
    %v369 = vsel %vm309, %v365, 0.0
    %370 = vadd.xlane.f32.xlu0 %v369
    %v371 = vpop.xlane.xlu0 %370
    %v372 = vrcp.pop %v368
    %v373 = vrcp.pop %v371
    %v374 = vpack.c.bf16 %v365, %v363
    %v376 = vsel %vm309, %v374, 0
    %378 = vmatprep.subr.bf16.mxu0 0
    %379 = vmatpush1.bf16.msra.mxu0 %v308
    %380 = vmatprep.subr.bf16.mxu0 0
    %381 = vmatpush1.bf16.msra.mxu0 0
    %382 = vmatprep.subr.bf16.mxu0 0
    %383 = vmatpush1.bf16.msra.mxu0 0
    %384 = vmatprep.subr.bf16.mxu0 0
    %385 = vmatpush1.bf16.msra.mxu0 0
    %386 = vmatprep.subr.bf16.mxu0 0
    %387 = vmatpush1.bf16.msra.mxu0 0
    %388 = vmatprep.subr.bf16.mxu0 0
    %389 = vmatpush1.bf16.msra.mxu0 0
    %390 = vmatprep.subr.bf16.mxu0 0
    %391 = vmatpush1.bf16.msra.mxu0 0
    %392 = vmatprep.subr.bf16.mxu0 0
    %393 = vmatpush1.bf16.msra.mxu0 0
    %394 = vmatprep.subr.bf16.mxu0 0
    %395 = vmatpush1.bf16.msra.mxu0 0
    %396 = vmatprep.subr.bf16.mxu0 0
    %397 = vmatpush1.bf16.msra.mxu0 0
    %398 = vmatprep.subr.bf16.mxu0 0
    %399 = vmatpush1.bf16.msra.mxu0 0
    %400 = vmatprep.subr.bf16.mxu0 0
    %401 = vmatpush1.bf16.msra.mxu0 0
    %402 = vmatprep.subr.bf16.mxu0 0
    %403 = vmatpush1.bf16.msra.mxu0 0
    %404 = vmatprep.subr.bf16.mxu0 0
    %405 = vmatpush1.bf16.msra.mxu0 0
    %406 = vmatprep.subr.bf16.mxu0 0
    %407 = vmatpush1.bf16.msra.mxu0 0
    %408 = vmatprep.subr.bf16.mxu0 0
    %409 = vmatpush1.bf16.msra.mxu0 0
    %410 = vmatprep.mubr.bf16.mxu0 0
    %411 = vmatmul.mubr.bf16.gmra.mrb[0].mxu0 %v376
    %v412 = vpop.f32.mrb[0].mxu0
    %v413 = vadd.f32 0.0, %v412
    %v414 = vpop.f32.mrb[0].mxu0
    %v415 = vpop.f32.mrb[0].mxu0
    %v416 = vadd.f32 0.0, %v415
    %v417 = vpop.f32.mrb[0].mxu0
    %418 = vdwg.mxu0
    %v419 = vmul.f32 %v413, %v372
    %v420 = vmul.f32 %v416, %v373
    %v421 = vpack.c.bf16 %v420, %v419
    %422 = vst.msk [vmem:[#allocation2] sm:$0xff] %vm309, %v421
    %424 = vrot.lane.b32.xlu0 %v257, 112
    %v425 = vpop.permute.xlu0 %424
    %v427 = vsel %vm309, %v425, 0
    %429 = vmatprep.subr.bf16.mxu0 0
    %430 = vmatpush1.bf16.msra.mxu0 %v305
    %431 = vmatprep.subr.bf16.mxu0 0
    %432 = vmatpush1.bf16.msra.mxu0 0
    %433 = vmatprep.subr.bf16.mxu0 0
    %434 = vmatpush1.bf16.msra.mxu0 0
    %435 = vmatprep.subr.bf16.mxu0 0
    %436 = vmatpush1.bf16.msra.mxu0 0
    %437 = vmatprep.subr.bf16.mxu0 0
    %438 = vmatpush1.bf16.msra.mxu0 0
    %439 = vmatprep.subr.bf16.mxu0 0
    %440 = vmatpush1.bf16.msra.mxu0 0
    %441 = vmatprep.subr.bf16.mxu0 0
    %442 = vmatpush1.bf16.msra.mxu0 0
    %443 = vmatprep.subr.bf16.mxu0 0
    %444 = vmatpush1.bf16.msra.mxu0 0
    %445 = vmatprep.subr.bf16.mxu0 0
    %446 = vmatpush1.bf16.msra.mxu0 0
    %447 = vmatprep.subr.bf16.mxu0 0
    %448 = vmatpush1.bf16.msra.mxu0 0
    %449 = vmatprep.subr.bf16.mxu0 0
    %450 = vmatpush1.bf16.msra.mxu0 0
    %451 = vmatprep.subr.bf16.mxu0 0
    %452 = vmatpush1.bf16.msra.mxu0 0
    %453 = vmatprep.subr.bf16.mxu0 0
    %454 = vmatpush1.bf16.msra.mxu0 0
    %455 = vmatprep.subr.bf16.mxu0 0
    %456 = vmatpush1.bf16.msra.mxu0 0
    %457 = vmatprep.subr.bf16.mxu0 0
    %458 = vmatpush1.bf16.msra.mxu0 0
    %459 = vmatprep.subr.bf16.mxu0 0
    %460 = vmatpush1.bf16.msra.mxu0 0
    %461 = vmatprep.mubr.bf16.mxu0 0
    %462 = vmatmul.mubr.bf16.gmra.mrb[0].mxu0 %v427
    %v463 = vpop.f32.mrb[0].mxu0
    %v464 = vadd.f32 %v66, %v463
    %v465 = vpop.f32.mrb[0].mxu0
    %v466 = vpop.f32.mrb[0].mxu0
    %v467 = vadd.f32 %v67, %v466
    %v468 = vpop.f32.mrb[0].mxu0
    %469 = vdwg.mxu0
    %v470 = vsel %vm309, %v464, -inf
    %471 = vmax.xlane.f32.xlu0 %v470
    %v472 = vpop.xlane.xlu0 %471
    %v473 = vsel %vm309, %v467, -inf
    %474 = vmax.xlane.f32.xlu0 %v473
    %v475 = vpop.xlane.xlu0 %474
    %v476 = vsub.f32 %v464, %v472
    %v477 = vsub.f32 %v467, %v475
    %v478 = vmul.f32 %v476, 1.442695
    %v479 = vpow.pop %v478
    %v480 = vmul.f32 %v477, 1.442695
    %v481 = vpow.pop %v480
    %v482 = vsel %vm309, %v479, 0.0
    %483 = vadd.xlane.f32.xlu0 %v482
    %v484 = vpop.xlane.xlu0 %483
    %v485 = vsel %vm309, %v481, 0.0
    %486 = vadd.xlane.f32.xlu0 %v485
    %v487 = vpop.xlane.xlu0 %486
    %v488 = vrcp.pop %v484
    %v489 = vrcp.pop %v487
    %v490 = vpack.c.bf16 %v481, %v479
    %492 = vrot.lane.b32.xlu0 %v308, 112
    %v493 = vpop.permute.xlu0 %492
    %v496 = vsel %vm309, %v490, 0
    %498 = vmatprep.subr.bf16.mxu0 0
    %499 = vmatpush1.bf16.msra.mxu0 %v493
    %500 = vmatprep.subr.bf16.mxu0 0
    %501 = vmatpush1.bf16.msra.mxu0 0
    %502 = vmatprep.subr.bf16.mxu0 0
    %503 = vmatpush1.bf16.msra.mxu0 0
    %504 = vmatprep.subr.bf16.mxu0 0
    %505 = vmatpush1.bf16.msra.mxu0 0
    %506 = vmatprep.subr.bf16.mxu0 0
    %507 = vmatpush1.bf16.msra.mxu0 0
    %508 = vmatprep.subr.bf16.mxu0 0
    %509 = vmatpush1.bf16.msra.mxu0 0
    %510 = vmatprep.subr.bf16.mxu0 0
    %511 = vmatpush1.bf16.msra.mxu0 0
    %512 = vmatprep.subr.bf16.mxu0 0
    %513 = vmatpush1.bf16.msra.mxu0 0
    %514 = vmatprep.subr.bf16.mxu0 0
    %515 = vmatpush1.bf16.msra.mxu0 0
    %516 = vmatprep.subr.bf16.mxu0 0
    %517 = vmatpush1.bf16.msra.mxu0 0
    %518 = vmatprep.subr.bf16.mxu0 0
    %519 = vmatpush1.bf16.msra.mxu0 0
    %520 = vmatprep.subr.bf16.mxu0 0
    %521 = vmatpush1.bf16.msra.mxu0 0
    %522 = vmatprep.subr.bf16.mxu0 0
    %523 = vmatpush1.bf16.msra.mxu0 0
    %524 = vmatprep.subr.bf16.mxu0 0
    %525 = vmatpush1.bf16.msra.mxu0 0
    %526 = vmatprep.subr.bf16.mxu0 0
    %527 = vmatpush1.bf16.msra.mxu0 0
    %528 = vmatprep.subr.bf16.mxu0 0
    %529 = vmatpush1.bf16.msra.mxu0 0
    %530 = vmatprep.mubr.bf16.mxu0 0
    %531 = vmatmul.mubr.bf16.gmra.mrb[0].mxu0 %v496
    %v532 = vpop.f32.mrb[0].mxu0
    %v533 = vadd.f32 0.0, %v532
    %v534 = vpop.f32.mrb[0].mxu0
    %v535 = vpop.f32.mrb[0].mxu0
    %v536 = vadd.f32 0.0, %v535
    %v537 = vpop.f32.mrb[0].mxu0
    %538 = vdwg.mxu0
    %v539 = vmul.f32 %v533, %v488
    %v540 = vmul.f32 %v536, %v489
    %v541 = vpack.c.bf16 %v540, %v539
    %543 = vrot.lane.b32.xlu0 %v541, 16
    %v544 = vpop.permute.xlu0 %543
    %vm546 = vcmask 261248
    %547 = vst.msk [vmem:[#allocation2] sm:$0xff] %vm546, %v544
    %548 = vrot.lane.b32.xlu0 %v257, 96
    %v549 = vpop.permute.xlu0 %548
    %v551 = vsel %vm309, %v549, 0
    %553 = vmatprep.subr.bf16.mxu0 0
    %554 = vmatpush1.bf16.msra.mxu0 %v306
    %555 = vmatprep.subr.bf16.mxu0 0
    %556 = vmatpush1.bf16.msra.mxu0 0
    %557 = vmatprep.subr.bf16.mxu0 0
    %558 = vmatpush1.bf16.msra.mxu0 0
    %559 = vmatprep.subr.bf16.mxu0 0
    %560 = vmatpush1.bf16.msra.mxu0 0
    %561 = vmatprep.subr.bf16.mxu0 0
    %562 = vmatpush1.bf16.msra.mxu0 0
    %563 = vmatprep.subr.bf16.mxu0 0
    %564 = vmatpush1.bf16.msra.mxu0 0
    %565 = vmatprep.subr.bf16.mxu0 0
    %566 = vmatpush1.bf16.msra.mxu0 0
    %567 = vmatprep.subr.bf16.mxu0 0
    %568 = vmatpush1.bf16.msra.mxu0 0
    %569 = vmatprep.subr.bf16.mxu0 0
    %570 = vmatpush1.bf16.msra.mxu0 0
    %571 = vmatprep.subr.bf16.mxu0 0
    %572 = vmatpush1.bf16.msra.mxu0 0
    %573 = vmatprep.subr.bf16.mxu0 0
    %574 = vmatpush1.bf16.msra.mxu0 0
    %575 = vmatprep.subr.bf16.mxu0 0
    %576 = vmatpush1.bf16.msra.mxu0 0
    %577 = vmatprep.subr.bf16.mxu0 0
    %578 = vmatpush1.bf16.msra.mxu0 0
    %579 = vmatprep.subr.bf16.mxu0 0
    %580 = vmatpush1.bf16.msra.mxu0 0
    %581 = vmatprep.subr.bf16.mxu0 0
    %582 = vmatpush1.bf16.msra.mxu0 0
    %583 = vmatprep.subr.bf16.mxu0 0
    %584 = vmatpush1.bf16.msra.mxu0 0
    %585 = vmatprep.mubr.bf16.mxu0 0
    %586 = vmatmul.mubr.bf16.gmra.mrb[0].mxu0 %v551
    %v587 = vpop.f32.mrb[0].mxu0
    %v588 = vadd.f32 %v66, %v587
    %v589 = vpop.f32.mrb[0].mxu0
    %v590 = vpop.f32.mrb[0].mxu0
    %v591 = vadd.f32 %v67, %v590
    %v592 = vpop.f32.mrb[0].mxu0
    %593 = vdwg.mxu0
    %v594 = vsel %vm309, %v588, -inf
    %595 = vmax.xlane.f32.xlu0 %v594
    %v596 = vpop.xlane.xlu0 %595
    %v597 = vsel %vm309, %v591, -inf
    %598 = vmax.xlane.f32.xlu0 %v597
    %v599 = vpop.xlane.xlu0 %598
    %v600 = vsub.f32 %v588, %v596
    %v601 = vsub.f32 %v591, %v599
    %v602 = vmul.f32 %v600, 1.442695
    %v603 = vpow.pop %v602
    %v604 = vmul.f32 %v601, 1.442695
    %v605 = vpow.pop %v604
    %v606 = vsel %vm309, %v603, 0.0
    %607 = vadd.xlane.f32.xlu0 %v606
    %v608 = vpop.xlane.xlu0 %607
    %v609 = vsel %vm309, %v605, 0.0
    %610 = vadd.xlane.f32.xlu0 %v609
    %v611 = vpop.xlane.xlu0 %610
    %v612 = vrcp.pop %v608
    %v613 = vrcp.pop %v611
    %v614 = vpack.c.bf16 %v605, %v603
    %615 = vrot.lane.b32.xlu0 %v308, 96
    %v616 = vpop.permute.xlu0 %615
    %v619 = vsel %vm309, %v614, 0
    %621 = vmatprep.subr.bf16.mxu0 0
    %622 = vmatpush1.bf16.msra.mxu0 %v616
    %623 = vmatprep.subr.bf16.mxu0 0
    %624 = vmatpush1.bf16.msra.mxu0 0
    %625 = vmatprep.subr.bf16.mxu0 0
    %626 = vmatpush1.bf16.msra.mxu0 0
    %627 = vmatprep.subr.bf16.mxu0 0
    %628 = vmatpush1.bf16.msra.mxu0 0
    %629 = vmatprep.subr.bf16.mxu0 0
    %630 = vmatpush1.bf16.msra.mxu0 0
    %631 = vmatprep.subr.bf16.mxu0 0
    %632 = vmatpush1.bf16.msra.mxu0 0
    %633 = vmatprep.subr.bf16.mxu0 0
    %634 = vmatpush1.bf16.msra.mxu0 0
    %635 = vmatprep.subr.bf16.mxu0 0
    %636 = vmatpush1.bf16.msra.mxu0 0
    %637 = vmatprep.subr.bf16.mxu0 0
    %638 = vmatpush1.bf16.msra.mxu0 0
    %639 = vmatprep.subr.bf16.mxu0 0
    %640 = vmatpush1.bf16.msra.mxu0 0
    %641 = vmatprep.subr.bf16.mxu0 0
    %642 = vmatpush1.bf16.msra.mxu0 0
    %643 = vmatprep.subr.bf16.mxu0 0
    %644 = vmatpush1.bf16.msra.mxu0 0
    %645 = vmatprep.subr.bf16.mxu0 0
    %646 = vmatpush1.bf16.msra.mxu0 0
    %647 = vmatprep.subr.bf16.mxu0 0
    %648 = vmatpush1.bf16.msra.mxu0 0
    %649 = vmatprep.subr.bf16.mxu0 0
    %650 = vmatpush1.bf16.msra.mxu0 0
    %651 = vmatprep.subr.bf16.mxu0 0
    %652 = vmatpush1.bf16.msra.mxu0 0
    %653 = vmatprep.mubr.bf16.mxu0 0
    %654 = vmatmul.mubr.bf16.gmra.mrb[0].mxu0 %v619
    %v655 = vpop.f32.mrb[0].mxu0
    %v656 = vadd.f32 0.0, %v655
    %v657 = vpop.f32.mrb[0].mxu0
    %v658 = vpop.f32.mrb[0].mxu0
    %v659 = vadd.f32 0.0, %v658
    %v660 = vpop.f32.mrb[0].mxu0
    %661 = vdwg.mxu0
    %v662 = vmul.f32 %v656, %v612
    %v663 = vmul.f32 %v659, %v613
    %v664 = vpack.c.bf16 %v663, %v662
    %666 = vrot.lane.b32.xlu0 %v664, 32
    %v667 = vpop.permute.xlu0 %666
    %vm669 = vcmask 392448
    %670 = vst.msk [vmem:[#allocation2] sm:$0xff] %vm669, %v667
    %671 = vrot.lane.b32.xlu0 %v257, 80
    %v672 = vpop.permute.xlu0 %671
    %v674 = vsel %vm309, %v672, 0
    %676 = vmatprep.subr.bf16.mxu0 0
    %677 = vmatpush1.bf16.msra.mxu0 %v307
    %678 = vmatprep.subr.bf16.mxu0 0
    %679 = vmatpush1.bf16.msra.mxu0 0
    %680 = vmatprep.subr.bf16.mxu0 0
    %681 = vmatpush1.bf16.msra.mxu0 0
    %682 = vmatprep.subr.bf16.mxu0 0
    %683 = vmatpush1.bf16.msra.mxu0 0
    %684 = vmatprep.subr.bf16.mxu0 0
    %685 = vmatpush1.bf16.msra.mxu0 0
    %686 = vmatprep.subr.bf16.mxu0 0
    %687 = vmatpush1.bf16.msra.mxu0 0
    %688 = vmatprep.subr.bf16.mxu0 0
    %689 = vmatpush1.bf16.msra.mxu0 0
    %690 = vmatprep.subr.bf16.mxu0 0
    %691 = vmatpush1.bf16.msra.mxu0 0
    %692 = vmatprep.subr.bf16.mxu0 0
    %693 = vmatpush1.bf16.msra.mxu0 0
    %694 = vmatprep.subr.bf16.mxu0 0
    %695 = vmatpush1.bf16.msra.mxu0 0
    %696 = vmatprep.subr.bf16.mxu0 0
    %697 = vmatpush1.bf16.msra.mxu0 0
    %698 = vmatprep.subr.bf16.mxu0 0
    %699 = vmatpush1.bf16.msra.mxu0 0
    %700 = vmatprep.subr.bf16.mxu0 0
    %701 = vmatpush1.bf16.msra.mxu0 0
    %702 = vmatprep.subr.bf16.mxu0 0
    %703 = vmatpush1.bf16.msra.mxu0 0
    %704 = vmatprep.subr.bf16.mxu0 0
    %705 = vmatpush1.bf16.msra.mxu0 0
    %706 = vmatprep.subr.bf16.mxu0 0
    %707 = vmatpush1.bf16.msra.mxu0 0
    %708 = vmatprep.mubr.bf16.mxu0 0
    %709 = vmatmul.mubr.bf16.gmra.mrb[0].mxu0 %v674
    %v710 = vpop.f32.mrb[0].mxu0
    %v711 = vadd.f32 %v66, %v710
    %v712 = vpop.f32.mrb[0].mxu0
    %v713 = vpop.f32.mrb[0].mxu0
    %v714 = vadd.f32 %v67, %v713
    %v715 = vpop.f32.mrb[0].mxu0
    %716 = vdwg.mxu0
    %v717 = vsel %vm309, %v711, -inf
    %718 = vmax.xlane.f32.xlu0 %v717
    %v719 = vpop.xlane.xlu0 %718
    %v720 = vsel %vm309, %v714, -inf
    %721 = vmax.xlane.f32.xlu0 %v720
    %v722 = vpop.xlane.xlu0 %721
    %v723 = vsub.f32 %v711, %v719
    %v724 = vsub.f32 %v714, %v722
    %v725 = vmul.f32 %v723, 1.442695
    %v726 = vpow.pop %v725
    %v727 = vmul.f32 %v724, 1.442695
    %v728 = vpow.pop %v727
    %v729 = vsel %vm309, %v726, 0.0
    %730 = vadd.xlane.f32.xlu0 %v729
    %v731 = vpop.xlane.xlu0 %730
    %v732 = vsel %vm309, %v728, 0.0
    %733 = vadd.xlane.f32.xlu0 %v732
    %v734 = vpop.xlane.xlu0 %733
    %v735 = vrcp.pop %v731
    %v736 = vrcp.pop %v734
    %v737 = vpack.c.bf16 %v728, %v726
    %738 = vrot.lane.b32.xlu0 %v308, 80
    %v739 = vpop.permute.xlu0 %738
    %v742 = vsel %vm309, %v737, 0
    %744 = vmatprep.subr.bf16.mxu0 0
    %745 = vmatpush1.bf16.msra.mxu0 %v739
    %746 = vmatprep.subr.bf16.mxu0 0
    %747 = vmatpush1.bf16.msra.mxu0 0
    %748 = vmatprep.subr.bf16.mxu0 0
    %749 = vmatpush1.bf16.msra.mxu0 0
    %750 = vmatprep.subr.bf16.mxu0 0
    %751 = vmatpush1.bf16.msra.mxu0 0
    %752 = vmatprep.subr.bf16.mxu0 0
    %753 = vmatpush1.bf16.msra.mxu0 0
    %754 = vmatprep.subr.bf16.mxu0 0
    %755 = vmatpush1.bf16.msra.mxu0 0
    %756 = vmatprep.subr.bf16.mxu0 0
    %757 = vmatpush1.bf16.msra.mxu0 0
    %758 = vmatprep.subr.bf16.mxu0 0
    %759 = vmatpush1.bf16.msra.mxu0 0
    %760 = vmatprep.subr.bf16.mxu0 0
    %761 = vmatpush1.bf16.msra.mxu0 0
    %762 = vmatprep.subr.bf16.mxu0 0
    %763 = vmatpush1.bf16.msra.mxu0 0
    %764 = vmatprep.subr.bf16.mxu0 0
    %765 = vmatpush1.bf16.msra.mxu0 0
    %766 = vmatprep.subr.bf16.mxu0 0
    %767 = vmatpush1.bf16.msra.mxu0 0
    %768 = vmatprep.subr.bf16.mxu0 0
    %769 = vmatpush1.bf16.msra.mxu0 0
    %770 = vmatprep.subr.bf16.mxu0 0
    %771 = vmatpush1.bf16.msra.mxu0 0
    %772 = vmatprep.subr.bf16.mxu0 0
    %773 = vmatpush1.bf16.msra.mxu0 0
    %774 = vmatprep.subr.bf16.mxu0 0
    %775 = vmatpush1.bf16.msra.mxu0 0
    %776 = vmatprep.mubr.bf16.mxu0 0
    %777 = vmatmul.mubr.bf16.gmra.mrb[0].mxu0 %v742
    %v778 = vpop.f32.mrb[0].mxu0
    %v779 = vadd.f32 0.0, %v778
    %v780 = vpop.f32.mrb[0].mxu0
    %v781 = vpop.f32.mrb[0].mxu0
    %v782 = vadd.f32 0.0, %v781
    %v783 = vpop.f32.mrb[0].mxu0
    %784 = vdwg.mxu0
    %v785 = vmul.f32 %v779, %v735
    %v786 = vmul.f32 %v782, %v736
    %v787 = vpack.c.bf16 %v786, %v785
    %789 = vrot.lane.b32.xlu0 %v787, 48
    %v790 = vpop.permute.xlu0 %789
    %vm792 = vcmask 523648
    %793 = vst.msk [vmem:[#allocation2] sm:$0xff] %vm792, %v790
    %v794 = vld [vmem:[#allocation2] sm:$0xff]
    %v795 = vld [vmem:[%s2] sm:$0xf]
    %v796 = vld [vmem:[%s2 + $0x4] sm:$0xf]
    %v797 = vld [vmem:[%s2 + $0x8] sm:$0xf]
    %v798 = vld [vmem:[%s2 + $0xc] sm:$0xf]
    %v799 = vld [vmem:[%s2 + $0x10] sm:$0xf]
    %v800 = vld [vmem:[%s2 + $0x14] sm:$0xf]
    %v801 = vld [vmem:[%s2 + $0x18] sm:$0xf]
    %v802 = vld [vmem:[%s2 + $0x1c] sm:$0xf]
    %v811 = vunpack.c.l.b16 %v795
    %v812 = vunpack.c.l.b16 %v796
    %v813 = vunpack.c.l.b16 %v797
    %v814 = vunpack.c.l.b16 %v798
    %v815 = vunpack.c.l.b16 %v799
    %v816 = vunpack.c.l.b16 %v800
    %v817 = vunpack.c.l.b16 %v801
    %v818 = vunpack.c.l.b16 %v802
    %v819 = vpack.c.b16 %v812, %v811
    %v820 = vpack.c.b16 %v814, %v813
    %v821 = vpack.c.b16 %v816, %v815
    %v822 = vpack.c.b16 %v818, %v817
    %vm827 = vcmask 523264
    %v829 = vsel %vm827, %v794, 0
    %831 = vmatprep.subr.bf16.mxu0 0
    %832 = vmatpush1.bf16.msra.mxu0 %v819
    %833 = vmatprep.subr.bf16.mxu0 0
    %834 = vmatpush1.bf16.msra.mxu0 %v820
    %835 = vmatprep.subr.bf16.mxu0 0
    %836 = vmatpush1.bf16.msra.mxu0 %v821
    %837 = vmatprep.subr.bf16.mxu0 0
    %838 = vmatpush1.bf16.msra.mxu0 %v822
    %839 = vmatprep.subr.bf16.mxu0 0
    %840 = vmatpush1.bf16.msra.mxu0 0
    %841 = vmatprep.subr.bf16.mxu0 0
    %842 = vmatpush1.bf16.msra.mxu0 0
    %843 = vmatprep.subr.bf16.mxu0 0
    %844 = vmatpush1.bf16.msra.mxu0 0
    %845 = vmatprep.subr.bf16.mxu0 0
    %846 = vmatpush1.bf16.msra.mxu0 0
    %847 = vmatprep.subr.bf16.mxu0 0
    %848 = vmatpush1.bf16.msra.mxu0 0
    %849 = vmatprep.subr.bf16.mxu0 0
    %850 = vmatpush1.bf16.msra.mxu0 0
    %851 = vmatprep.subr.bf16.mxu0 0
    %852 = vmatpush1.bf16.msra.mxu0 0
    %853 = vmatprep.subr.bf16.mxu0 0
    %854 = vmatpush1.bf16.msra.mxu0 0
    %855 = vmatprep.subr.bf16.mxu0 0
    %856 = vmatpush1.bf16.msra.mxu0 0
    %857 = vmatprep.subr.bf16.mxu0 0
    %858 = vmatpush1.bf16.msra.mxu0 0
    %859 = vmatprep.subr.bf16.mxu0 0
    %860 = vmatpush1.bf16.msra.mxu0 0
    %861 = vmatprep.subr.bf16.mxu0 0
    %862 = vmatpush1.bf16.msra.mxu0 0
    %863 = vmatprep.mubr.bf16.mxu0 0
    %864 = vmatmul.mubr.bf16.gmra.mrb[0].mxu0 %v829
    %v865 = vpop.f32.mrb[0].mxu0
    %v866 = vadd.f32 0.0, %v865
    %v867 = vpop.f32.mrb[0].mxu0
    %v868 = vpop.f32.mrb[0].mxu0
    %v869 = vadd.f32 0.0, %v868
    %v870 = vpop.f32.mrb[0].mxu0
    %871 = vdwg.mxu0
    %v872 = vadd.f32 %v40, %v866
    %v873 = vadd.f32 %v41, %v869
    %v874 = vsel %vm71, %v872, 0.0
    %875 = vadd.xlane.f32.xlu0 %v874
    %v876 = vpop.xlane.xlu0 %875
    %v877 = vsel %vm71, %v873, 0.0
    %878 = vadd.xlane.f32.xlu0 %v877
    %v879 = vpop.xlane.xlu0 %878
    %v880 = vmul.f32 %v876, %v78
    %v881 = vmul.f32 %v879, %v78
    %v882 = vsub.f32 %v872, %v880
    %v883 = vsub.f32 %v873, %v881
    %v884 = vmul.f32 %v882, %v882
    %v885 = vmul.f32 %v883, %v883
    %v886 = vsel %vm71, %v884, 0.0
    %887 = vadd.xlane.f32.xlu0 %v886
    %v888 = vpop.xlane.xlu0 %887
    %v889 = vsel %vm71, %v885, 0.0
    %890 = vadd.xlane.f32.xlu0 %v889
    %v891 = vpop.xlane.xlu0 %890
    %v892 = vmul.f32 %v888, %v78
    %v893 = vmul.f32 %v891, %v78
    %v894 = vadd.f32 %v892, 1e-05
    %v895 = vadd.f32 %v893, 1e-05
    %v896 = vrsqrt.pop %v894
    %v897 = vrsqrt.pop %v895
    %v898 = vmul.f32 %v882, %v896
    %v899 = vmul.f32 %v883, %v897
    %v900 = vlaneseq
    %v901 = vshrl.u32 %v900, 7
    %v902 = vsub.s32 2, %v901
    %v903 = vrot.slane %v42, %v902
    %v904 = vmul.f32 %v898, %v903
    %v905 = vmul.f32 %v899, %v903
    %v906 = vlaneseq
    %v907 = vshrl.u32 %v906, 7
    %v908 = vsub.s32 3, %v907
    %v909 = vrot.slane %v42, %v908
    %v910 = vadd.f32 %v904, %v909
    %v911 = vadd.f32 %v905, %v909
    %v912 = vpack.c.bf16 %v911, %v910
    %v913 = vld [vmem:[%s3] sm:$0xf]
    %v914 = vld [vmem:[%s3 + $0x4] sm:$0xf]
    %v915 = vld [vmem:[%s3 + $0x8] sm:$0xf]
    %v916 = vld [vmem:[%s3 + $0xc] sm:$0xf]
    %v917 = vlaneseq
    %v918 = vshrl.u32 %v917, 7
    %v919 = vsub.s32 5, %v918
    %v920 = vrot.slane %v42, %v919
    %v925 = vunpack.c.l.b16 %v913
    %v926 = vunpack.c.l.b16 %v914
    %v927 = vunpack.c.l.b16 %v915
    %v928 = vunpack.c.l.b16 %v916
    %v929 = vpack.c.b16 %v926, %v925
    %v930 = vpack.c.b16 %v928, %v927
    %v934 = vsel %vm71, %v912, 0
    %936 = vmatprep.subr.bf16.mxu0 0
    %937 = vmatpush1.bf16.msra.mxu0 %v929
    %938 = vmatprep.subr.bf16.mxu0 0
    %939 = vmatpush1.bf16.msra.mxu0 %v930
    %940 = vmatprep.subr.bf16.mxu0 0
    %941 = vmatpush1.bf16.msra.mxu0 0
    %942 = vmatprep.subr.bf16.mxu0 0
    %943 = vmatpush1.bf16.msra.mxu0 0
    %944 = vmatprep.subr.bf16.mxu0 0
    %945 = vmatpush1.bf16.msra.mxu0 0
    %946 = vmatprep.subr.bf16.mxu0 0
    %947 = vmatpush1.bf16.msra.mxu0 0
    %948 = vmatprep.subr.bf16.mxu0 0
    %949 = vmatpush1.bf16.msra.mxu0 0
    %950 = vmatprep.subr.bf16.mxu0 0
    %951 = vmatpush1.bf16.msra.mxu0 0
    %952 = vmatprep.subr.bf16.mxu0 0
    %953 = vmatpush1.bf16.msra.mxu0 0
    %954 = vmatprep.subr.bf16.mxu0 0
    %955 = vmatpush1.bf16.msra.mxu0 0
    %956 = vmatprep.subr.bf16.mxu0 0
    %957 = vmatpush1.bf16.msra.mxu0 0
    %958 = vmatprep.subr.bf16.mxu0 0
    %959 = vmatpush1.bf16.msra.mxu0 0
    %960 = vmatprep.subr.bf16.mxu0 0
    %961 = vmatpush1.bf16.msra.mxu0 0
    %962 = vmatprep.subr.bf16.mxu0 0
    %963 = vmatpush1.bf16.msra.mxu0 0
    %964 = vmatprep.subr.bf16.mxu0 0
    %965 = vmatpush1.bf16.msra.mxu0 0
    %966 = vmatprep.subr.bf16.mxu0 0
    %967 = vmatpush1.bf16.msra.mxu0 0
    %968 = vmatprep.mubr.bf16.mxu0 0
    %969 = vmatmul.mubr.bf16.gmra.mrb[0].mxu0 %v934
    %v970 = vpop.f32.mrb[0].mxu0
    %v971 = vadd.f32 %v920, %v970
    %v972 = vpop.f32.mrb[0].mxu0
    %v973 = vpop.f32.mrb[0].mxu0
    %v974 = vadd.f32 %v920, %v973
    %v975 = vpop.f32.mrb[0].mxu0
    %976 = vdwg.mxu0
    %v977 = vmul.f32 %v971, 0.70710677
    %v978 = vmul.f32 %v974, 0.70710677
    %v979 = vand.u32 2147483647, %v977
    %v980 = vand.u32 2147483647, %v978
    %v981 = vmul.f32 %v979, 0.3275911
    %v982 = vmul.f32 %v980, 0.3275911
    %v983 = vadd.f32 %v981, 1.0
    %v984 = vadd.f32 %v982, 1.0
    %v985 = vrcp.pop %v983
    %v986 = vmul.f32 1.0, %v985
    %v987 = vrcp.pop %v984
    %v988 = vmul.f32 1.0, %v987
    %v989 = vmul.f32 %v986, 1.0614054
    %v990 = vmul.f32 %v988, 1.0614054
    %v991 = vadd.f32 %v989, -1.4531521
    %v992 = vadd.f32 %v990, -1.4531521
    %v993 = vmul.f32 %v986, %v991
    %v994 = vmul.f32 %v988, %v992
    %v995 = vadd.f32 %v993, 1.4214138
    %v996 = vadd.f32 %v994, 1.4214138
    %v997 = vmul.f32 %v986, %v995
    %v998 = vmul.f32 %v988, %v996
    %v999 = vadd.f32 %v997, -0.28449672
    %v1000 = vadd.f32 %v998, -0.28449672
    %v1001 = vmul.f32 %v986, %v999
    %v1002 = vmul.f32 %v988, %v1000
    %v1003 = vadd.f32 %v1001, 0.2548296
    %v1004 = vadd.f32 %v1002, 0.2548296
    %v1005 = vmul.f32 %v986, %v1003
    %v1006 = vmul.f32 %v988, %v1004
    %v1007 = vsub.f32 0.0, %v979
    %v1008 = vsub.f32 0.0, %v980
    %v1009 = vmul.f32 %v1007, %v979
    %v1010 = vmul.f32 %v1008, %v980
    %v1011 = vmul.f32 %v1009, 1.442695
    %v1012 = vpow.pop %v1011
    %v1013 = vmul.f32 %v1010, 1.442695
    %v1014 = vpow.pop %v1013
    %v1015 = vmul.f32 %v1005, %v1012
    %v1016 = vmul.f32 %v1006, %v1014
    %v1017 = vsub.f32 1.0, %v1015
    %v1018 = vsub.f32 1.0, %v1016
    %vm1019 = vcmp.lt.f32.partialorder %v977, 0.0
    %vm1020 = vcmp.lt.f32.partialorder %v978, 0.0
    %v1021 = vsub.f32 0.0, %v1017
    %v1022 = vsub.f32 0.0, %v1018
    %v1023 = vsel %vm1019, %v1021, %v1017
    %v1024 = vsel %vm1020, %v1022, %v1018
    %v1025 = vmul.f32 %v971, 0.5
    %v1026 = vmul.f32 %v974, 0.5
    %v1027 = vadd.f32 %v1023, 1.0
    %v1028 = vadd.f32 %v1024, 1.0
    %v1029 = vmul.f32 %v1025, %v1027
    %v1030 = vmul.f32 %v1026, %v1028
    %v1031 = vpack.c.bf16 %v1030, %v1029
    %v1032 = vld [vmem:[%s4] sm:$0xf]
    %v1033 = vld [vmem:[%s4 + $0x4] sm:$0xf]
    %v1034 = vld [vmem:[%s4 + $0x8] sm:$0xf]
    %v1035 = vld [vmem:[%s4 + $0xc] sm:$0xf]
    %v1036 = vld [vmem:[%s4 + $0x10] sm:$0xf]
    %v1037 = vld [vmem:[%s4 + $0x14] sm:$0xf]
    %v1038 = vld [vmem:[%s4 + $0x18] sm:$0xf]
    %v1039 = vld [vmem:[%s4 + $0x1c] sm:$0xf]
    %v1040 = vlaneseq
    %v1041 = vshrl.u32 %v1040, 7
    %v1042 = vsub.s32 4, %v1041
    %v1043 = vrot.slane %v42, %v1042
    %v1052 = vunpack.c.l.b16 %v1032
    %v1053 = vunpack.c.l.b16 %v1033
    %v1054 = vunpack.c.l.b16 %v1034
    %v1055 = vunpack.c.l.b16 %v1035
    %v1056 = vunpack.c.l.b16 %v1036
    %v1057 = vunpack.c.l.b16 %v1037
    %v1058 = vunpack.c.l.b16 %v1038
    %v1059 = vunpack.c.l.b16 %v1039
    %v1060 = vpack.c.b16 %v1053, %v1052
    %v1061 = vpack.c.b16 %v1055, %v1054
    %v1062 = vpack.c.b16 %v1057, %v1056
    %v1063 = vpack.c.b16 %v1059, %v1058
    %v1069 = vsel %vm827, %v1031, 0
    %1071 = vmatprep.subr.bf16.mxu0 0
    %1072 = vmatpush1.bf16.msra.mxu0 %v1060
    %1073 = vmatprep.subr.bf16.mxu0 0
    %1074 = vmatpush1.bf16.msra.mxu0 %v1061
    %1075 = vmatprep.subr.bf16.mxu0 0
    %1076 = vmatpush1.bf16.msra.mxu0 %v1062
    %1077 = vmatprep.subr.bf16.mxu0 0
    %1078 = vmatpush1.bf16.msra.mxu0 %v1063
    %1079 = vmatprep.subr.bf16.mxu0 0
    %1080 = vmatpush1.bf16.msra.mxu0 0
    %1081 = vmatprep.subr.bf16.mxu0 0
    %1082 = vmatpush1.bf16.msra.mxu0 0
    %1083 = vmatprep.subr.bf16.mxu0 0
    %1084 = vmatpush1.bf16.msra.mxu0 0
    %1085 = vmatprep.subr.bf16.mxu0 0
    %1086 = vmatpush1.bf16.msra.mxu0 0
    %1087 = vmatprep.subr.bf16.mxu0 0
    %1088 = vmatpush1.bf16.msra.mxu0 0
    %1089 = vmatprep.subr.bf16.mxu0 0
    %1090 = vmatpush1.bf16.msra.mxu0 0
    %1091 = vmatprep.subr.bf16.mxu0 0
    %1092 = vmatpush1.bf16.msra.mxu0 0
    %1093 = vmatprep.subr.bf16.mxu0 0
    %1094 = vmatpush1.bf16.msra.mxu0 0
    %1095 = vmatprep.subr.bf16.mxu0 0
    %1096 = vmatpush1.bf16.msra.mxu0 0
    %1097 = vmatprep.subr.bf16.mxu0 0
    %1098 = vmatpush1.bf16.msra.mxu0 0
    %1099 = vmatprep.subr.bf16.mxu0 0
    %1100 = vmatpush1.bf16.msra.mxu0 0
    %1101 = vmatprep.subr.bf16.mxu0 0
    %1102 = vmatpush1.bf16.msra.mxu0 0
    %1103 = vmatprep.mubr.bf16.mxu0 0
    %1104 = vmatmul.mubr.bf16.gmra.mrb[0].mxu0 %v1069
    %v1105 = vpop.f32.mrb[0].mxu0
    %v1106 = vadd.f32 %v1043, %v1105
    %v1107 = vpop.f32.mrb[0].mxu0
    %v1108 = vpop.f32.mrb[0].mxu0
    %v1109 = vadd.f32 %v1043, %v1108
    %v1110 = vpop.f32.mrb[0].mxu0
    %1111 = vdwg.mxu0
    %v1112 = vadd.f32 %v872, %v1106
    %v1113 = vadd.f32 %v873, %v1109
    %1114 = vst.msk [vmem:[#allocation6] sm:$0xff] %vm71, %v1112
    %1115 = vst.msk [vmem:[#allocation6 + $0x8] sm:$0xff] %vm71, %v1113
    // Predicated region
    $region34: #{tpu_custom_call.1} parent=1 // pred_check
      _
    $region35: #{tpu_custom_call.1} parent=1 // pred_check_branch
      %1117 = sbr.rel (0) target = $region37
    $region36: #{tpu_custom_call.1} parent=1 // pred_region
      %s1119 = ssub.s32 256, 256
      %1120 = vsyncadd [#allocation5], %s1119
      %s1121 = sshll.u32 [#allocation6], 4
      %s1122 = int_to_ptr.vmem [resolvable:$true] %s1121
      %1127 = dma.vmem_to_hbm [thread:$0]  %s1122, 256, %s7, [#allocation5], 128, 128, 8
    $region37: #{tpu_custom_call.1} parent=1 // pred_fallthru
      _
    // Predicated region
    $region38: #{tpu_custom_call.1} parent=1 // pred_check
      _
    $region39: #{tpu_custom_call.1} parent=1 // pred_check_branch
      %1129 = sbr.rel (0) target = $region41
    $region40: #{tpu_custom_call.1} parent=1 // pred_region
      %1130 = dma.done [#allocation5], 256
    $region41: #{tpu_custom_call.1} parent=1 // pred_fallthru
      _
    %1131 = vsyncpa [#allocation4], 1
    %1132 = vsyncpa [#allocation5], 1

// kernel: tpu_custom_call.1
$region0: #{tpu_custom_call.1}
  #allocation0 [shape = 'u32[]', space=smem, size = 0x4, offset = 0x4, fixed_abs, tag = 'smem constant byte address 0x4 - core index']
  #allocation1 [shape = 'u32[144,128]{1,0:T(1,128)}', space=vmem, size = 0x12000, scoped, tag = 'internal scratch']
  #allocation2 [shape = 'bf16[16,64]{1,0:T(16,128)(2,1)}', space=vmem, size = 0x1000, scoped, tag = 'scratch operand']
  %s0 = inlined_call_operand.vmem [shape: f32[16,32], index: 0, kind: input, shape index: {}]
  %s1 = inlined_call_operand.vmem [shape: bf16[32,320], index: 1, kind: input, shape index: {}]
  %s2 = inlined_call_operand.vmem [shape: bf16[64,32], index: 2, kind: input, shape index: {}]
  %s3 = inlined_call_operand.vmem [shape: bf16[32,64], index: 3, kind: input, shape index: {}]
  %s4 = inlined_call_operand.vmem [shape: bf16[64,32], index: 4, kind: input, shape index: {}]
  %s5 = inlined_call_operand.hbm [shape: f32[8,64], index: 5, kind: input, shape index: {}]
  %s6 = inlined_call_operand.vmem [shape: f32[2,8,64], index: 6, kind: input, shape index: {}]
  %s7 = inlined_call_operand.hbm [shape: f32[16,32], index: 7, kind: output, shape index: {}]
  %s8 = sld [smem:[#allocation0]]
  $region42: #{tpu_custom_call.1} parent=0
    _
  %s10 = ssub.s32 1, %s8
  %s11 = scalar_select 0, %s10, %s8
  $region1: #{tpu_custom_call.1} parent=0
    #allocation3 [shape = 'u8[4096]{0}', space=vmem, size = 0x1000, scoped, tag = 'input window, operand 5, single buffered']
    #allocation4 [shape = 's32[1]{0}', space=sflag, size = 0x4, scoped, tag = 'scoped memory for tpu_custom_call.1']
    #allocation5 [shape = 's32[1]{0}', space=sflag, size = 0x4, scoped, tag = 'scoped memory for tpu_custom_call.1']
    #allocation6 [shape = 'u8[8192]{0}', space=vmem, size = 0x2000, scoped, tag = 'output window, operand 0, single buffered']
    %12 = vsyncpa [#allocation4], 0
    %13 = vsyncpa [#allocation5], 0
    // Predicated region
    $region2: #{tpu_custom_call.1} parent=1 // pred_check
      _
    $region3: #{tpu_custom_call.1} parent=1 // pred_check_branch
      %15 = sbr.rel (0) target = $region5
    $region4: #{tpu_custom_call.1} parent=1 // pred_region
      _
    $region5: #{tpu_custom_call.1} parent=1 // pred_fallthru
      _
    // Predicated region
    $region6: #{tpu_custom_call.1} parent=1 // pred_check
      _
    $region7: #{tpu_custom_call.1} parent=1 // pred_check_branch
      %17 = sbr.rel (0) target = $region9
    $region8: #{tpu_custom_call.1} parent=1 // pred_region
      _
    $region9: #{tpu_custom_call.1} parent=1 // pred_fallthru
      _
    // Predicated region
    $region10: #{tpu_custom_call.1} parent=1 // pred_check
      _
    $region11: #{tpu_custom_call.1} parent=1 // pred_check_branch
      %19 = sbr.rel (0) target = $region13
    $region12: #{tpu_custom_call.1} parent=1 // pred_region
      _
    $region13: #{tpu_custom_call.1} parent=1 // pred_fallthru
      _
    // Predicated region
    $region14: #{tpu_custom_call.1} parent=1 // pred_check
      _
    $region15: #{tpu_custom_call.1} parent=1 // pred_check_branch
      %21 = sbr.rel (0) target = $region17
    $region16: #{tpu_custom_call.1} parent=1 // pred_region
      _
    $region17: #{tpu_custom_call.1} parent=1 // pred_fallthru
      _
    // Predicated region
    $region18: #{tpu_custom_call.1} parent=1 // pred_check
      _
    $region19: #{tpu_custom_call.1} parent=1 // pred_check_branch
      %23 = sbr.rel (0) target = $region21
    $region20: #{tpu_custom_call.1} parent=1 // pred_region
      _
    $region21: #{tpu_custom_call.1} parent=1 // pred_fallthru
      _
    // Predicated region
    $region22: #{tpu_custom_call.1} parent=1 // pred_check
      _
    $region23: #{tpu_custom_call.1} parent=1 // pred_check_branch
      %25 = sbr.rel (0) target = $region25
    $region24: #{tpu_custom_call.1} parent=1 // pred_region
      %s27 = ssub.s32 128, 128
      %28 = vsyncadd [#allocation4], %s27
      %s30 = sshll.u32 [#allocation3], 4
      %s31 = int_to_ptr.vmem [resolvable:$true] %s30
      %33 = dma.hbm_to_vmem [thread:$0]  %s5, 128, %s31, [#allocation4]
    $region25: #{tpu_custom_call.1} parent=1 // pred_fallthru
      _
    // Predicated region
    $region26: #{tpu_custom_call.1} parent=1 // pred_check
      _
    $region27: #{tpu_custom_call.1} parent=1 // pred_check_branch
      %35 = sbr.rel (0) target = $region29
    $region28: #{tpu_custom_call.1} parent=1 // pred_region
      _
    $region29: #{tpu_custom_call.1} parent=1 // pred_fallthru
      _
    // Predicated region
    $region30: #{tpu_custom_call.1} parent=1 // pred_check
      _
    $region31: #{tpu_custom_call.1} parent=1 // pred_check_branch
      %37 = sbr.rel (0) target = $region33
    $region32: #{tpu_custom_call.1} parent=1 // pred_region
      %38 = dma.done [#allocation4], 128
    $region33: #{tpu_custom_call.1} parent=1 // pred_fallthru
      _
    %v40 = vld [vmem:[%s0] sm:$0xff]
    %v41 = vld [vmem:[%s0 + $0x8] sm:$0xff]
    %v42 = vld [vmem:[#allocation3] sm:$0xff]
    %v43 = vlaneseq
    %v44 = vshrl.u32 %v43, 7
    %v45 = vadd.s32 %v44, 8
    %v46 = vlaneseq
    %v47 = vand.u32 %v46, 127
    %v48 = vcvt.s32.f32 %v44
    %v49 = vcvt.s32.f32 %v45
    %v50 = vadd.f32 %v48, 0.5
    %v51 = vadd.f32 %v49, 0.5
    %v52 = vmul.f32 %v50, 0.125
    %v53 = vmul.f32 %v51, 0.125
    %v54 = vfloor.f32 %v52
    %v55 = vfloor.f32 %v53
    %v56 = vcvt.s32.f32 %v47
    %v57 = vadd.f32 %v56, 0.5
    %v58 = vmul.f32 %v57, 0.125
    %v59 = vfloor.f32 %v58
    %vm60 = vcmp.eq.f32.partialorder %v54, %v59
    %vm61 = vcmp.eq.f32.partialorder %v55, %v59
    %vm62 = vcmp.le.s32.totalorder %v47, %v44
    %vm63 = vcmp.le.s32.totalorder %v47, %v45
    %vm64 = vmand %vm60, %vm62
    %vm65 = vmand %vm61, %vm63
    %v66 = vsel %vm64, 0.0, -1e+30
    %v67 = vsel %vm65, 0.0, -1e+30
    %v68 = vld [vmem:[%s6] sm:$0xff]
    %s69 = scalar_lea.vmem %s6, 8
    %v70 = vld [vmem:[%s69] sm:$0xff]
    %vm71 = vcmask 261120
    %v72 = vsel %vm71, %v40, 0.0
    %73 = vadd.xlane.f32.xlu0 %v72
    %v74 = vpop.xlane.xlu0 %73
    %v75 = vsel %vm71, %v41, 0.0
    %76 = vadd.xlane.f32.xlu0 %v75
    %v77 = vpop.xlane.xlu0 %76
    %v78 = vrcp.pop 32.0
    %v79 = vmul.f32 %v74, %v78
    %v80 = vmul.f32 %v77, %v78
    %v81 = vsub.f32 %v40, %v79
    %v82 = vsub.f32 %v41, %v80
    %v83 = vmul.f32 %v81, %v81
    %v84 = vmul.f32 %v82, %v82
    %v85 = vsel %vm71, %v83, 0.0
    %86 = vadd.xlane.f32.xlu0 %v85
    %v87 = vpop.xlane.xlu0 %86
    %v88 = vsel %vm71, %v84, 0.0
    %89 = vadd.xlane.f32.xlu0 %v88
    %v90 = vpop.xlane.xlu0 %89
    %v91 = vmul.f32 %v87, %v78
    %v92 = vmul.f32 %v90, %v78
    %v93 = vadd.f32 %v91, 1e-05
    %v94 = vadd.f32 %v92, 1e-05
    %v95 = vrsqrt.pop %v93
    %v96 = vrsqrt.pop %v94
    %v97 = vmul.f32 %v81, %v95
    %v98 = vmul.f32 %v82, %v96
    %v99 = vlaneseq
    %v100 = vshrl.u32 %v99, 7
    %v101 = vsub.s32 0, %v100
    %v102 = vrot.slane %v42, %v101
    %v103 = vmul.f32 %v97, %v102
    %v104 = vmul.f32 %v98, %v102
    %v105 = vlaneseq
    %v106 = vshrl.u32 %v105, 7
    %v107 = vsub.s32 1, %v106
    %v108 = vrot.slane %v42, %v107
    %v109 = vadd.f32 %v103, %v108
    %v110 = vadd.f32 %v104, %v108
    %v111 = vpack.c.bf16 %v110, %v109
    %v112 = vld [vmem:[%s1] sm:$0xff]
    %v113 = vld [vmem:[%s1 + $0x8] sm:$0xf]
    %v114 = vld [vmem:[%s1 + $0xc] sm:$0xff]
    %v115 = vld [vmem:[%s1 + $0x14] sm:$0xf]
    %v116 = vld [vmem:[%s1 + $0x18] sm:$0xff]
    %v117 = vld [vmem:[%s1 + $0x20] sm:$0xf]
    %v118 = vld [vmem:[%s1 + $0x24] sm:$0xff]
    %v119 = vld [vmem:[%s1 + $0x2c] sm:$0xf]
    %v128 = vunpack.c.l.b16 %v112
    %v129 = vunpack.c.h.b16 %v112
    %v130 = vunpack.c.l.b16 %v113
    %v131 = vunpack.c.l.b16 %v114
    %v132 = vunpack.c.h.b16 %v114
    %v133 = vunpack.c.l.b16 %v115
    %v134 = vunpack.c.l.b16 %v116
    %v135 = vunpack.c.h.b16 %v116
    %v136 = vunpack.c.l.b16 %v117
    %v137 = vunpack.c.l.b16 %v118
    %v138 = vunpack.c.h.b16 %v118
    %v139 = vunpack.c.l.b16 %v119
    %v140 = vpack.c.b16 %v131, %v128
    %v141 = vpack.c.b16 %v132, %v129
    %v142 = vpack.c.b16 %v133, %v130
    %v143 = vpack.c.b16 %v137, %v134
    %v144 = vpack.c.b16 %v138, %v135
    %v145 = vpack.c.b16 %v139, %v136
    %v153 = vsel %vm71, %v111, 0
    %155 = vmatprep.subr.bf16.mxu0 %v141
    %156 = vmatpush1.bf16.msra.mxu0 %v140
    %157 = vmatprep.subr.bf16.mxu0 %v144
    %158 = vmatpush1.bf16.msra.mxu0 %v143
    %159 = vmatprep.subr.bf16.mxu0 0
    %160 = vmatpush1.bf16.msra.mxu0 0
    %161 = vmatprep.subr.bf16.mxu0 0
    %162 = vmatpush1.bf16.msra.mxu0 0
    %163 = vmatprep.subr.bf16.mxu0 0
    %164 = vmatpush1.bf16.msra.mxu0 0
    %165 = vmatprep.subr.bf16.mxu0 0
    %166 = vmatpush1.bf16.msra.mxu0 0
    %167 = vmatprep.subr.bf16.mxu0 0
    %168 = vmatpush1.bf16.msra.mxu0 0
    %169 = vmatprep.subr.bf16.mxu0 0
    %170 = vmatpush1.bf16.msra.mxu0 0
    %171 = vmatprep.subr.bf16.mxu0 0
    %172 = vmatpush1.bf16.msra.mxu0 0
    %173 = vmatprep.subr.bf16.mxu0 0
    %174 = vmatpush1.bf16.msra.mxu0 0
    %175 = vmatprep.subr.bf16.mxu0 0
    %176 = vmatpush1.bf16.msra.mxu0 0
    %177 = vmatprep.subr.bf16.mxu0 0
    %178 = vmatpush1.bf16.msra.mxu0 0
    %179 = vmatprep.subr.bf16.mxu0 0
    %180 = vmatpush1.bf16.msra.mxu0 0
    %181 = vmatprep.subr.bf16.mxu0 0
    %182 = vmatpush1.bf16.msra.mxu0 0
    %183 = vmatprep.subr.bf16.mxu0 0
    %184 = vmatpush1.bf16.msra.mxu0 0
    %185 = vmatprep.subr.bf16.mxu0 0
    %186 = vmatpush1.bf16.msra.mxu0 0
    %187 = vmatprep.mubr.bf16.mxu0 0
    %188 = vmatmul.mubr.bf16.gmra.mrb[0].mxu0 %v153
    %v189 = vpop.f32.mrb[0].mxu0
    %v190 = vadd.f32 0.0, %v189
    %v191 = vpop.f32.mrb[0].mxu0
    %v192 = vadd.f32 0.0, %v191
    %v193 = vpop.f32.mrb[0].mxu0
    %v194 = vadd.f32 0.0, %v193
    %v195 = vpop.f32.mrb[0].mxu0
    %v196 = vadd.f32 0.0, %v195
    %197 = vdwg.mxu0
    %198 = vmatprep.subr.bf16.mxu0 0
    %199 = vmatpush1.bf16.msra.mxu0 %v142
    %200 = vmatprep.subr.bf16.mxu0 0
    %201 = vmatpush1.bf16.msra.mxu0 %v145
    %202 = vmatprep.subr.bf16.mxu0 0
    %203 = vmatpush1.bf16.msra.mxu0 0
    %204 = vmatprep.subr.bf16.mxu0 0
    %205 = vmatpush1.bf16.msra.mxu0 0
    %206 = vmatprep.subr.bf16.mxu0 0
    %207 = vmatpush1.bf16.msra.mxu0 0
    %208 = vmatprep.subr.bf16.mxu0 0
    %209 = vmatpush1.bf16.msra.mxu0 0
    %210 = vmatprep.subr.bf16.mxu0 0
    %211 = vmatpush1.bf16.msra.mxu0 0
    %212 = vmatprep.subr.bf16.mxu0 0
    %213 = vmatpush1.bf16.msra.mxu0 0
    %214 = vmatprep.subr.bf16.mxu0 0
    %215 = vmatpush1.bf16.msra.mxu0 0
    %216 = vmatprep.subr.bf16.mxu0 0
    %217 = vmatpush1.bf16.msra.mxu0 0
    %218 = vmatprep.subr.bf16.mxu0 0
    %219 = vmatpush1.bf16.msra.mxu0 0
    %220 = vmatprep.subr.bf16.mxu0 0
    %221 = vmatpush1.bf16.msra.mxu0 0
    %222 = vmatprep.subr.bf16.mxu0 0
    %223 = vmatpush1.bf16.msra.mxu0 0
    %224 = vmatprep.subr.bf16.mxu0 0
    %225 = vmatpush1.bf16.msra.mxu0 0
    %226 = vmatprep.subr.bf16.mxu0 0
    %227 = vmatpush1.bf16.msra.mxu0 0
    %228 = vmatprep.subr.bf16.mxu0 0
    %229 = vmatpush1.bf16.msra.mxu0 0
    %230 = vmatprep.mubr.bf16.mxu0 0
    %231 = vmatmul.mubr.bf16.gmra.mrb[0].mxu0 %v153
    %v232 = vpop.f32.mrb[0].mxu0
    %v233 = vadd.f32 0.0, %v232
    %v234 = vpop.f32.mrb[0].mxu0
    %v235 = vpop.f32.mrb[0].mxu0
    %v236 = vadd.f32 0.0, %v235
    %v237 = vpop.f32.mrb[0].mxu0
    %238 = vdwg.mxu0
    %v239 = vmul.f32 %v190, %v68
    %v240 = vmul.f32 %v194, %v68
    %242 = vrot.lane.b32.xlu0 %v70, 64
    %v243 = vpop.permute.xlu0 %242
    %v245 = vmul.f32 %v190, %v243
    %v246 = vmul.f32 %v194, %v243
    %249 = vrot.lane.b32.xlu0 %v245, 64
    %v250 = vpop.permute.xlu0 %249
    %251 = vrot.lane.b32.xlu0 %v246, 64
    %v252 = vpop.permute.xlu0 %251
    %v255 = vadd.f32 %v239, %v250
    %v256 = vadd.f32 %v240, %v252
    %v257 = vpack.c.bf16 %v256, %v255
    %v258 = vmul.f32 %v192, %v68
    %v259 = vmul.f32 %v196, %v68
    %v260 = vmul.f32 %v192, %v243
    %v261 = vmul.f32 %v196, %v243
    %264 = vrot.lane.b32.xlu0 %v260, 64
    %v265 = vpop.permute.xlu0 %264
    %266 = vrot.lane.b32.xlu0 %v261, 64
    %v267 = vpop.permute.xlu0 %266
    %v270 = vadd.f32 %v258, %v265
    %v271 = vadd.f32 %v259, %v267
    %272 = vxpose.xlu0.b32.start [1/16] %v270, 128
    %273 = vxpose.xlu0.b32.cont [2/16] %v271, 128
    %274 = vxpose.xlu0.b32.cont [3/16] 0.0, 128
    %275 = vxpose.xlu0.b32.cont [4/16] 0.0, 128
    %276 = vxpose.xlu0.b32.cont [5/16] 0.0, 128
    %277 = vxpose.xlu0.b32.cont [6/16] 0.0, 128
    %278 = vxpose.xlu0.b32.cont [7/16] 0.0, 128
    %279 = vxpose.xlu0.b32.cont [8/16] 0.0, 128
    %280 = vxpose.xlu0.b32.cont [9/16] 0.0, 128
    %281 = vxpose.xlu0.b32.cont [10/16] 0.0, 128
    %282 = vxpose.xlu0.b32.cont [11/16] 0.0, 128
    %283 = vxpose.xlu0.b32.cont [12/16] 0.0, 128
    %284 = vxpose.xlu0.b32.cont [13/16] 0.0, 128
    %285 = vxpose.xlu0.b32.cont [14/16] 0.0, 128
    %286 = vxpose.xlu0.b32.cont [15/16] 0.0, 128
    %287 = vxpose.xlu0.b32.end [16/16] 0.0, 128
    %v288 = vpop.trf.xlu0
    %v289 = vpop.trf.xlu0
    %v290 = vpop.trf.xlu0
    %v291 = vpop.trf.xlu0
    %v292 = vpop.trf.xlu0
    %v293 = vpop.trf.xlu0
    %v294 = vpop.trf.xlu0
    %v295 = vpop.trf.xlu0
    %v296 = vpop.trf.xlu0
    %v297 = vpop.trf.xlu0
    %v298 = vpop.trf.xlu0
    %v299 = vpop.trf.xlu0
    %v300 = vpop.trf.xlu0
    %v301 = vpop.trf.xlu0
    %v302 = vpop.trf.xlu0
    %v303 = vpop.trf.xlu0
    %v304 = vpack.c.bf16 %v289, %v288
    %v305 = vpack.c.bf16 %v291, %v290
    %v306 = vpack.c.bf16 %v293, %v292
    %v307 = vpack.c.bf16 %v295, %v294
    %v308 = vpack.c.bf16 %v236, %v233
    %vm309 = vcmask 130048
    %v311 = vsel %vm309, %v257, 0
    %313 = vmatprep.subr.bf16.mxu0 0
    %314 = vmatpush1.bf16.msra.mxu0 %v304
    %315 = vmatprep.subr.bf16.mxu0 0
    %316 = vmatpush1.bf16.msra.mxu0 0
    %317 = vmatprep.subr.bf16.mxu0 0
    %318 = vmatpush1.bf16.msra.mxu0 0
    %319 = vmatprep.subr.bf16.mxu0 0
    %320 = vmatpush1.bf16.msra.mxu0 0
    %321 = vmatprep.subr.bf16.mxu0 0
    %322 = vmatpush1.bf16.msra.mxu0 0
    %323 = vmatprep.subr.bf16.mxu0 0
    %324 = vmatpush1.bf16.msra.mxu0 0
    %325 = vmatprep.subr.bf16.mxu0 0
    %326 = vmatpush1.bf16.msra.mxu0 0
    %327 = vmatprep.subr.bf16.mxu0 0
    %328 = vmatpush1.bf16.msra.mxu0 0
    %329 = vmatprep.subr.bf16.mxu0 0
    %330 = vmatpush1.bf16.msra.mxu0 0
    %331 = vmatprep.subr.bf16.mxu0 0
    %332 = vmatpush1.bf16.msra.mxu0 0
    %333 = vmatprep.subr.bf16.mxu0 0
    %334 = vmatpush1.bf16.msra.mxu0 0
    %335 = vmatprep.subr.bf16.mxu0 0
    %336 = vmatpush1.bf16.msra.mxu0 0
    %337 = vmatprep.subr.bf16.mxu0 0
    %338 = vmatpush1.bf16.msra.mxu0 0
    %339 = vmatprep.subr.bf16.mxu0 0
    %340 = vmatpush1.bf16.msra.mxu0 0
    %341 = vmatprep.subr.bf16.mxu0 0
    %342 = vmatpush1.bf16.msra.mxu0 0
    %343 = vmatprep.subr.bf16.mxu0 0
    %344 = vmatpush1.bf16.msra.mxu0 0
    %345 = vmatprep.mubr.bf16.mxu0 0
    %346 = vmatmul.mubr.bf16.gmra.mrb[0].mxu0 %v311
    %v347 = vpop.f32.mrb[0].mxu0
    %v348 = vadd.f32 %v66, %v347
    %v349 = vpop.f32.mrb[0].mxu0
    %v350 = vpop.f32.mrb[0].mxu0
    %v351 = vadd.f32 %v67, %v350
    %v352 = vpop.f32.mrb[0].mxu0
    %353 = vdwg.mxu0
    %v354 = vsel %vm309, %v348, -inf
    %355 = vmax.xlane.f32.xlu0 %v354
    %v356 = vpop.xlane.xlu0 %355
    %v357 = vsel %vm309, %v351, -inf
    %358 = vmax.xlane.f32.xlu0 %v357
    %v359 = vpop.xlane.xlu0 %358
    %v360 = vsub.f32 %v348, %v356
    %v361 = vsub.f32 %v351, %v359
    %v362 = vmul.f32 %v360, 1.442695
    %v363 = vpow.pop %v362
    %v364 = vmul.f32 %v361, 1.442695
    %v365 = vpow.pop %v364
    %v366 = vsel %vm309, %v363, 0.0
    %367 = vadd.xlane.f32.xlu0 %v366
    %v368 = vpop.xlane.xlu0 %367
    %v369 = vsel %vm309, %v365, 0.0
    %370 = vadd.xlane.f32.xlu0 %v369
    %v371 = vpop.xlane.xlu0 %370
    %v372 = vrcp.pop %v368
    %v373 = vrcp.pop %v371
    %v374 = vpack.c.bf16 %v365, %v363
    %v376 = vsel %vm309, %v374, 0
    %378 = vmatprep.subr.bf16.mxu0 0
    %379 = vmatpush1.bf16.msra.mxu0 %v308
    %380 = vmatprep.subr.bf16.mxu0 0
    %381 = vmatpush1.bf16.msra.mxu0 0
    %382 = vmatprep.subr.bf16.mxu0 0
    %383 = vmatpush1.bf16.msra.mxu0 0
    %384 = vmatprep.subr.bf16.mxu0 0
    %385 = vmatpush1.bf16.msra.mxu0 0
    %386 = vmatprep.subr.bf16.mxu0 0
    %387 = vmatpush1.bf16.msra.mxu0 0
    %388 = vmatprep.subr.bf16.mxu0 0
    %389 = vmatpush1.bf16.msra.mxu0 0
    %390 = vmatprep.subr.bf16.mxu0 0
    %391 = vmatpush1.bf16.msra.mxu0 0
    %392 = vmatprep.subr.bf16.mxu0 0
    %393 = vmatpush1.bf16.msra.mxu0 0
    %394 = vmatprep.subr.bf16.mxu0 0
    %395 = vmatpush1.bf16.msra.mxu0 0
    %396 = vmatprep.subr.bf16.mxu0 0
    %397 = vmatpush1.bf16.msra.mxu0 0
    %398 = vmatprep.subr.bf16.mxu0 0
    %399 = vmatpush1.bf16.msra.mxu0 0
    %400 = vmatprep.subr.bf16.mxu0 0
    %401 = vmatpush1.bf16.msra.mxu0 0
    %402 = vmatprep.subr.bf16.mxu0 0
    %403 = vmatpush1.bf16.msra.mxu0 0
    %404 = vmatprep.subr.bf16.mxu0 0
    %405 = vmatpush1.bf16.msra.mxu0 0
    %406 = vmatprep.subr.bf16.mxu0 0
    %407 = vmatpush1.bf16.msra.mxu0 0
    %408 = vmatprep.subr.bf16.mxu0 0
    %409 = vmatpush1.bf16.msra.mxu0 0
    %410 = vmatprep.mubr.bf16.mxu0 0
    %411 = vmatmul.mubr.bf16.gmra.mrb[0].mxu0 %v376
    %v412 = vpop.f32.mrb[0].mxu0
    %v413 = vadd.f32 0.0, %v412
    %v414 = vpop.f32.mrb[0].mxu0
    %v415 = vpop.f32.mrb[0].mxu0
    %v416 = vadd.f32 0.0, %v415
    %v417 = vpop.f32.mrb[0].mxu0
    %418 = vdwg.mxu0
    %v419 = vmul.f32 %v413, %v372
    %v420 = vmul.f32 %v416, %v373
    %v421 = vpack.c.bf16 %v420, %v419
    %422 = vst.msk [vmem:[#allocation2] sm:$0xff] %vm309, %v421
    %424 = vrot.lane.b32.xlu0 %v257, 112
    %v425 = vpop.permute.xlu0 %424
    %v427 = vsel %vm309, %v425, 0
    %429 = vmatprep.subr.bf16.mxu0 0
    %430 = vmatpush1.bf16.msra.mxu0 %v305
    %431 = vmatprep.subr.bf16.mxu0 0
    %432 = vmatpush1.bf16.msra.mxu0 0
    %433 = vmatprep.subr.bf16.mxu0 0
    %434 = vmatpush1.bf16.msra.mxu0 0
    %435 = vmatprep.subr.bf16.mxu0 0
    %436 = vmatpush1.bf16.msra.mxu0 0
    %437 = vmatprep.subr.bf16.mxu0 0
    %438 = vmatpush1.bf16.msra.mxu0 0
    %439 = vmatprep.subr.bf16.mxu0 0
    %440 = vmatpush1.bf16.msra.mxu0 0
    %441 = vmatprep.subr.bf16.mxu0 0
    %442 = vmatpush1.bf16.msra.mxu0 0
    %443 = vmatprep.subr.bf16.mxu0 0
    %444 = vmatpush1.bf16.msra.mxu0 0
    %445 = vmatprep.subr.bf16.mxu0 0
    %446 = vmatpush1.bf16.msra.mxu0 0
    %447 = vmatprep.subr.bf16.mxu0 0
    %448 = vmatpush1.bf16.msra.mxu0 0
    %449 = vmatprep.subr.bf16.mxu0 0
    %450 = vmatpush1.bf16.msra.mxu0 0
    %451 = vmatprep.subr.bf16.mxu0 0
    %452 = vmatpush1.bf16.msra.mxu0 0
    %453 = vmatprep.subr.bf16.mxu0 0
    %454 = vmatpush1.bf16.msra.mxu0 0
    %455 = vmatprep.subr.bf16.mxu0 0
    %456 = vmatpush1.bf16.msra.mxu0 0
    %457 = vmatprep.subr.bf16.mxu0 0
    %458 = vmatpush1.bf16.msra.mxu0 0
    %459 = vmatprep.subr.bf16.mxu0 0
    %460 = vmatpush1.bf16.msra.mxu0 0
    %461 = vmatprep.mubr.bf16.mxu0 0
    %462 = vmatmul.mubr.bf16.gmra.mrb[0].mxu0 %v427
    %v463 = vpop.f32.mrb[0].mxu0
    %v464 = vadd.f32 %v66, %v463
    %v465 = vpop.f32.mrb[0].mxu0
    %v466 = vpop.f32.mrb[0].mxu0
    %v467 = vadd.f32 %v67, %v466
    %v468 = vpop.f32.mrb[0].mxu0
    %469 = vdwg.mxu0
    %v470 = vsel %vm309, %v464, -inf
    %471 = vmax.xlane.f32.xlu0 %v470
    %v472 = vpop.xlane.xlu0 %471
    %v473 = vsel %vm309, %v467, -inf
    %474 = vmax.xlane.f32.xlu0 %v473
    %v475 = vpop.xlane.xlu0 %474
    %v476 = vsub.f32 %v464, %v472
    %v477 = vsub.f32 %v467, %v475
    %v478 = vmul.f32 %v476, 1.442695
    %v479 = vpow.pop %v478
    %v480 = vmul.f32 %v477, 1.442695
    %v481 = vpow.pop %v480
    %v482 = vsel %vm309, %v479, 0.0
    %483 = vadd.xlane.f32.xlu0 %v482
    %v484 = vpop.xlane.xlu0 %483
    %v485 = vsel %vm309, %v481, 0.0
    %486 = vadd.xlane.f32.xlu0 %v485
    %v487 = vpop.xlane.xlu0 %486
    %v488 = vrcp.pop %v484
    %v489 = vrcp.pop %v487
    %v490 = vpack.c.bf16 %v481, %v479
    %492 = vrot.lane.b32.xlu0 %v308, 112
    %v493 = vpop.permute.xlu0 %492
    %v496 = vsel %vm309, %v490, 0
    %498 = vmatprep.subr.bf16.mxu0 0
    %499 = vmatpush1.bf16.msra.mxu0 %v493
    %500 = vmatprep.subr.bf16.mxu0 0
    %501 = vmatpush1.bf16.msra.mxu0 0
    %502 = vmatprep.subr.bf16.mxu0 0
    %503 = vmatpush1.bf16.msra.mxu0 0
    %504 = vmatprep.subr.bf16.mxu0 0
    %505 = vmatpush1.bf16.msra.mxu0 0
    %506 = vmatprep.subr.bf16.mxu0 0
    %507 = vmatpush1.bf16.msra.mxu0 0
    %508 = vmatprep.subr.bf16.mxu0 0
    %509 = vmatpush1.bf16.msra.mxu0 0
    %510 = vmatprep.subr.bf16.mxu0 0
    %511 = vmatpush1.bf16.msra.mxu0 0
    %512 = vmatprep.subr.bf16.mxu0 0
    %513 = vmatpush1.bf16.msra.mxu0 0
    %514 = vmatprep.subr.bf16.mxu0 0
    %515 = vmatpush1.bf16.msra.mxu0 0
    %516 = vmatprep.subr.bf16.mxu0 0
    %517 = vmatpush1.bf16.msra.mxu0 0
    %518 = vmatprep.subr.bf16.mxu0 0
    %519 = vmatpush1.bf16.msra.mxu0 0
    %520 = vmatprep.subr.bf16.mxu0 0
    %521 = vmatpush1.bf16.msra.mxu0 0
    %522 = vmatprep.subr.bf16.mxu0 0
    %523 = vmatpush1.bf16.msra.mxu0 0
    %524 = vmatprep.subr.bf16.mxu0 0
    %525 = vmatpush1.bf16.msra.mxu0 0
    %526 = vmatprep.subr.bf16.mxu0 0
    %527 = vmatpush1.bf16.msra.mxu0 0
    %528 = vmatprep.subr.bf16.mxu0 0
    %529 = vmatpush1.bf16.msra.mxu0 0
    %530 = vmatprep.mubr.bf16.mxu0 0
    %531 = vmatmul.mubr.bf16.gmra.mrb[0].mxu0 %v496
    %v532 = vpop.f32.mrb[0].mxu0
    %v533 = vadd.f32 0.0, %v532
    %v534 = vpop.f32.mrb[0].mxu0
    %v535 = vpop.f32.mrb[0].mxu0
    %v536 = vadd.f32 0.0, %v535
    %v537 = vpop.f32.mrb[0].mxu0
    %538 = vdwg.mxu0
    %v539 = vmul.f32 %v533, %v488
    %v540 = vmul.f32 %v536, %v489
    %v541 = vpack.c.bf16 %v540, %v539
    %543 = vrot.lane.b32.xlu0 %v541, 16
    %v544 = vpop.permute.xlu0 %543
    %vm546 = vcmask 261248
    %547 = vst.msk [vmem:[#allocation2] sm:$0xff] %vm546, %v544
    %548 = vrot.lane.b32.xlu0 %v257, 96
    %v549 = vpop.permute.xlu0 %548
    %v551 = vsel %vm309, %v549, 0
    %553 = vmatprep.subr.bf16.mxu0 0
    %554 = vmatpush1.bf16.msra.mxu0 %v306
    %555 = vmatprep.subr.bf16.mxu0 0
    %556 = vmatpush1.bf16.msra.mxu0 0
    %557 = vmatprep.subr.bf16.mxu0 0
    %558 = vmatpush1.bf16.msra.mxu0 0
    %559 = vmatprep.subr.bf16.mxu0 0
    %560 = vmatpush1.bf16.msra.mxu0 0
    %561 = vmatprep.subr.bf16.mxu0 0
    %562 = vmatpush1.bf16.msra.mxu0 0
    %563 = vmatprep.subr.bf16.mxu0 0
    %564 = vmatpush1.bf16.msra.mxu0 0
    %565 = vmatprep.subr.bf16.mxu0 0
    %566 = vmatpush1.bf16.msra.mxu0 0
    %567 = vmatprep.subr.bf16.mxu0 0
    %568 = vmatpush1.bf16.msra.mxu0 0
    %569 = vmatprep.subr.bf16.mxu0 0
    %570 = vmatpush1.bf16.msra.mxu0 0
    %571 = vmatprep.subr.bf16.mxu0 0
    %572 = vmatpush1.bf16.msra.mxu0 0
    %573 = vmatprep.subr.bf16.mxu0 0
    %574 = vmatpush1.bf16.msra.mxu0 0
    %575 = vmatprep.subr.bf16.mxu0 0
    %576 = vmatpush1.bf16.msra.mxu0 0
    %577 = vmatprep.subr.bf16.mxu0 0
    %578 = vmatpush1.bf16.msra.mxu0 0
    %579 = vmatprep.subr.bf16.mxu0 0
    %580 = vmatpush1.bf16.msra.mxu0 0
    %581 = vmatprep.subr.bf16.mxu0 0
    %582 = vmatpush1.bf16.msra.mxu0 0
    %583 = vmatprep.subr.bf16.mxu0 0
    %584 = vmatpush1.bf16.msra.mxu0 0
    %585 = vmatprep.mubr.bf16.mxu0 0
    %586 = vmatmul.mubr.bf16.gmra.mrb[0].mxu0 %v551
    %v587 = vpop.f32.mrb[0].mxu0
    %v588 = vadd.f32 %v66, %v587
    %v589 = vpop.f32.mrb[0].mxu0
    %v590 = vpop.f32.mrb[0].mxu0
    %v591 = vadd.f32 %v67, %v590
    %v592 = vpop.f32.mrb[0].mxu0
    %593 = vdwg.mxu0
    %v594 = vsel %vm309, %v588, -inf
    %595 = vmax.xlane.f32.xlu0 %v594
    %v596 = vpop.xlane.xlu0 %595
    %v597 = vsel %vm309, %v591, -inf
    %598 = vmax.xlane.f32.xlu0 %v597
    %v599 = vpop.xlane.xlu0 %598
    %v600 = vsub.f32 %v588, %v596
    %v601 = vsub.f32 %v591, %v599
    %v602 = vmul.f32 %v600, 1.442695
    %v603 = vpow.pop %v602
    %v604 = vmul.f32 %v601, 1.442695
    %v605 = vpow.pop %v604
    %v606 = vsel %vm309, %v603, 0.0
    %607 = vadd.xlane.f32.xlu0 %v606
    %v608 = vpop.xlane.xlu0 %607
    %v609 = vsel %vm309, %v605, 0.0
    %610 = vadd.xlane.f32.xlu0 %v609
    %v611 = vpop.xlane.xlu0 %610
    %v612 = vrcp.pop %v608
    %v613 = vrcp.pop %v611
    %v614 = vpack.c.bf16 %v605, %v603
    %615 = vrot.lane.b32.xlu0 %v308, 96
    %v616 = vpop.permute.xlu0 %615
    %v619 = vsel %vm309, %v614, 0
    %621 = vmatprep.subr.bf16.mxu0 0
    %622 = vmatpush1.bf16.msra.mxu0 %v616
    %623 = vmatprep.subr.bf16.mxu0 0
    %624 = vmatpush1.bf16.msra.mxu0 0
    %625 = vmatprep.subr.bf16.mxu0 0
    %626 = vmatpush1.bf16.msra.mxu0 0
    %627 = vmatprep.subr.bf16.mxu0 0
    %628 = vmatpush1.bf16.msra.mxu0 0
    %629 = vmatprep.subr.bf16.mxu0 0
    %630 = vmatpush1.bf16.msra.mxu0 0
    %631 = vmatprep.subr.bf16.mxu0 0
    %632 = vmatpush1.bf16.msra.mxu0 0
    %633 = vmatprep.subr.bf16.mxu0 0
    %634 = vmatpush1.bf16.msra.mxu0 0
    %635 = vmatprep.subr.bf16.mxu0 0
    %636 = vmatpush1.bf16.msra.mxu0 0
    %637 = vmatprep.subr.bf16.mxu0 0
    %638 = vmatpush1.bf16.msra.mxu0 0
    %639 = vmatprep.subr.bf16.mxu0 0
    %640 = vmatpush1.bf16.msra.mxu0 0
    %641 = vmatprep.subr.bf16.mxu0 0
    %642 = vmatpush1.bf16.msra.mxu0 0
    %643 = vmatprep.subr.bf16.mxu0 0
    %644 = vmatpush1.bf16.msra.mxu0 0
    %645 = vmatprep.subr.bf16.mxu0 0
    %646 = vmatpush1.bf16.msra.mxu0 0
    %647 = vmatprep.subr.bf16.mxu0 0
    %648 = vmatpush1.bf16.msra.mxu0 0
    %649 = vmatprep.subr.bf16.mxu0 0
    %650 = vmatpush1.bf16.msra.mxu0 0
    %651 = vmatprep.subr.bf16.mxu0 0
    %652 = vmatpush1.bf16.msra.mxu0 0
    %653 = vmatprep.mubr.bf16.mxu0 0
    %654 = vmatmul.mubr.bf16.gmra.mrb[0].mxu0 %v619
    %v655 = vpop.f32.mrb[0].mxu0
    %v656 = vadd.f32 0.0, %v655
    %v657 = vpop.f32.mrb[0].mxu0
    %v658 = vpop.f32.mrb[0].mxu0
    %v659 = vadd.f32 0.0, %v658
    %v660 = vpop.f32.mrb[0].mxu0
    %661 = vdwg.mxu0
    %v662 = vmul.f32 %v656, %v612
    %v663 = vmul.f32 %v659, %v613
    %v664 = vpack.c.bf16 %v663, %v662
    %666 = vrot.lane.b32.xlu0 %v664, 32
    %v667 = vpop.permute.xlu0 %666
    %vm669 = vcmask 392448
    %670 = vst.msk [vmem:[#allocation2] sm:$0xff] %vm669, %v667
    %671 = vrot.lane.b32.xlu0 %v257, 80
    %v672 = vpop.permute.xlu0 %671
    %v674 = vsel %vm309, %v672, 0
    %676 = vmatprep.subr.bf16.mxu0 0
    %677 = vmatpush1.bf16.msra.mxu0 %v307
    %678 = vmatprep.subr.bf16.mxu0 0
    %679 = vmatpush1.bf16.msra.mxu0 0
    %680 = vmatprep.subr.bf16.mxu0 0
    %681 = vmatpush1.bf16.msra.mxu0 0
    %682 = vmatprep.subr.bf16.mxu0 0
    %683 = vmatpush1.bf16.msra.mxu0 0
    %684 = vmatprep.subr.bf16.mxu0 0
    %685 = vmatpush1.bf16.msra.mxu0 0
    %686 = vmatprep.subr.bf16.mxu0 0
    %687 = vmatpush1.bf16.msra.mxu0 0
    %688 = vmatprep.subr.bf16.mxu0 0
    %689 = vmatpush1.bf16.msra.mxu0 0
    %690 = vmatprep.subr.bf16.mxu0 0
    %691 = vmatpush1.bf16.msra.mxu0 0
    %692 = vmatprep.subr.bf16.mxu0 0
    %693 = vmatpush1.bf16.msra.mxu0 0
    %694 = vmatprep.subr.bf16.mxu0 0
    %695 = vmatpush1.bf16.msra.mxu0 0
    %696 = vmatprep.subr.bf16.mxu0 0
    %697 = vmatpush1.bf16.msra.mxu0 0
    %698 = vmatprep.subr.bf16.mxu0 0
    %699 = vmatpush1.bf16.msra.mxu0 0
    %700 = vmatprep.subr.bf16.mxu0 0
    %701 = vmatpush1.bf16.msra.mxu0 0
    %702 = vmatprep.subr.bf16.mxu0 0
    %703 = vmatpush1.bf16.msra.mxu0 0
    %704 = vmatprep.subr.bf16.mxu0 0
    %705 = vmatpush1.bf16.msra.mxu0 0
    %706 = vmatprep.subr.bf16.mxu0 0
    %707 = vmatpush1.bf16.msra.mxu0 0
    %708 = vmatprep.mubr.bf16.mxu0 0
    %709 = vmatmul.mubr.bf16.gmra.mrb[0].mxu0 %v674
    %v710 = vpop.f32.mrb[0].mxu0
    %v711 = vadd.f32 %v66, %v710
    %v712 = vpop.f32.mrb[0].mxu0
    %v713 = vpop.f32.mrb[0].mxu0
    %v714 = vadd.f32 %v67, %v713
    %v715 = vpop.f32.mrb[0].mxu0
    %716 = vdwg.mxu0
    %v717 = vsel %vm309, %v711, -inf
    %718 = vmax.xlane.f32.xlu0 %v717
    %v719 = vpop.xlane.xlu0 %718
    %v720 = vsel %vm309, %v714, -inf
    %721 = vmax.xlane.f32.xlu0 %v720
    %v722 = vpop.xlane.xlu0 %721
    %v723 = vsub.f32 %v711, %v719
    %v724 = vsub.f32 %v714, %v722
    %v725 = vmul.f32 %v723, 1.442695
    %v726 = vpow.pop %v725
    %v727 = vmul.f32 %v724, 1.442695
    %v728 = vpow.pop %v727
    %v729 = vsel %vm309, %v726, 0.0
    %730 = vadd.xlane.f32.xlu0 %v729
    %v731 = vpop.xlane.xlu0 %730
    %v732 = vsel %vm309, %v728, 0.0
    %733 = vadd.xlane.f32.xlu0 %v732
    %v734 = vpop.xlane.xlu0 %733
    %v735 = vrcp.pop %v731
    %v736 = vrcp.pop %v734
    %v737 = vpack.c.bf16 %v728, %v726
    %738 = vrot.lane.b32.xlu0 %v308, 80
    %v739 = vpop.permute.xlu0 %738
    %v742 = vsel %vm309, %v737, 0
    %744 = vmatprep.subr.bf16.mxu0 0
    %745 = vmatpush1.bf16.msra.mxu0 %v739
    %746 = vmatprep.subr.bf16.mxu0 0
    %747 = vmatpush1.bf16.msra.mxu0 0
    %748 = vmatprep.subr.bf16.mxu0 0
    %749 = vmatpush1.bf16.msra.mxu0 0
    %750 = vmatprep.subr.bf16.mxu0 0
    %751 = vmatpush1.bf16.msra.mxu0 0
    %752 = vmatprep.subr.bf16.mxu0 0
    %753 = vmatpush1.bf16.msra.mxu0 0
    %754 = vmatprep.subr.bf16.mxu0 0
    %755 = vmatpush1.bf16.msra.mxu0 0
    %756 = vmatprep.subr.bf16.mxu0 0
    %757 = vmatpush1.bf16.msra.mxu0 0
    %758 = vmatprep.subr.bf16.mxu0 0
    %759 = vmatpush1.bf16.msra.mxu0 0
    %760 = vmatprep.subr.bf16.mxu0 0
    %761 = vmatpush1.bf16.msra.mxu0 0
    %762 = vmatprep.subr.bf16.mxu0 0
    %763 = vmatpush1.bf16.msra.mxu0 0
    %764 = vmatprep.subr.bf16.mxu0 0
    %765 = vmatpush1.bf16.msra.mxu0 0
    %766 = vmatprep.subr.bf16.mxu0 0
    %767 = vmatpush1.bf16.msra.mxu0 0
    %768 = vmatprep.subr.bf16.mxu0 0
    %769 = vmatpush1.bf16.msra.mxu0 0
    %770 = vmatprep.subr.bf16.mxu0 0
    %771 = vmatpush1.bf16.msra.mxu0 0
    %772 = vmatprep.subr.bf16.mxu0 0
    %773 = vmatpush1.bf16.msra.mxu0 0
    %774 = vmatprep.subr.bf16.mxu0 0
    %775 = vmatpush1.bf16.msra.mxu0 0
    %776 = vmatprep.mubr.bf16.mxu0 0
    %777 = vmatmul.mubr.bf16.gmra.mrb[0].mxu0 %v742
    %v778 = vpop.f32.mrb[0].mxu0
    %v779 = vadd.f32 0.0, %v778
    %v780 = vpop.f32.mrb[0].mxu0
    %v781 = vpop.f32.mrb[0].mxu0
    %v782 = vadd.f32 0.0, %v781
    %v783 = vpop.f32.mrb[0].mxu0
    %784 = vdwg.mxu0
    %v785 = vmul.f32 %v779, %v735
    %v786 = vmul.f32 %v782, %v736
    %v787 = vpack.c.bf16 %v786, %v785
    %789 = vrot.lane.b32.xlu0 %v787, 48
    %v790 = vpop.permute.xlu0 %789
    %vm792 = vcmask 523648
    %793 = vst.msk [vmem:[#allocation2] sm:$0xff] %vm792, %v790
    %v794 = vld [vmem:[#allocation2] sm:$0xff]
    %v795 = vld [vmem:[%s2] sm:$0xf]
    %v796 = vld [vmem:[%s2 + $0x4] sm:$0xf]
    %v797 = vld [vmem:[%s2 + $0x8] sm:$0xf]
    %v798 = vld [vmem:[%s2 + $0xc] sm:$0xf]
    %v799 = vld [vmem:[%s2 + $0x10] sm:$0xf]
    %v800 = vld [vmem:[%s2 + $0x14] sm:$0xf]
    %v801 = vld [vmem:[%s2 + $0x18] sm:$0xf]
    %v802 = vld [vmem:[%s2 + $0x1c] sm:$0xf]
    %v811 = vunpack.c.l.b16 %v795
    %v812 = vunpack.c.l.b16 %v796
    %v813 = vunpack.c.l.b16 %v797
    %v814 = vunpack.c.l.b16 %v798
    %v815 = vunpack.c.l.b16 %v799
    %v816 = vunpack.c.l.b16 %v800
    %v817 = vunpack.c.l.b16 %v801
    %v818 = vunpack.c.l.b16 %v802
    %v819 = vpack.c.b16 %v812, %v811
    %v820 = vpack.c.b16 %v814, %v813
    %v821 = vpack.c.b16 %v816, %v815
    %v822 = vpack.c.b16 %v818, %v817
    %vm827 = vcmask 523264
    %v829 = vsel %vm827, %v794, 0
    %831 = vmatprep.subr.bf16.mxu0 0
    %832 = vmatpush1.bf16.msra.mxu0 %v819
    %833 = vmatprep.subr.bf16.mxu0 0
    %834 = vmatpush1.bf16.msra.mxu0 %v820
    %835 = vmatprep.subr.bf16.mxu0 0
    %836 = vmatpush1.bf16.msra.mxu0 %v821
    %837 = vmatprep.subr.bf16.mxu0 0
    %838 = vmatpush1.bf16.msra.mxu0 %v822
    %839 = vmatprep.subr.bf16.mxu0 0
    %840 = vmatpush1.bf16.msra.mxu0 0
    %841 = vmatprep.subr.bf16.mxu0 0
    %842 = vmatpush1.bf16.msra.mxu0 0
    %843 = vmatprep.subr.bf16.mxu0 0
    %844 = vmatpush1.bf16.msra.mxu0 0
    %845 = vmatprep.subr.bf16.mxu0 0
    %846 = vmatpush1.bf16.msra.mxu0 0
    %847 = vmatprep.subr.bf16.mxu0 0
    %848 = vmatpush1.bf16.msra.mxu0 0
    %849 = vmatprep.subr.bf16.mxu0 0
    %850 = vmatpush1.bf16.msra.mxu0 0
    %851 = vmatprep.subr.bf16.mxu0 0
    %852 = vmatpush1.bf16.msra.mxu0 0
    %853 = vmatprep.subr.bf16.mxu0 0
    %854 = vmatpush1.bf16.msra.mxu0 0
    %855 = vmatprep.subr.bf16.mxu0 0
    %856 = vmatpush1.bf16.msra.mxu0 0
    %857 = vmatprep.subr.bf16.mxu0 0
    %858 = vmatpush1.bf16.msra.mxu0 0
    %859 = vmatprep.subr.bf16.mxu0 0
    %860 = vmatpush1.bf16.msra.mxu0 0
    %861 = vmatprep.subr.bf16.mxu0 0
    %862 = vmatpush1.bf16.msra.mxu0 0
    %863 = vmatprep.mubr.bf16.mxu0 0
    %864 = vmatmul.mubr.bf16.gmra.mrb[0].mxu0 %v829
    %v865 = vpop.f32.mrb[0].mxu0
    %v866 = vadd.f32 0.0, %v865
    %v867 = vpop.f32.mrb[0].mxu0
    %v868 = vpop.f32.mrb[0].mxu0
    %v869 = vadd.f32 0.0, %v868
    %v870 = vpop.f32.mrb[0].mxu0
    %871 = vdwg.mxu0
    %v872 = vadd.f32 %v40, %v866
    %v873 = vadd.f32 %v41, %v869
    %v874 = vsel %vm71, %v872, 0.0
    %875 = vadd.xlane.f32.xlu0 %v874
    %v876 = vpop.xlane.xlu0 %875
    %v877 = vsel %vm71, %v873, 0.0
    %878 = vadd.xlane.f32.xlu0 %v877
    %v879 = vpop.xlane.xlu0 %878
    %v880 = vmul.f32 %v876, %v78
    %v881 = vmul.f32 %v879, %v78
    %v882 = vsub.f32 %v872, %v880
    %v883 = vsub.f32 %v873, %v881
    %v884 = vmul.f32 %v882, %v882
    %v885 = vmul.f32 %v883, %v883
    %v886 = vsel %vm71, %v884, 0.0
    %887 = vadd.xlane.f32.xlu0 %v886
    %v888 = vpop.xlane.xlu0 %887
    %v889 = vsel %vm71, %v885, 0.0
    %890 = vadd.xlane.f32.xlu0 %v889
    %v891 = vpop.xlane.xlu0 %890
    %v892 = vmul.f32 %v888, %v78
    %v893 = vmul.f32 %v891, %v78
    %v894 = vadd.f32 %v892, 1e-05
    %v895 = vadd.f32 %v893, 1e-05
    %v896 = vrsqrt.pop %v894
    %v897 = vrsqrt.pop %v895
    %v898 = vmul.f32 %v882, %v896
    %v899 = vmul.f32 %v883, %v897
    %v900 = vlaneseq
    %v901 = vshrl.u32 %v900, 7
    %v902 = vsub.s32 2, %v901
    %v903 = vrot.slane %v42, %v902
    %v904 = vmul.f32 %v898, %v903
    %v905 = vmul.f32 %v899, %v903
    %v906 = vlaneseq
    %v907 = vshrl.u32 %v906, 7
    %v908 = vsub.s32 3, %v907
    %v909 = vrot.slane %v42, %v908
    %v910 = vadd.f32 %v904, %v909
    %v911 = vadd.f32 %v905, %v909
    %v912 = vpack.c.bf16 %v911, %v910
    %v913 = vld [vmem:[%s3] sm:$0xf]
    %v914 = vld [vmem:[%s3 + $0x4] sm:$0xf]
    %v915 = vld [vmem:[%s3 + $0x8] sm:$0xf]
    %v916 = vld [vmem:[%s3 + $0xc] sm:$0xf]
    %v917 = vlaneseq
    %v918 = vshrl.u32 %v917, 7
    %v919 = vsub.s32 5, %v918
    %v920 = vrot.slane %v42, %v919
    %v925 = vunpack.c.l.b16 %v913
    %v926 = vunpack.c.l.b16 %v914
    %v927 = vunpack.c.l.b16 %v915
    %v928 = vunpack.c.l.b16 %v916
    %v929 = vpack.c.b16 %v926, %v925
    %v930 = vpack.c.b16 %v928, %v927
    %v934 = vsel %vm71, %v912, 0
    %936 = vmatprep.subr.bf16.mxu0 0
    %937 = vmatpush1.bf16.msra.mxu0 %v929
    %938 = vmatprep.subr.bf16.mxu0 0
    %939 = vmatpush1.bf16.msra.mxu0 %v930
    %940 = vmatprep.subr.bf16.mxu0 0
    %941 = vmatpush1.bf16.msra.mxu0 0
    %942 = vmatprep.subr.bf16.mxu0 0
    %943 = vmatpush1.bf16.msra.mxu0 0
    %944 = vmatprep.subr.bf16.mxu0 0
    %945 = vmatpush1.bf16.msra.mxu0 0
    %946 = vmatprep.subr.bf16.mxu0 0
    %947 = vmatpush1.bf16.msra.mxu0 0
    %948 = vmatprep.subr.bf16.mxu0 0
    %949 = vmatpush1.bf16.msra.mxu0 0
    %950 = vmatprep.subr.bf16.mxu0 0
    %951 = vmatpush1.bf16.msra.mxu0 0
    %952 = vmatprep.subr.bf16.mxu0 0
    %953 = vmatpush1.bf16.msra.mxu0 0
    %954 = vmatprep.subr.bf16.mxu0 0
    %955 = vmatpush1.bf16.msra.mxu0 0
    %956 = vmatprep.subr.bf16.mxu0 0
    %957 = vmatpush1.bf16.msra.mxu0 0
    %958 = vmatprep.subr.bf16.mxu0 0
    %959 = vmatpush1.bf16.msra.mxu0 0
    %960 = vmatprep.subr.bf16.mxu0 0
    %961 = vmatpush1.bf16.msra.mxu0 0
    %962 = vmatprep.subr.bf16.mxu0 0
    %963 = vmatpush1.bf16.msra.mxu0 0
    %964 = vmatprep.subr.bf16.mxu0 0
    %965 = vmatpush1.bf16.msra.mxu0 0
    %966 = vmatprep.subr.bf16.mxu0 0
    %967 = vmatpush1.bf16.msra.mxu0 0
    %968 = vmatprep.mubr.bf16.mxu0 0
    %969 = vmatmul.mubr.bf16.gmra.mrb[0].mxu0 %v934
    %v970 = vpop.f32.mrb[0].mxu0
    %v971 = vadd.f32 %v920, %v970
    %v972 = vpop.f32.mrb[0].mxu0
    %v973 = vpop.f32.mrb[0].mxu0
    %v974 = vadd.f32 %v920, %v973
    %v975 = vpop.f32.mrb[0].mxu0
    %976 = vdwg.mxu0
    %v977 = vmul.f32 %v971, 0.70710677
    %v978 = vmul.f32 %v974, 0.70710677
    %v979 = vand.u32 2147483647, %v977
    %v980 = vand.u32 2147483647, %v978
    %v981 = vmul.f32 %v979, 0.3275911
    %v982 = vmul.f32 %v980, 0.3275911
    %v983 = vadd.f32 %v981, 1.0
    %v984 = vadd.f32 %v982, 1.0
    %v985 = vrcp.pop %v983
    %v986 = vmul.f32 1.0, %v985
    %v987 = vrcp.pop %v984
    %v988 = vmul.f32 1.0, %v987
    %v989 = vmul.f32 %v986, 1.0614054
    %v990 = vmul.f32 %v988, 1.0614054
    %v991 = vadd.f32 %v989, -1.4531521
    %v992 = vadd.f32 %v990, -1.4531521
    %v993 = vmul.f32 %v986, %v991
    %v994 = vmul.f32 %v988, %v992
    %v995 = vadd.f32 %v993, 1.4214138
    %v996 = vadd.f32 %v994, 1.4214138
    %v997 = vmul.f32 %v986, %v995
    %v998 = vmul.f32 %v988, %v996
    %v999 = vadd.f32 %v997, -0.28449672
    %v1000 = vadd.f32 %v998, -0.28449672
    %v1001 = vmul.f32 %v986, %v999
    %v1002 = vmul.f32 %v988, %v1000
    %v1003 = vadd.f32 %v1001, 0.2548296
    %v1004 = vadd.f32 %v1002, 0.2548296
    %v1005 = vmul.f32 %v986, %v1003
    %v1006 = vmul.f32 %v988, %v1004
    %v1007 = vsub.f32 0.0, %v979
    %v1008 = vsub.f32 0.0, %v980
    %v1009 = vmul.f32 %v1007, %v979
    %v1010 = vmul.f32 %v1008, %v980
    %v1011 = vmul.f32 %v1009, 1.442695
    %v1012 = vpow.pop %v1011
    %v1013 = vmul.f32 %v1010, 1.442695
    %v1014 = vpow.pop %v1013
    %v1015 = vmul.f32 %v1005, %v1012
    %v1016 = vmul.f32 %v1006, %v1014
    %v1017 = vsub.f32 1.0, %v1015
    %v1018 = vsub.f32 1.0, %v1016
    %vm1019 = vcmp.lt.f32.partialorder %v977, 0.0
    %vm1020 = vcmp.lt.f32.partialorder %v978, 0.0
    %v1021 = vsub.f32 0.0, %v1017
    %v1022 = vsub.f32 0.0, %v1018
    %v1023 = vsel %vm1019, %v1021, %v1017
    %v1024 = vsel %vm1020, %v1022, %v1018
    %v1025 = vmul.f32 %v971, 0.5
    %v1026 = vmul.f32 %v974, 0.5
    %v1027 = vadd.f32 %v1023, 1.0
    %v1028 = vadd.f32 %v1024, 1.0
    %v1029 = vmul.f32 %v1025, %v1027
    %v1030 = vmul.f32 %v1026, %v1028
    %v1031 = vpack.c.bf16 %v1030, %v1029
    %v1032 = vld [vmem:[%s4] sm:$0xf]
    %v1033 = vld [vmem:[%s4 + $0x4] sm:$0xf]
    %v1034 = vld [vmem:[%s4 + $0x8] sm:$0xf]
    %v1035 = vld [vmem:[%s4 + $0xc] sm:$0xf]
    %v1036 = vld [vmem:[%s4 + $0x10] sm:$0xf]
    %v1037 = vld [vmem:[%s4 + $0x14] sm:$0xf]
    %v1038 = vld [vmem:[%s4 + $0x18] sm:$0xf]
    %v1039 = vld [vmem:[%s4 + $0x1c] sm:$0xf]
    %v1040 = vlaneseq
    %v1041 = vshrl.u32 %v1040, 7
    %v1042 = vsub.s32 4, %v1041
    %v1043 = vrot.slane %v42, %v1042
    %v1052 = vunpack.c.l.b16 %v1032
    %v1053 = vunpack.c.l.b16 %v1033
    %v1054 = vunpack.c.l.b16 %v1034
    %v1055 = vunpack.c.l.b16 %v1035
    %v1056 = vunpack.c.l.b16 %v1036
    %v1057 = vunpack.c.l.b16 %v1037
    %v1058 = vunpack.c.l.b16 %v1038
    %v1059 = vunpack.c.l.b16 %v1039
    %v1060 = vpack.c.b16 %v1053, %v1052
    %v1061 = vpack.c.b16 %v1055, %v1054
    %v1062 = vpack.c.b16 %v1057, %v1056
    %v1063 = vpack.c.b16 %v1059, %v1058
    %v1069 = vsel %vm827, %v1031, 0
    %1071 = vmatprep.subr.bf16.mxu0 0
    %1072 = vmatpush1.bf16.msra.mxu0 %v1060
    %1073 = vmatprep.subr.bf16.mxu0 0
    %1074 = vmatpush1.bf16.msra.mxu0 %v1061
    %1075 = vmatprep.subr.bf16.mxu0 0
    %1076 = vmatpush1.bf16.msra.mxu0 %v1062
    %1077 = vmatprep.subr.bf16.mxu0 0
    %1078 = vmatpush1.bf16.msra.mxu0 %v1063
    %1079 = vmatprep.subr.bf16.mxu0 0
    %1080 = vmatpush1.bf16.msra.mxu0 0
    %1081 = vmatprep.subr.bf16.mxu0 0
    %1082 = vmatpush1.bf16.msra.mxu0 0
    %1083 = vmatprep.subr.bf16.mxu0 0
    %1084 = vmatpush1.bf16.msra.mxu0 0
    %1085 = vmatprep.subr.bf16.mxu0 0
    %1086 = vmatpush1.bf16.msra.mxu0 0
    %1087 = vmatprep.subr.bf16.mxu0 0
    %1088 = vmatpush1.bf16.msra.mxu0 0
    %1089 = vmatprep.subr.bf16.mxu0 0
    %1090 = vmatpush1.bf16.msra.mxu0 0
    %1091 = vmatprep.subr.bf16.mxu0 0
    %1092 = vmatpush1.bf16.msra.mxu0 0
    %1093 = vmatprep.subr.bf16.mxu0 0
    %1094 = vmatpush1.bf16.msra.mxu0 0
    %1095 = vmatprep.subr.bf16.mxu0 0
    %1096 = vmatpush1.bf16.msra.mxu0 0
    %1097 = vmatprep.subr.bf16.mxu0 0
    %1098 = vmatpush1.bf16.msra.mxu0 0
    %1099 = vmatprep.subr.bf16.mxu0 0
    %1100 = vmatpush1.bf16.msra.mxu0 0
    %1101 = vmatprep.subr.bf16.mxu0 0
    %1102 = vmatpush1.bf16.msra.mxu0 0
    %1103 = vmatprep.mubr.bf16.mxu0 0
    %1104 = vmatmul.mubr.bf16.gmra.mrb[0].mxu0 %v1069
    %v1105 = vpop.f32.mrb[0].mxu0
    %v1106 = vadd.f32 %v1043, %v1105
    %v1107 = vpop.f32.mrb[0].mxu0
    %v1108 = vpop.f32.mrb[0].mxu0
    %v1109 = vadd.f32 %v1043, %v1108
    %v1110 = vpop.f32.mrb[0].mxu0
    %1111 = vdwg.mxu0
    %v1112 = vadd.f32 %v872, %v1106
    %v1113 = vadd.f32 %v873, %v1109
    %1114 = vst.msk [vmem:[#allocation6] sm:$0xff] %vm71, %v1112
    %1115 = vst.msk [vmem:[#allocation6 + $0x8] sm:$0xff] %vm71, %v1113
    // Predicated region
    $region34: #{tpu_custom_call.1} parent=1 // pred_check
      _
    $region35: #{tpu_custom_call.1} parent=1 // pred_check_branch
      %1117 = sbr.rel (0) target = $region37
    $region36: #{tpu_custom_call.1} parent=1 // pred_region
      %s1119 = ssub.s32 256, 256
      %1120 = vsyncadd [#allocation5], %s1119
      %s1121 = sshll.u32 [#allocation6], 4
      %s1122 = int_to_ptr.vmem [resolvable:$true] %s1121
      %1127 = dma.vmem_to_hbm [thread:$0]  %s1122, 256, %s7, [#allocation5], 128, 128, 8
    $region37: #{tpu_custom_call.1} parent=1 // pred_fallthru
      _
    // Predicated region
    $region38: #{tpu_custom_call.1} parent=1 // pred_check
      _
    $region39: #{tpu_custom_call.1} parent=1 // pred_check_branch
      %1129 = sbr.rel (0) target = $region41
    $region40: #{tpu_custom_call.1} parent=1 // pred_region
      %1130 = dma.done [#allocation5], 256
    $region41: #{tpu_custom_call.1} parent=1 // pred_fallthru
      _
    %1131 = vsyncpa [#allocation4], 1
    %1132 = vsyncpa [#allocation5], 1

</llo_original>
